<compile_context>
chip_gen: v5e
topology: v5e:2x2
jax: 0.10.0
libtpu: 0.0.40
codegen_flags: <defaults>
</compile_context>

<pallas_src>
import functools

import jax
import jax.numpy as jnp
from jax import lax
from jax.experimental import pallas as pl
from jax.experimental.pallas import tpu as pltpu

NEG_SLOPE = 0.01   # nn.LeakyReLU default negative_slope
EPS = 1e-12        # F.normalize default eps


def _convblock_kernel(x_ref, w_ref, g_ref, o_ref, col_ref, *, H, W, dblk, cout):
    # x_ref   : (D+2, H+2, W+2, Cin_pad)     bf16 whole padded volume for batch n
    # w_ref   : (27*Cin_pad, Cout_pad)       bf16 folded conv weights (tap-major K)
    # g_ref   : (1, Cout_pad)                f32  RMSNorm gamma (zero-padded)
    # o_ref   : (dblk*H*W, Cout_pad)         bf16 fused conv+norm+act output block
    # col_ref : (dblk*H*W, 27*Cin_pad)       bf16 in-VMEM im2col scratch
    cin_p = x_ref.shape[-1]
    d0 = pl.program_id(1) * dblk            # first output depth plane of this block

    # Load the dblk+2 padded depth planes needed for this depth block once.
    planes = [x_ref[d0 + t] for t in range(dblk + 2)]   # each (H+2, W+2, Cin_pad)

    # Build the in-VMEM im2col: row = output voxel, K = 27 taps x Cin_pad.
    for dd in range(dblk):
        r0 = dd * H * W
        for kd in range(3):
            p = planes[dd + kd]
            for kh in range(3):
                for kw in range(3):
                    t = (kd * 3 + kh) * 3 + kw
                    col_ref[r0:r0 + H * W, t * cin_p:(t + 1) * cin_p] = (
                        p[kh:kh + H, kw:kw + W, :].reshape(H * W, cin_p))

    # Single MXU matmul: (dblk*H*W, 27*Cin_pad) x (27*Cin_pad, Cout_pad), f32 acc.
    acc = jnp.dot(col_ref[...], w_ref[...], preferred_element_type=jnp.float32)

    # RMSNorm over channels (F.normalize(x, dim=C) * sqrt(C) * gamma).
    # Padded Cout columns of the weights & gamma are exactly zero, so summing
    # over Cout_pad equals summing over the real Cout.
    ss = jnp.sum(acc * acc, axis=-1, keepdims=True)
    inv = lax.rsqrt(jnp.maximum(ss, EPS * EPS))          # EUP rsqrt (free slot)
    y = acc * (inv * (float(cout) ** 0.5)) * g_ref[...]
    # LeakyReLU
    o_ref[...] = jnp.where(y >= 0, y, NEG_SLOPE * y).astype(o_ref.dtype)


def _pick_dblk(N, D, min_blocks=4):
    # Largest divisor of D that still leaves >= min_blocks grid steps so both
    # v7x TensorCores get work under megacore sharding; fall back to 1.
    for dblk in range(D, 0, -1):
        if D % dblk == 0 and N * (D // dblk) >= min_blocks:
            return dblk
    return 1


def conv_block(x_ncdhw, weight_oidhw, gamma):
    """ConvBlock forward.  x: (N,Cin,D,H,W), weight: (Cout,Cin,3,3,3), gamma: (Cout,)."""
    N, Cin, D, H, W = x_ncdhw.shape
    Cout = weight_oidhw.shape[0]

    cin_p = ((Cin + 7) // 8) * 8            # pad the K side of the matmul
    cout_p = ((Cout + 127) // 128) * 128    # lane-dense output stores / full MXU cols
    dblk = _pick_dblk(N, D)
    M = dblk * H * W

    # ---- wrapper glue (plain JAX): one padded NDHWC copy + folded weights ----
    x = jnp.transpose(x_ncdhw, (0, 2, 3, 4, 1))                              # NDHWC
    xp = jnp.pad(x, ((0, 0), (1, 1), (1, 1), (1, 1), (0, cin_p - Cin)))       # zero pad=1
    xp = xp.astype(jnp.bfloat16)

    w = jnp.transpose(weight_oidhw, (2, 3, 4, 1, 0))                          # (kd,kh,kw,Cin,Cout)
    w = jnp.pad(w, ((0, 0), (0, 0), (0, 0), (0, cin_p - Cin), (0, cout_p - Cout)))
    w = w.reshape(27 * cin_p, cout_p).astype(jnp.bfloat16)                    # K = 27*Cin_pad

    g = jnp.pad(gamma.astype(jnp.float32), (0, cout_p - Cout)).reshape(1, cout_p)

    kernel = functools.partial(_convblock_kernel, H=H, W=W, dblk=dblk, cout=Cout)

    out = pl.pallas_call(
        kernel,
        out_shape=jax.ShapeDtypeStruct((N, D * H * W, cout_p), jnp.bfloat16),
        grid_spec=pltpu.PrefetchScalarGridSpec(
            num_scalar_prefetch=0,
            grid=(N, D // dblk),
            in_specs=[
                # Whole padded depth volume for batch n; block index is constant
                # along the inner depth-block axis -> DMA'd once per n.
                pl.BlockSpec((None, D + 2, H + 2, W + 2, cin_p),
                             lambda n, j: (n, 0, 0, 0, 0)),
                # Folded weights / gamma: constant block index (fetched once).
                # (Could be single-buffered via pipeline_mode=pl.Buffered(1);
                #  at ~55 KB the duplicate buffer is irrelevant here.)
                pl.BlockSpec((27 * cin_p, cout_p), lambda n, j: (0, 0)),
                pl.BlockSpec((1, cout_p), lambda n, j: (0, 0)),
            ],
            out_specs=pl.BlockSpec((None, M, cout_p), lambda n, j: (n, j, 0)),
            scratch_shapes=[pltpu.VMEM((M, 27 * cin_p), jnp.bfloat16)],
        ),
        compiler_params=pltpu.CompilerParams(
            dimension_semantics=("parallel", "parallel"),
        ),
    )(xp, w, g)

    # Slice off padded channels first (tiny), then restore NCDHW for module parity.
    # TODO(synk): if the consumer accepts channels-last (NDHWC), return
    # out[:, :, :Cout].reshape(N, D, H, W, Cout) directly and skip this transpose.
    out = out[:, :, :Cout].astype(jnp.float32).reshape(N, D, H, W, Cout)
    return jnp.transpose(out, (0, 4, 1, 2, 3))                                # NCDHW


if __name__ == "__main__":
    # Small shapes consistent with the module: batch=2, ch_in=4, ch_out=8,
    # spatial (D,H,W)=(4,8,8).
    N, Cin, Cout, D, H, W = 2, 4, 8, 4, 8, 8

    key = jax.random.PRNGKey(0)
    kx, kw = jax.random.split(key)
    x = jax.random.normal(kx, (N, Cin, D, H, W), dtype=jnp.float32)
    weight = jax.random.normal(kw, (Cout, Cin, 3, 3, 3), dtype=jnp.float32) * (1.0 / (27 * Cin)) ** 0.5
    gamma = jnp.ones((Cout,), dtype=jnp.float32)   # RMSNorm3d gamma init (ones)

    y = jax.block_until_ready(conv_block(x, weight, gamma))
    assert y.shape == (N, Cout, D, H, W)

    # plain-JAX reference using the same bf16 operand quantization as the kernel
    xb = x.astype(jnp.bfloat16)
    wb = weight.astype(jnp.bfloat16)
    conv = lax.conv_general_dilated(
        xb, wb, window_strides=(1, 1, 1),
        padding=((1, 1), (1, 1), (1, 1)),
        dimension_numbers=("NCDHW", "OIDHW", "NCDHW"),
        preferred_element_type=jnp.float32)
    ss = jnp.sum(conv * conv, axis=1, keepdims=True)
    ref = conv * lax.rsqrt(jnp.maximum(ss, EPS * EPS)) * jnp.sqrt(jnp.float32(Cout)) \
          * gamma.reshape(1, Cout, 1, 1, 1)
    ref = jnp.where(ref >= 0, ref, NEG_SLOPE * ref)

    err = float(jnp.max(jnp.abs(y - ref)))
    assert jnp.allclose(y, ref, atol=2e-2, rtol=2e-2), err
    print("KERNEL_OK")
</pallas_src>

<mosaic_0001>
module attributes {stable_mosaic.version = 11 : i64} {
  func.func @_convblock_kernel(%arg0: i32, %arg1: i32, %arg2: memref<1x6x10x10x8xbf16, #tpu.memory_space<vmem>>, %arg3: memref<216x128xbf16, #tpu.memory_space<vmem>>, %arg4: memref<1x128xf32, #tpu.memory_space<vmem>>, %arg5: memref<1x128x128xbf16, #tpu.memory_space<vmem>>, %arg6: memref<128x216xbf16, #tpu.memory_space<vmem>>) attributes {dimension_semantics = [#tpu.dimension_semantics<parallel>, #tpu.dimension_semantics<parallel>], iteration_bounds = array<i64: 2, 2>, scalar_prefetch = 0 : i64, scratch_operands = 1 : i64, tpu.core_type = #tpu.core_type<tc>, window_params = [{transform_indices = @transform_0, window_bounds = array<i64: 1, 6, 10, 10, 8>}, {pipeline_mode = #tpu.pipeline_mode<synchronous>, transform_indices = @transform_1, window_bounds = array<i64: 216, 128>}, {pipeline_mode = #tpu.pipeline_mode<synchronous>, transform_indices = @transform_2, window_bounds = array<i64: 1, 128>}, {transform_indices = @transform_3, window_bounds = array<i64: 1, 128, 128>}]} {
    %c2_i32 = arith.constant 2 : i32
    %0 = arith.muli %arg1, %c2_i32 : i32
    %c0_i32 = arith.constant 0 : i32
    %1 = arith.addi %0, %c0_i32 : i32
    %c0 = arith.constant 0 : index
    %2 = arith.index_cast %1 : i32 to index
    %c0_0 = arith.constant 0 : index
    %c0_1 = arith.constant 0 : index
    %c0_2 = arith.constant 0 : index
    %3 = vector.load %arg2[%c0, %2, %c0_0, %c0_1, %c0_2] : memref<1x6x10x10x8xbf16, #tpu.memory_space<vmem>>, vector<1x1x10x10x8xbf16>
    %4 = vector.shape_cast %3 : vector<1x1x10x10x8xbf16> to vector<10x10x8xbf16>
    %c1_i32 = arith.constant 1 : i32
    %5 = arith.addi %0, %c1_i32 : i32
    %c0_3 = arith.constant 0 : index
    %6 = arith.index_cast %5 : i32 to index
    %c0_4 = arith.constant 0 : index
    %c0_5 = arith.constant 0 : index
    %c0_6 = arith.constant 0 : index
    %7 = vector.load %arg2[%c0_3, %6, %c0_4, %c0_5, %c0_6] : memref<1x6x10x10x8xbf16, #tpu.memory_space<vmem>>, vector<1x1x10x10x8xbf16>
    %8 = vector.shape_cast %7 : vector<1x1x10x10x8xbf16> to vector<10x10x8xbf16>
    %c2_i32_7 = arith.constant 2 : i32
    %9 = arith.addi %0, %c2_i32_7 : i32
    %c0_8 = arith.constant 0 : index
    %10 = arith.index_cast %9 : i32 to index
    %c0_9 = arith.constant 0 : index
    %c0_10 = arith.constant 0 : index
    %c0_11 = arith.constant 0 : index
    %11 = vector.load %arg2[%c0_8, %10, %c0_9, %c0_10, %c0_11] : memref<1x6x10x10x8xbf16, #tpu.memory_space<vmem>>, vector<1x1x10x10x8xbf16>
    %12 = vector.shape_cast %11 : vector<1x1x10x10x8xbf16> to vector<10x10x8xbf16>
    %c3_i32 = arith.constant 3 : i32
    %13 = arith.addi %0, %c3_i32 : i32
    %c0_12 = arith.constant 0 : index
    %14 = arith.index_cast %13 : i32 to index
    %c0_13 = arith.constant 0 : index
    %c0_14 = arith.constant 0 : index
    %c0_15 = arith.constant 0 : index
    %15 = vector.load %arg2[%c0_12, %14, %c0_13, %c0_14, %c0_15] : memref<1x6x10x10x8xbf16, #tpu.memory_space<vmem>>, vector<1x1x10x10x8xbf16>
    %16 = vector.shape_cast %15 : vector<1x1x10x10x8xbf16> to vector<10x10x8xbf16>
    %17 = vector.extract_strided_slice %4 {offsets = [0, 0, 0], sizes = [8, 8, 8], strides = [1, 1, 1]} : vector<10x10x8xbf16> to vector<8x8x8xbf16>
    %18 = vector.shape_cast %17 : vector<8x8x8xbf16> to vector<64x8xbf16>
    %c0_16 = arith.constant 0 : index
    %c0_17 = arith.constant 0 : index
    %19 = vector.load %arg6[%c0_16, %c0_17] : memref<128x216xbf16, #tpu.memory_space<vmem>>, vector<64x8xbf16>
    tpu.vector_store %arg6[%c0_16, %c0_17], %18 {strides = array<i32>} : memref<128x216xbf16, #tpu.memory_space<vmem>>, vector<64x8xbf16>,
    %20 = vector.extract_strided_slice %4 {offsets = [0, 1, 0], sizes = [8, 8, 8], strides = [1, 1, 1]} : vector<10x10x8xbf16> to vector<8x8x8xbf16>
    %21 = vector.shape_cast %20 : vector<8x8x8xbf16> to vector<64x8xbf16>
    %c0_18 = arith.constant 0 : index
    %c8 = arith.constant 8 : index
    %22 = vector.load %arg6[%c0_18, %c8] : memref<128x216xbf16, #tpu.memory_space<vmem>>, vector<64x8xbf16>
    tpu.vector_store %arg6[%c0_18, %c8], %21 {strides = array<i32>} : memref<128x216xbf16, #tpu.memory_space<vmem>>, vector<64x8xbf16>,
    %23 = vector.extract_strided_slice %4 {offsets = [0, 2, 0], sizes = [8, 8, 8], strides = [1, 1, 1]} : vector<10x10x8xbf16> to vector<8x8x8xbf16>
    %24 = vector.shape_cast %23 : vector<8x8x8xbf16> to vector<64x8xbf16>
    %c0_19 = arith.constant 0 : index
    %c16 = arith.constant 16 : index
    %25 = vector.load %arg6[%c0_19, %c16] : memref<128x216xbf16, #tpu.memory_space<vmem>>, vector<64x8xbf16>
    tpu.vector_store %arg6[%c0_19, %c16], %24 {strides = array<i32>} : memref<128x216xbf16, #tpu.memory_space<vmem>>, vector<64x8xbf16>,
    %26 = vector.extract_strided_slice %4 {offsets = [1, 0, 0], sizes = [8, 8, 8], strides = [1, 1, 1]} : vector<10x10x8xbf16> to vector<8x8x8xbf16>
    %27 = vector.shape_cast %26 : vector<8x8x8xbf16> to vector<64x8xbf16>
    %c0_20 = arith.constant 0 : index
    %c24 = arith.constant 24 : index
    %28 = vector.load %arg6[%c0_20, %c24] : memref<128x216xbf16, #tpu.memory_space<vmem>>, vector<64x8xbf16>
    tpu.vector_store %arg6[%c0_20, %c24], %27 {strides = array<i32>} : memref<128x216xbf16, #tpu.memory_space<vmem>>, vector<64x8xbf16>,
    %29 = vector.extract_strided_slice %4 {offsets = [1, 1, 0], sizes = [8, 8, 8], strides = [1, 1, 1]} : vector<10x10x8xbf16> to vector<8x8x8xbf16>
    %30 = vector.shape_cast %29 : vector<8x8x8xbf16> to vector<64x8xbf16>
    %c0_21 = arith.constant 0 : index
    %c32 = arith.constant 32 : index
    %31 = vector.load %arg6[%c0_21, %c32] : memref<128x216xbf16, #tpu.memory_space<vmem>>, vector<64x8xbf16>
    tpu.vector_store %arg6[%c0_21, %c32], %30 {strides = array<i32>} : memref<128x216xbf16, #tpu.memory_space<vmem>>, vector<64x8xbf16>,
    %32 = vector.extract_strided_slice %4 {offsets = [1, 2, 0], sizes = [8, 8, 8], strides = [1, 1, 1]} : vector<10x10x8xbf16> to vector<8x8x8xbf16>
    %33 = vector.shape_cast %32 : vector<8x8x8xbf16> to vector<64x8xbf16>
    %c0_22 = arith.constant 0 : index
    %c40 = arith.constant 40 : index
    %34 = vector.load %arg6[%c0_22, %c40] : memref<128x216xbf16, #tpu.memory_space<vmem>>, vector<64x8xbf16>
    tpu.vector_store %arg6[%c0_22, %c40], %33 {strides = array<i32>} : memref<128x216xbf16, #tpu.memory_space<vmem>>, vector<64x8xbf16>,
    %35 = vector.extract_strided_slice %4 {offsets = [2, 0, 0], sizes = [8, 8, 8], strides = [1, 1, 1]} : vector<10x10x8xbf16> to vector<8x8x8xbf16>
    %36 = vector.shape_cast %35 : vector<8x8x8xbf16> to vector<64x8xbf16>
    %c0_23 = arith.constant 0 : index
    %c48 = arith.constant 48 : index
    %37 = vector.load %arg6[%c0_23, %c48] : memref<128x216xbf16, #tpu.memory_space<vmem>>, vector<64x8xbf16>
    tpu.vector_store %arg6[%c0_23, %c48], %36 {strides = array<i32>} : memref<128x216xbf16, #tpu.memory_space<vmem>>, vector<64x8xbf16>,
    %38 = vector.extract_strided_slice %4 {offsets = [2, 1, 0], sizes = [8, 8, 8], strides = [1, 1, 1]} : vector<10x10x8xbf16> to vector<8x8x8xbf16>
    %39 = vector.shape_cast %38 : vector<8x8x8xbf16> to vector<64x8xbf16>
    %c0_24 = arith.constant 0 : index
    %c56 = arith.constant 56 : index
    %40 = vector.load %arg6[%c0_24, %c56] : memref<128x216xbf16, #tpu.memory_space<vmem>>, vector<64x8xbf16>
    tpu.vector_store %arg6[%c0_24, %c56], %39 {strides = array<i32>} : memref<128x216xbf16, #tpu.memory_space<vmem>>, vector<64x8xbf16>,
    %41 = vector.extract_strided_slice %4 {offsets = [2, 2, 0], sizes = [8, 8, 8], strides = [1, 1, 1]} : vector<10x10x8xbf16> to vector<8x8x8xbf16>
    %42 = vector.shape_cast %41 : vector<8x8x8xbf16> to vector<64x8xbf16>
    %c0_25 = arith.constant 0 : index
    %c64 = arith.constant 64 : index
    %43 = vector.load %arg6[%c0_25, %c64] : memref<128x216xbf16, #tpu.memory_space<vmem>>, vector<64x8xbf16>
    tpu.vector_store %arg6[%c0_25, %c64], %42 {strides = array<i32>} : memref<128x216xbf16, #tpu.memory_space<vmem>>, vector<64x8xbf16>,
    %44 = vector.extract_strided_slice %8 {offsets = [0, 0, 0], sizes = [8, 8, 8], strides = [1, 1, 1]} : vector<10x10x8xbf16> to vector<8x8x8xbf16>
    %45 = vector.shape_cast %44 : vector<8x8x8xbf16> to vector<64x8xbf16>
    %c0_26 = arith.constant 0 : index
    %c72 = arith.constant 72 : index
    %46 = vector.load %arg6[%c0_26, %c72] : memref<128x216xbf16, #tpu.memory_space<vmem>>, vector<64x8xbf16>
    tpu.vector_store %arg6[%c0_26, %c72], %45 {strides = array<i32>} : memref<128x216xbf16, #tpu.memory_space<vmem>>, vector<64x8xbf16>,
    %47 = vector.extract_strided_slice %8 {offsets = [0, 1, 0], sizes = [8, 8, 8], strides = [1, 1, 1]} : vector<10x10x8xbf16> to vector<8x8x8xbf16>
    %48 = vector.shape_cast %47 : vector<8x8x8xbf16> to vector<64x8xbf16>
    %c0_27 = arith.constant 0 : index
    %c80 = arith.constant 80 : index
    %49 = vector.load %arg6[%c0_27, %c80] : memref<128x216xbf16, #tpu.memory_space<vmem>>, vector<64x8xbf16>
    tpu.vector_store %arg6[%c0_27, %c80], %48 {strides = array<i32>} : memref<128x216xbf16, #tpu.memory_space<vmem>>, vector<64x8xbf16>,
    %50 = vector.extract_strided_slice %8 {offsets = [0, 2, 0], sizes = [8, 8, 8], strides = [1, 1, 1]} : vector<10x10x8xbf16> to vector<8x8x8xbf16>
    %51 = vector.shape_cast %50 : vector<8x8x8xbf16> to vector<64x8xbf16>
    %c0_28 = arith.constant 0 : index
    %c88 = arith.constant 88 : index
    %52 = vector.load %arg6[%c0_28, %c88] : memref<128x216xbf16, #tpu.memory_space<vmem>>, vector<64x8xbf16>
    tpu.vector_store %arg6[%c0_28, %c88], %51 {strides = array<i32>} : memref<128x216xbf16, #tpu.memory_space<vmem>>, vector<64x8xbf16>,
    %53 = vector.extract_strided_slice %8 {offsets = [1, 0, 0], sizes = [8, 8, 8], strides = [1, 1, 1]} : vector<10x10x8xbf16> to vector<8x8x8xbf16>
    %54 = vector.shape_cast %53 : vector<8x8x8xbf16> to vector<64x8xbf16>
    %c0_29 = arith.constant 0 : index
    %c96 = arith.constant 96 : index
    %55 = vector.load %arg6[%c0_29, %c96] : memref<128x216xbf16, #tpu.memory_space<vmem>>, vector<64x8xbf16>
    tpu.vector_store %arg6[%c0_29, %c96], %54 {strides = array<i32>} : memref<128x216xbf16, #tpu.memory_space<vmem>>, vector<64x8xbf16>,
    %56 = vector.extract_strided_slice %8 {offsets = [1, 1, 0], sizes = [8, 8, 8], strides = [1, 1, 1]} : vector<10x10x8xbf16> to vector<8x8x8xbf16>
    %57 = vector.shape_cast %56 : vector<8x8x8xbf16> to vector<64x8xbf16>
    %c0_30 = arith.constant 0 : index
    %c104 = arith.constant 104 : index
    %58 = vector.load %arg6[%c0_30, %c104] : memref<128x216xbf16, #tpu.memory_space<vmem>>, vector<64x8xbf16>
    tpu.vector_store %arg6[%c0_30, %c104], %57 {strides = array<i32>} : memref<128x216xbf16, #tpu.memory_space<vmem>>, vector<64x8xbf16>,
    %59 = vector.extract_strided_slice %8 {offsets = [1, 2, 0], sizes = [8, 8, 8], strides = [1, 1, 1]} : vector<10x10x8xbf16> to vector<8x8x8xbf16>
    %60 = vector.shape_cast %59 : vector<8x8x8xbf16> to vector<64x8xbf16>
    %c0_31 = arith.constant 0 : index
    %c112 = arith.constant 112 : index
    %61 = vector.load %arg6[%c0_31, %c112] : memref<128x216xbf16, #tpu.memory_space<vmem>>, vector<64x8xbf16>
    tpu.vector_store %arg6[%c0_31, %c112], %60 {strides = array<i32>} : memref<128x216xbf16, #tpu.memory_space<vmem>>, vector<64x8xbf16>,
    %62 = vector.extract_strided_slice %8 {offsets = [2, 0, 0], sizes = [8, 8, 8], strides = [1, 1, 1]} : vector<10x10x8xbf16> to vector<8x8x8xbf16>
    %63 = vector.shape_cast %62 : vector<8x8x8xbf16> to vector<64x8xbf16>
    %c0_32 = arith.constant 0 : index
    %c120 = arith.constant 120 : index
    %64 = vector.load %arg6[%c0_32, %c120] : memref<128x216xbf16, #tpu.memory_space<vmem>>, vector<64x8xbf16>
    tpu.vector_store %arg6[%c0_32, %c120], %63 {strides = array<i32>} : memref<128x216xbf16, #tpu.memory_space<vmem>>, vector<64x8xbf16>,
    %65 = vector.extract_strided_slice %8 {offsets = [2, 1, 0], sizes = [8, 8, 8], strides = [1, 1, 1]} : vector<10x10x8xbf16> to vector<8x8x8xbf16>
    %66 = vector.shape_cast %65 : vector<8x8x8xbf16> to vector<64x8xbf16>
    %c0_33 = arith.constant 0 : index
    %c128 = arith.constant 128 : index
    %67 = vector.load %arg6[%c0_33, %c128] : memref<128x216xbf16, #tpu.memory_space<vmem>>, vector<64x8xbf16>
    tpu.vector_store %arg6[%c0_33, %c128], %66 {strides = array<i32>} : memref<128x216xbf16, #tpu.memory_space<vmem>>, vector<64x8xbf16>,
    %68 = vector.extract_strided_slice %8 {offsets = [2, 2, 0], sizes = [8, 8, 8], strides = [1, 1, 1]} : vector<10x10x8xbf16> to vector<8x8x8xbf16>
    %69 = vector.shape_cast %68 : vector<8x8x8xbf16> to vector<64x8xbf16>
    %c0_34 = arith.constant 0 : index
    %c136 = arith.constant 136 : index
    %70 = vector.load %arg6[%c0_34, %c136] : memref<128x216xbf16, #tpu.memory_space<vmem>>, vector<64x8xbf16>
    tpu.vector_store %arg6[%c0_34, %c136], %69 {strides = array<i32>} : memref<128x216xbf16, #tpu.memory_space<vmem>>, vector<64x8xbf16>,
    %71 = vector.extract_strided_slice %12 {offsets = [0, 0, 0], sizes = [8, 8, 8], strides = [1, 1, 1]} : vector<10x10x8xbf16> to vector<8x8x8xbf16>
    %72 = vector.shape_cast %71 : vector<8x8x8xbf16> to vector<64x8xbf16>
    %c0_35 = arith.constant 0 : index
    %c144 = arith.constant 144 : index
    %73 = vector.load %arg6[%c0_35, %c144] : memref<128x216xbf16, #tpu.memory_space<vmem>>, vector<64x8xbf16>
    tpu.vector_store %arg6[%c0_35, %c144], %72 {strides = array<i32>} : memref<128x216xbf16, #tpu.memory_space<vmem>>, vector<64x8xbf16>,
    %74 = vector.extract_strided_slice %12 {offsets = [0, 1, 0], sizes = [8, 8, 8], strides = [1, 1, 1]} : vector<10x10x8xbf16> to vector<8x8x8xbf16>
    %75 = vector.shape_cast %74 : vector<8x8x8xbf16> to vector<64x8xbf16>
    %c0_36 = arith.constant 0 : index
    %c152 = arith.constant 152 : index
    %76 = vector.load %arg6[%c0_36, %c152] : memref<128x216xbf16, #tpu.memory_space<vmem>>, vector<64x8xbf16>
    tpu.vector_store %arg6[%c0_36, %c152], %75 {strides = array<i32>} : memref<128x216xbf16, #tpu.memory_space<vmem>>, vector<64x8xbf16>,
    %77 = vector.extract_strided_slice %12 {offsets = [0, 2, 0], sizes = [8, 8, 8], strides = [1, 1, 1]} : vector<10x10x8xbf16> to vector<8x8x8xbf16>
    %78 = vector.shape_cast %77 : vector<8x8x8xbf16> to vector<64x8xbf16>
    %c0_37 = arith.constant 0 : index
    %c160 = arith.constant 160 : index
    %79 = vector.load %arg6[%c0_37, %c160] : memref<128x216xbf16, #tpu.memory_space<vmem>>, vector<64x8xbf16>
    tpu.vector_store %arg6[%c0_37, %c160], %78 {strides = array<i32>} : memref<128x216xbf16, #tpu.memory_space<vmem>>, vector<64x8xbf16>,
    %80 = vector.extract_strided_slice %12 {offsets = [1, 0, 0], sizes = [8, 8, 8], strides = [1, 1, 1]} : vector<10x10x8xbf16> to vector<8x8x8xbf16>
    %81 = vector.shape_cast %80 : vector<8x8x8xbf16> to vector<64x8xbf16>
    %c0_38 = arith.constant 0 : index
    %c168 = arith.constant 168 : index
    %82 = vector.load %arg6[%c0_38, %c168] : memref<128x216xbf16, #tpu.memory_space<vmem>>, vector<64x8xbf16>
    tpu.vector_store %arg6[%c0_38, %c168], %81 {strides = array<i32>} : memref<128x216xbf16, #tpu.memory_space<vmem>>, vector<64x8xbf16>,
    %83 = vector.extract_strided_slice %12 {offsets = [1, 1, 0], sizes = [8, 8, 8], strides = [1, 1, 1]} : vector<10x10x8xbf16> to vector<8x8x8xbf16>
    %84 = vector.shape_cast %83 : vector<8x8x8xbf16> to vector<64x8xbf16>
    %c0_39 = arith.constant 0 : index
    %c176 = arith.constant 176 : index
    %85 = vector.load %arg6[%c0_39, %c176] : memref<128x216xbf16, #tpu.memory_space<vmem>>, vector<64x8xbf16>
    tpu.vector_store %arg6[%c0_39, %c176], %84 {strides = array<i32>} : memref<128x216xbf16, #tpu.memory_space<vmem>>, vector<64x8xbf16>,
    %86 = vector.extract_strided_slice %12 {offsets = [1, 2, 0], sizes = [8, 8, 8], strides = [1, 1, 1]} : vector<10x10x8xbf16> to vector<8x8x8xbf16>
    %87 = vector.shape_cast %86 : vector<8x8x8xbf16> to vector<64x8xbf16>
    %c0_40 = arith.constant 0 : index
    %c184 = arith.constant 184 : index
    %88 = vector.load %arg6[%c0_40, %c184] : memref<128x216xbf16, #tpu.memory_space<vmem>>, vector<64x8xbf16>
    tpu.vector_store %arg6[%c0_40, %c184], %87 {strides = array<i32>} : memref<128x216xbf16, #tpu.memory_space<vmem>>, vector<64x8xbf16>,
    %89 = vector.extract_strided_slice %12 {offsets = [2, 0, 0], sizes = [8, 8, 8], strides = [1, 1, 1]} : vector<10x10x8xbf16> to vector<8x8x8xbf16>
    %90 = vector.shape_cast %89 : vector<8x8x8xbf16> to vector<64x8xbf16>
    %c0_41 = arith.constant 0 : index
    %c192 = arith.constant 192 : index
    %91 = vector.load %arg6[%c0_41, %c192] : memref<128x216xbf16, #tpu.memory_space<vmem>>, vector<64x8xbf16>
    tpu.vector_store %arg6[%c0_41, %c192], %90 {strides = array<i32>} : memref<128x216xbf16, #tpu.memory_space<vmem>>, vector<64x8xbf16>,
    %92 = vector.extract_strided_slice %12 {offsets = [2, 1, 0], sizes = [8, 8, 8], strides = [1, 1, 1]} : vector<10x10x8xbf16> to vector<8x8x8xbf16>
    %93 = vector.shape_cast %92 : vector<8x8x8xbf16> to vector<64x8xbf16>
    %c0_42 = arith.constant 0 : index
    %c200 = arith.constant 200 : index
    %94 = vector.load %arg6[%c0_42, %c200] : memref<128x216xbf16, #tpu.memory_space<vmem>>, vector<64x8xbf16>
    tpu.vector_store %arg6[%c0_42, %c200], %93 {strides = array<i32>} : memref<128x216xbf16, #tpu.memory_space<vmem>>, vector<64x8xbf16>,
    %95 = vector.extract_strided_slice %12 {offsets = [2, 2, 0], sizes = [8, 8, 8], strides = [1, 1, 1]} : vector<10x10x8xbf16> to vector<8x8x8xbf16>
    %96 = vector.shape_cast %95 : vector<8x8x8xbf16> to vector<64x8xbf16>
    %c0_43 = arith.constant 0 : index
    %c208 = arith.constant 208 : index
    %97 = vector.load %arg6[%c0_43, %c208] : memref<128x216xbf16, #tpu.memory_space<vmem>>, vector<64x8xbf16>
    tpu.vector_store %arg6[%c0_43, %c208], %96 {strides = array<i32>} : memref<128x216xbf16, #tpu.memory_space<vmem>>, vector<64x8xbf16>,
    %98 = vector.extract_strided_slice %8 {offsets = [0, 0, 0], sizes = [8, 8, 8], strides = [1, 1, 1]} : vector<10x10x8xbf16> to vector<8x8x8xbf16>
    %99 = vector.shape_cast %98 : vector<8x8x8xbf16> to vector<64x8xbf16>
    %c64_44 = arith.constant 64 : index
    %c0_45 = arith.constant 0 : index
    %100 = vector.load %arg6[%c64_44, %c0_45] : memref<128x216xbf16, #tpu.memory_space<vmem>>, vector<64x8xbf16>
    tpu.vector_store %arg6[%c64_44, %c0_45], %99 {strides = array<i32>} : memref<128x216xbf16, #tpu.memory_space<vmem>>, vector<64x8xbf16>,
    %101 = vector.extract_strided_slice %8 {offsets = [0, 1, 0], sizes = [8, 8, 8], strides = [1, 1, 1]} : vector<10x10x8xbf16> to vector<8x8x8xbf16>
    %102 = vector.shape_cast %101 : vector<8x8x8xbf16> to vector<64x8xbf16>
    %c64_46 = arith.constant 64 : index
    %c8_47 = arith.constant 8 : index
    %103 = vector.load %arg6[%c64_46, %c8_47] : memref<128x216xbf16, #tpu.memory_space<vmem>>, vector<64x8xbf16>
    tpu.vector_store %arg6[%c64_46, %c8_47], %102 {strides = array<i32>} : memref<128x216xbf16, #tpu.memory_space<vmem>>, vector<64x8xbf16>,
    %104 = vector.extract_strided_slice %8 {offsets = [0, 2, 0], sizes = [8, 8, 8], strides = [1, 1, 1]} : vector<10x10x8xbf16> to vector<8x8x8xbf16>
    %105 = vector.shape_cast %104 : vector<8x8x8xbf16> to vector<64x8xbf16>
    %c64_48 = arith.constant 64 : index
    %c16_49 = arith.constant 16 : index
    %106 = vector.load %arg6[%c64_48, %c16_49] : memref<128x216xbf16, #tpu.memory_space<vmem>>, vector<64x8xbf16>
    tpu.vector_store %arg6[%c64_48, %c16_49], %105 {strides = array<i32>} : memref<128x216xbf16, #tpu.memory_space<vmem>>, vector<64x8xbf16>,
    %107 = vector.extract_strided_slice %8 {offsets = [1, 0, 0], sizes = [8, 8, 8], strides = [1, 1, 1]} : vector<10x10x8xbf16> to vector<8x8x8xbf16>
    %108 = vector.shape_cast %107 : vector<8x8x8xbf16> to vector<64x8xbf16>
    %c64_50 = arith.constant 64 : index
    %c24_51 = arith.constant 24 : index
    %109 = vector.load %arg6[%c64_50, %c24_51] : memref<128x216xbf16, #tpu.memory_space<vmem>>, vector<64x8xbf16>
    tpu.vector_store %arg6[%c64_50, %c24_51], %108 {strides = array<i32>} : memref<128x216xbf16, #tpu.memory_space<vmem>>, vector<64x8xbf16>,
    %110 = vector.extract_strided_slice %8 {offsets = [1, 1, 0], sizes = [8, 8, 8], strides = [1, 1, 1]} : vector<10x10x8xbf16> to vector<8x8x8xbf16>
    %111 = vector.shape_cast %110 : vector<8x8x8xbf16> to vector<64x8xbf16>
    %c64_52 = arith.constant 64 : index
    %c32_53 = arith.constant 32 : index
    %112 = vector.load %arg6[%c64_52, %c32_53] : memref<128x216xbf16, #tpu.memory_space<vmem>>, vector<64x8xbf16>
    tpu.vector_store %arg6[%c64_52, %c32_53], %111 {strides = array<i32>} : memref<128x216xbf16, #tpu.memory_space<vmem>>, vector<64x8xbf16>,
    %113 = vector.extract_strided_slice %8 {offsets = [1, 2, 0], sizes = [8, 8, 8], strides = [1, 1, 1]} : vector<10x10x8xbf16> to vector<8x8x8xbf16>
    %114 = vector.shape_cast %113 : vector<8x8x8xbf16> to vector<64x8xbf16>
    %c64_54 = arith.constant 64 : index
    %c40_55 = arith.constant 40 : index
    %115 = vector.load %arg6[%c64_54, %c40_55] : memref<128x216xbf16, #tpu.memory_space<vmem>>, vector<64x8xbf16>
    tpu.vector_store %arg6[%c64_54, %c40_55], %114 {strides = array<i32>} : memref<128x216xbf16, #tpu.memory_space<vmem>>, vector<64x8xbf16>,
    %116 = vector.extract_strided_slice %8 {offsets = [2, 0, 0], sizes = [8, 8, 8], strides = [1, 1, 1]} : vector<10x10x8xbf16> to vector<8x8x8xbf16>
    %117 = vector.shape_cast %116 : vector<8x8x8xbf16> to vector<64x8xbf16>
    %c64_56 = arith.constant 64 : index
    %c48_57 = arith.constant 48 : index
    %118 = vector.load %arg6[%c64_56, %c48_57] : memref<128x216xbf16, #tpu.memory_space<vmem>>, vector<64x8xbf16>
    tpu.vector_store %arg6[%c64_56, %c48_57], %117 {strides = array<i32>} : memref<128x216xbf16, #tpu.memory_space<vmem>>, vector<64x8xbf16>,
    %119 = vector.extract_strided_slice %8 {offsets = [2, 1, 0], sizes = [8, 8, 8], strides = [1, 1, 1]} : vector<10x10x8xbf16> to vector<8x8x8xbf16>
    %120 = vector.shape_cast %119 : vector<8x8x8xbf16> to vector<64x8xbf16>
    %c64_58 = arith.constant 64 : index
    %c56_59 = arith.constant 56 : index
    %121 = vector.load %arg6[%c64_58, %c56_59] : memref<128x216xbf16, #tpu.memory_space<vmem>>, vector<64x8xbf16>
    tpu.vector_store %arg6[%c64_58, %c56_59], %120 {strides = array<i32>} : memref<128x216xbf16, #tpu.memory_space<vmem>>, vector<64x8xbf16>,
    %122 = vector.extract_strided_slice %8 {offsets = [2, 2, 0], sizes = [8, 8, 8], strides = [1, 1, 1]} : vector<10x10x8xbf16> to vector<8x8x8xbf16>
    %123 = vector.shape_cast %122 : vector<8x8x8xbf16> to vector<64x8xbf16>
    %c64_60 = arith.constant 64 : index
    %c64_61 = arith.constant 64 : index
    %124 = vector.load %arg6[%c64_60, %c64_61] : memref<128x216xbf16, #tpu.memory_space<vmem>>, vector<64x8xbf16>
    tpu.vector_store %arg6[%c64_60, %c64_61], %123 {strides = array<i32>} : memref<128x216xbf16, #tpu.memory_space<vmem>>, vector<64x8xbf16>,
    %125 = vector.extract_strided_slice %12 {offsets = [0, 0, 0], sizes = [8, 8, 8], strides = [1, 1, 1]} : vector<10x10x8xbf16> to vector<8x8x8xbf16>
    %126 = vector.shape_cast %125 : vector<8x8x8xbf16> to vector<64x8xbf16>
    %c64_62 = arith.constant 64 : index
    %c72_63 = arith.constant 72 : index
    %127 = vector.load %arg6[%c64_62, %c72_63] : memref<128x216xbf16, #tpu.memory_space<vmem>>, vector<64x8xbf16>
    tpu.vector_store %arg6[%c64_62, %c72_63], %126 {strides = array<i32>} : memref<128x216xbf16, #tpu.memory_space<vmem>>, vector<64x8xbf16>,
    %128 = vector.extract_strided_slice %12 {offsets = [0, 1, 0], sizes = [8, 8, 8], strides = [1, 1, 1]} : vector<10x10x8xbf16> to vector<8x8x8xbf16>
    %129 = vector.shape_cast %128 : vector<8x8x8xbf16> to vector<64x8xbf16>
    %c64_64 = arith.constant 64 : index
    %c80_65 = arith.constant 80 : index
    %130 = vector.load %arg6[%c64_64, %c80_65] : memref<128x216xbf16, #tpu.memory_space<vmem>>, vector<64x8xbf16>
    tpu.vector_store %arg6[%c64_64, %c80_65], %129 {strides = array<i32>} : memref<128x216xbf16, #tpu.memory_space<vmem>>, vector<64x8xbf16>,
    %131 = vector.extract_strided_slice %12 {offsets = [0, 2, 0], sizes = [8, 8, 8], strides = [1, 1, 1]} : vector<10x10x8xbf16> to vector<8x8x8xbf16>
    %132 = vector.shape_cast %131 : vector<8x8x8xbf16> to vector<64x8xbf16>
    %c64_66 = arith.constant 64 : index
    %c88_67 = arith.constant 88 : index
    %133 = vector.load %arg6[%c64_66, %c88_67] : memref<128x216xbf16, #tpu.memory_space<vmem>>, vector<64x8xbf16>
    tpu.vector_store %arg6[%c64_66, %c88_67], %132 {strides = array<i32>} : memref<128x216xbf16, #tpu.memory_space<vmem>>, vector<64x8xbf16>,
    %134 = vector.extract_strided_slice %12 {offsets = [1, 0, 0], sizes = [8, 8, 8], strides = [1, 1, 1]} : vector<10x10x8xbf16> to vector<8x8x8xbf16>
    %135 = vector.shape_cast %134 : vector<8x8x8xbf16> to vector<64x8xbf16>
    %c64_68 = arith.constant 64 : index
    %c96_69 = arith.constant 96 : index
    %136 = vector.load %arg6[%c64_68, %c96_69] : memref<128x216xbf16, #tpu.memory_space<vmem>>, vector<64x8xbf16>
    tpu.vector_store %arg6[%c64_68, %c96_69], %135 {strides = array<i32>} : memref<128x216xbf16, #tpu.memory_space<vmem>>, vector<64x8xbf16>,
    %137 = vector.extract_strided_slice %12 {offsets = [1, 1, 0], sizes = [8, 8, 8], strides = [1, 1, 1]} : vector<10x10x8xbf16> to vector<8x8x8xbf16>
    %138 = vector.shape_cast %137 : vector<8x8x8xbf16> to vector<64x8xbf16>
    %c64_70 = arith.constant 64 : index
    %c104_71 = arith.constant 104 : index
    %139 = vector.load %arg6[%c64_70, %c104_71] : memref<128x216xbf16, #tpu.memory_space<vmem>>, vector<64x8xbf16>
    tpu.vector_store %arg6[%c64_70, %c104_71], %138 {strides = array<i32>} : memref<128x216xbf16, #tpu.memory_space<vmem>>, vector<64x8xbf16>,
    %140 = vector.extract_strided_slice %12 {offsets = [1, 2, 0], sizes = [8, 8, 8], strides = [1, 1, 1]} : vector<10x10x8xbf16> to vector<8x8x8xbf16>
    %141 = vector.shape_cast %140 : vector<8x8x8xbf16> to vector<64x8xbf16>
    %c64_72 = arith.constant 64 : index
    %c112_73 = arith.constant 112 : index
    %142 = vector.load %arg6[%c64_72, %c112_73] : memref<128x216xbf16, #tpu.memory_space<vmem>>, vector<64x8xbf16>
    tpu.vector_store %arg6[%c64_72, %c112_73], %141 {strides = array<i32>} : memref<128x216xbf16, #tpu.memory_space<vmem>>, vector<64x8xbf16>,
    %143 = vector.extract_strided_slice %12 {offsets = [2, 0, 0], sizes = [8, 8, 8], strides = [1, 1, 1]} : vector<10x10x8xbf16> to vector<8x8x8xbf16>
    %144 = vector.shape_cast %143 : vector<8x8x8xbf16> to vector<64x8xbf16>
    %c64_74 = arith.constant 64 : index
    %c120_75 = arith.constant 120 : index
    %145 = vector.load %arg6[%c64_74, %c120_75] : memref<128x216xbf16, #tpu.memory_space<vmem>>, vector<64x8xbf16>
    tpu.vector_store %arg6[%c64_74, %c120_75], %144 {strides = array<i32>} : memref<128x216xbf16, #tpu.memory_space<vmem>>, vector<64x8xbf16>,
    %146 = vector.extract_strided_slice %12 {offsets = [2, 1, 0], sizes = [8, 8, 8], strides = [1, 1, 1]} : vector<10x10x8xbf16> to vector<8x8x8xbf16>
    %147 = vector.shape_cast %146 : vector<8x8x8xbf16> to vector<64x8xbf16>
    %c64_76 = arith.constant 64 : index
    %c128_77 = arith.constant 128 : index
    %148 = vector.load %arg6[%c64_76, %c128_77] : memref<128x216xbf16, #tpu.memory_space<vmem>>, vector<64x8xbf16>
    tpu.vector_store %arg6[%c64_76, %c128_77], %147 {strides = array<i32>} : memref<128x216xbf16, #tpu.memory_space<vmem>>, vector<64x8xbf16>,
    %149 = vector.extract_strided_slice %12 {offsets = [2, 2, 0], sizes = [8, 8, 8], strides = [1, 1, 1]} : vector<10x10x8xbf16> to vector<8x8x8xbf16>
    %150 = vector.shape_cast %149 : vector<8x8x8xbf16> to vector<64x8xbf16>
    %c64_78 = arith.constant 64 : index
    %c136_79 = arith.constant 136 : index
    %151 = vector.load %arg6[%c64_78, %c136_79] : memref<128x216xbf16, #tpu.memory_space<vmem>>, vector<64x8xbf16>
    tpu.vector_store %arg6[%c64_78, %c136_79], %150 {strides = array<i32>} : memref<128x216xbf16, #tpu.memory_space<vmem>>, vector<64x8xbf16>,
    %152 = vector.extract_strided_slice %16 {offsets = [0, 0, 0], sizes = [8, 8, 8], strides = [1, 1, 1]} : vector<10x10x8xbf16> to vector<8x8x8xbf16>
    %153 = vector.shape_cast %152 : vector<8x8x8xbf16> to vector<64x8xbf16>
    %c64_80 = arith.constant 64 : index
    %c144_81 = arith.constant 144 : index
    %154 = vector.load %arg6[%c64_80, %c144_81] : memref<128x216xbf16, #tpu.memory_space<vmem>>, vector<64x8xbf16>
    tpu.vector_store %arg6[%c64_80, %c144_81], %153 {strides = array<i32>} : memref<128x216xbf16, #tpu.memory_space<vmem>>, vector<64x8xbf16>,
    %155 = vector.extract_strided_slice %16 {offsets = [0, 1, 0], sizes = [8, 8, 8], strides = [1, 1, 1]} : vector<10x10x8xbf16> to vector<8x8x8xbf16>
    %156 = vector.shape_cast %155 : vector<8x8x8xbf16> to vector<64x8xbf16>
    %c64_82 = arith.constant 64 : index
    %c152_83 = arith.constant 152 : index
    %157 = vector.load %arg6[%c64_82, %c152_83] : memref<128x216xbf16, #tpu.memory_space<vmem>>, vector<64x8xbf16>
    tpu.vector_store %arg6[%c64_82, %c152_83], %156 {strides = array<i32>} : memref<128x216xbf16, #tpu.memory_space<vmem>>, vector<64x8xbf16>,
    %158 = vector.extract_strided_slice %16 {offsets = [0, 2, 0], sizes = [8, 8, 8], strides = [1, 1, 1]} : vector<10x10x8xbf16> to vector<8x8x8xbf16>
    %159 = vector.shape_cast %158 : vector<8x8x8xbf16> to vector<64x8xbf16>
    %c64_84 = arith.constant 64 : index
    %c160_85 = arith.constant 160 : index
    %160 = vector.load %arg6[%c64_84, %c160_85] : memref<128x216xbf16, #tpu.memory_space<vmem>>, vector<64x8xbf16>
    tpu.vector_store %arg6[%c64_84, %c160_85], %159 {strides = array<i32>} : memref<128x216xbf16, #tpu.memory_space<vmem>>, vector<64x8xbf16>,
    %161 = vector.extract_strided_slice %16 {offsets = [1, 0, 0], sizes = [8, 8, 8], strides = [1, 1, 1]} : vector<10x10x8xbf16> to vector<8x8x8xbf16>
    %162 = vector.shape_cast %161 : vector<8x8x8xbf16> to vector<64x8xbf16>
    %c64_86 = arith.constant 64 : index
    %c168_87 = arith.constant 168 : index
    %163 = vector.load %arg6[%c64_86, %c168_87] : memref<128x216xbf16, #tpu.memory_space<vmem>>, vector<64x8xbf16>
    tpu.vector_store %arg6[%c64_86, %c168_87], %162 {strides = array<i32>} : memref<128x216xbf16, #tpu.memory_space<vmem>>, vector<64x8xbf16>,
    %164 = vector.extract_strided_slice %16 {offsets = [1, 1, 0], sizes = [8, 8, 8], strides = [1, 1, 1]} : vector<10x10x8xbf16> to vector<8x8x8xbf16>
    %165 = vector.shape_cast %164 : vector<8x8x8xbf16> to vector<64x8xbf16>
    %c64_88 = arith.constant 64 : index
    %c176_89 = arith.constant 176 : index
    %166 = vector.load %arg6[%c64_88, %c176_89] : memref<128x216xbf16, #tpu.memory_space<vmem>>, vector<64x8xbf16>
    tpu.vector_store %arg6[%c64_88, %c176_89], %165 {strides = array<i32>} : memref<128x216xbf16, #tpu.memory_space<vmem>>, vector<64x8xbf16>,
    %167 = vector.extract_strided_slice %16 {offsets = [1, 2, 0], sizes = [8, 8, 8], strides = [1, 1, 1]} : vector<10x10x8xbf16> to vector<8x8x8xbf16>
    %168 = vector.shape_cast %167 : vector<8x8x8xbf16> to vector<64x8xbf16>
    %c64_90 = arith.constant 64 : index
    %c184_91 = arith.constant 184 : index
    %169 = vector.load %arg6[%c64_90, %c184_91] : memref<128x216xbf16, #tpu.memory_space<vmem>>, vector<64x8xbf16>
    tpu.vector_store %arg6[%c64_90, %c184_91], %168 {strides = array<i32>} : memref<128x216xbf16, #tpu.memory_space<vmem>>, vector<64x8xbf16>,
    %170 = vector.extract_strided_slice %16 {offsets = [2, 0, 0], sizes = [8, 8, 8], strides = [1, 1, 1]} : vector<10x10x8xbf16> to vector<8x8x8xbf16>
    %171 = vector.shape_cast %170 : vector<8x8x8xbf16> to vector<64x8xbf16>
    %c64_92 = arith.constant 64 : index
    %c192_93 = arith.constant 192 : index
    %172 = vector.load %arg6[%c64_92, %c192_93] : memref<128x216xbf16, #tpu.memory_space<vmem>>, vector<64x8xbf16>
    tpu.vector_store %arg6[%c64_92, %c192_93], %171 {strides = array<i32>} : memref<128x216xbf16, #tpu.memory_space<vmem>>, vector<64x8xbf16>,
    %173 = vector.extract_strided_slice %16 {offsets = [2, 1, 0], sizes = [8, 8, 8], strides = [1, 1, 1]} : vector<10x10x8xbf16> to vector<8x8x8xbf16>
    %174 = vector.shape_cast %173 : vector<8x8x8xbf16> to vector<64x8xbf16>
    %c64_94 = arith.constant 64 : index
    %c200_95 = arith.constant 200 : index
    %175 = vector.load %arg6[%c64_94, %c200_95] : memref<128x216xbf16, #tpu.memory_space<vmem>>, vector<64x8xbf16>
    tpu.vector_store %arg6[%c64_94, %c200_95], %174 {strides = array<i32>} : memref<128x216xbf16, #tpu.memory_space<vmem>>, vector<64x8xbf16>,
    %176 = vector.extract_strided_slice %16 {offsets = [2, 2, 0], sizes = [8, 8, 8], strides = [1, 1, 1]} : vector<10x10x8xbf16> to vector<8x8x8xbf16>
    %177 = vector.shape_cast %176 : vector<8x8x8xbf16> to vector<64x8xbf16>
    %c64_96 = arith.constant 64 : index
    %c208_97 = arith.constant 208 : index
    %178 = vector.load %arg6[%c64_96, %c208_97] : memref<128x216xbf16, #tpu.memory_space<vmem>>, vector<64x8xbf16>
    tpu.vector_store %arg6[%c64_96, %c208_97], %177 {strides = array<i32>} : memref<128x216xbf16, #tpu.memory_space<vmem>>, vector<64x8xbf16>,
    %c0_98 = arith.constant 0 : index
    %c0_99 = arith.constant 0 : index
    %179 = vector.load %arg6[%c0_98, %c0_99] : memref<128x216xbf16, #tpu.memory_space<vmem>>, vector<128x216xbf16>
    %c0_100 = arith.constant 0 : index
    %c0_101 = arith.constant 0 : index
    %180 = vector.load %arg3[%c0_100, %c0_101] : memref<216x128xbf16, #tpu.memory_space<vmem>>, vector<216x128xbf16>
    %cst = arith.constant dense<0.000000e+00> : vector<128x128xf32>
    %181 = tpu.matmul %179, %180, %cst {dimension_numbers = #tpu.dot_dimension_numbers<[1], [0], [0], [1], [0, 0, 1, 1], [], []>} : vector<128x216xbf16>, vector<216x128xbf16>, vector<128x128xf32> -> vector<128x128xf32>
    %182 = arith.mulf %181, %181 : vector<128x128xf32>
    %cst_102 = arith.constant dense<0.000000e+00> : vector<128xf32>
    %183 = vector.multi_reduction <add>, %182, %cst_102 [1] : vector<128x128xf32> to vector<128xf32>
    %184 = vector.shape_cast %183 : vector<128xf32> to vector<128x1xf32>
    %cst_103 = arith.constant 1.000000e-24 : f32
    %185 = vector.broadcast %cst_103 : f32 to vector<128x1xf32>
    %186 = arith.maximumf %184, %185 : vector<128x1xf32>
    %187 = math.rsqrt %186 : vector<128x1xf32>
    %cst_104 = arith.constant 2.82842708 : f32
    %188 = vector.broadcast %cst_104 : f32 to vector<128x1xf32>
    %189 = arith.mulf %187, %188 : vector<128x1xf32>
    %190 = vector.broadcast %189 : vector<128x1xf32> to vector<128x128xf32>
    %191 = arith.mulf %181, %190 : vector<128x128xf32>
    %c0_105 = arith.constant 0 : index
    %c0_106 = arith.constant 0 : index
    %192 = vector.load %arg4[%c0_105, %c0_106] : memref<1x128xf32, #tpu.memory_space<vmem>>, vector<1x128xf32>
    %193 = vector.broadcast %192 : vector<1x128xf32> to vector<128x128xf32>
    %194 = arith.mulf %191, %193 : vector<128x128xf32>
    %cst_107 = arith.constant 0.000000e+00 : f32
    %195 = vector.broadcast %cst_107 : f32 to vector<128x128xf32>
    %196 = arith.cmpf oge, %194, %195 : vector<128x128xf32>
    %cst_108 = arith.constant 0.00999999977 : f32
    %197 = vector.broadcast %cst_108 : f32 to vector<128x128xf32>
    %198 = arith.mulf %197, %194 : vector<128x128xf32>
    %199 = arith.select %196, %194, %198 : vector<128x128xi1>, vector<128x128xf32>
    %200 = arith.truncf %199 : vector<128x128xf32> to vector<128x128xbf16>
    %c0_109 = arith.constant 0 : index
    %c0_110 = arith.constant 0 : index
    %c0_111 = arith.constant 0 : index
    %201 = vector.load %arg5[%c0_109, %c0_110, %c0_111] : memref<1x128x128xbf16, #tpu.memory_space<vmem>>, vector<1x128x128xbf16>
    %202 = vector.shape_cast %201 : vector<1x128x128xbf16> to vector<128x128xbf16>
    %203 = vector.shape_cast %200 : vector<128x128xbf16> to vector<1x128x128xbf16>
    tpu.vector_store %arg5[%c0_109, %c0_110, %c0_111], %203 {strides = array<i32>} : memref<1x128x128xbf16, #tpu.memory_space<vmem>>, vector<1x128x128xbf16>,
    return
  }
  func.func @transform_0(%arg0: i32, %arg1: i32) -> (i32, i32, i32, i32, i32) {
    %c0_i32 = arith.constant 0 : i32
    %c0_i32_0 = arith.constant 0 : i32
    %c0_i32_1 = arith.constant 0 : i32
    %c0_i32_2 = arith.constant 0 : i32
    %c0_i32_3 = arith.constant 0 : i32
    return %arg0, %c0_i32, %c0_i32_0, %c0_i32_1, %c0_i32_2 : i32, i32, i32, i32, i32
  }
  func.func @transform_1(%arg0: i32, %arg1: i32) -> (i32, i32) {
    %c0_i32 = arith.constant 0 : i32
    %c0_i32_0 = arith.constant 0 : i32
    %c0_i32_1 = arith.constant 0 : i32
    return %c0_i32, %c0_i32_0 : i32, i32
  }
  func.func @transform_2(%arg0: i32, %arg1: i32) -> (i32, i32) {
    %c0_i32 = arith.constant 0 : i32
    %c0_i32_0 = arith.constant 0 : i32
    %c0_i32_1 = arith.constant 0 : i32
    return %c0_i32, %c0_i32_0 : i32, i32
  }
  func.func @transform_3(%arg0: i32, %arg1: i32) -> (i32, i32, i32) {
    %c0_i32 = arith.constant 0 : i32
    %c0_i32_0 = arith.constant 0 : i32
    return %arg0, %arg1, %c0_i32 : i32, i32, i32
  }
}

</mosaic_0001>

<llo_original>
// kernel: tpu_custom_call.1
$region0: #{tpu_custom_call.1}
  #allocation0 [shape = 'u32[]', space=smem, size = 0x4, offset = 0x4, fixed_abs, tag = 'smem constant byte address 0x4 - core index']
  #allocation1 [shape = 'u32[72,128]{1,0:T(1,128)}', space=vmem, size = 0x9000, scoped, tag = 'internal scratch']
  #allocation2 [shape = 'bf16[128,216]{1,0:T(8,128)(2,1)}', space=vmem, size = 0x10000, scoped, tag = 'scratch operand']
  %s0 = inlined_call_operand.vmem [shape: bf16[2,6,10,10,8], index: 0, kind: input, shape index: {}]
  %s1 = inlined_call_operand.vmem [shape: bf16[216,128], index: 1, kind: input, shape index: {}]
  %s2 = inlined_call_operand.vmem [shape: f32[1,128], index: 2, kind: input, shape index: {}]
  %s3 = inlined_call_operand.hbm [shape: bf16[2,256,128], index: 3, kind: output, shape index: {}]
  %s4 = sld [smem:[#allocation0]]
  $region45: #{tpu_custom_call.1} parent=0
    _
  %s6 = ssub.s32 1, %s4
  %s7 = scalar_select 0, %s6, %s4
  $region1: #{tpu_custom_call.1} parent=0
    #allocation3 [shape = 'u8[65536]{0}', space=vmem, size = 0x10000, scoped, tag = 'output window, operand 0']
    #allocation4 [shape = 's32[2]{0}', space=sflag, size = 0x8, scoped, tag = 'scoped memory for tpu_custom_call.1']
    %8 = vsyncpa [#allocation4], 0
    %s9 = scalar_lea.sflag [#allocation4], 1
    %10 = vsyncpa %s9, 0
    loop: start=0, step=1, limit=6
    $region2: #{tpu_custom_call.1} parent=1 // loop_pre_header
      _
    $region3: #{tpu_custom_call.1} parent=1 // loop_header
      %s12 = sphi 0, %s16
      %p13 = scmp.ge.s32.totalorder %s12, 6
      %s19 = sphi 0, %s31
      %s20 = sphi 0, %s27
      %s21 = sphi 0, %s19
      %s22 = sphi 0, %s20
      %s23 = sphi 0, %s21
      %s24 = sphi 0, %s22
      %s34 = sphi 0, %s36
      %s37 = sphi 0, %s34
      %s38 = sphi 0, %s37
      %s54 = sphi 0, %s38
      %s58 = sphi 0, %s58
      %s60 = sphi 0, %s58
      %s61 = sphi 0, %s60
      %s75 = sphi 0, %s61
      %s79 = sphi 0, %s79
      %s81 = sphi 0, %s79
      %s82 = sphi 0, %s81
      %s96 = sphi 0, %s82
      %s104 = sphi 0, %s106
      %s107 = sphi 0, %s104
      %s108 = sphi 0, %s107
      %s124 = sphi 0, %s108
    $region4: #{tpu_custom_call.1} parent=1 // loop_header_branch
      %15 = sbr.rel (%p13) target = $region8
    $region5: #{tpu_custom_call.1} parent=1 // loop_body
      %s17 = ssub.s32 %s12, 1
      %s18 = ssub.s32 %s12, 2
      %s25 = sadd.s32 1, %s20
      %p26 = scmp.ge.s32.totalorder %s25, 2
      %s27 = scalar_select %p26, 0, %s25
      %s28 = sadd.s32 1, %s19
      %s29 = scalar_select %p26, %s28, %s19
      %p30 = scmp.ge.s32.totalorder %s29, 2
      %s31 = scalar_select %p30, 0, %s29
      %s32 = ssub.s32 %s19, %s31
      %p33 = scmp.eq.s32.totalorder %s32, 0
      %s35 = sadd.s32 %s34, 1
      %s36 = scalar_select %p33, %s34, %s35
      %p39 = pneg %p33
      %p40 = scmp.eq.s32.totalorder %s12, 3
      %p41 = por %p39, %p40
      %p42 = scmp.ne.s32.totalorder %s34, %s37
      %p43 = scmp.eq.s32.totalorder %s12, 0
      %p44 = por %p42, %p43
      %p45 = scmp.ne.s32.totalorder %s34, %s37
      %p46 = scmp.eq.s32.totalorder %s17, 3
      %p47 = por %p45, %p46
      %p48 = scmp.ne.s32.totalorder %s37, %s38
      %p49 = scmp.eq.s32.totalorder %s17, 0
      %p50 = por %p48, %p49
      %p51 = scmp.ne.s32.totalorder %s37, %s38
      %p52 = scmp.eq.s32.totalorder %s18, 3
      %p53 = por %p51, %p52
      %p55 = scmp.ne.s32.totalorder %s38, %s54
      %p56 = scmp.eq.s32.totalorder %s18, 0
      %p57 = por %p55, %p56
      %s59 = sadd.s32 %s58, 1
      %p62 = scmp.eq.s32.totalorder %s12, 3
      %p63 = scmp.ne.s32.totalorder %s58, %s60
      %p64 = scmp.eq.s32.totalorder %s12, 0
      %p65 = por %p63, %p64
      %p66 = scmp.ne.s32.totalorder %s58, %s60
      %p67 = scmp.eq.s32.totalorder %s17, 3
      %p68 = por %p66, %p67
      %p69 = scmp.ne.s32.totalorder %s60, %s61
      %p70 = scmp.eq.s32.totalorder %s17, 0
      %p71 = por %p69, %p70
      %p72 = scmp.ne.s32.totalorder %s60, %s61
      %p73 = scmp.eq.s32.totalorder %s18, 3
      %p74 = por %p72, %p73
      %p76 = scmp.ne.s32.totalorder %s61, %s75
      %p77 = scmp.eq.s32.totalorder %s18, 0
      %p78 = por %p76, %p77
      %s80 = sadd.s32 %s79, 1
      %p83 = scmp.eq.s32.totalorder %s12, 3
      %p84 = scmp.ne.s32.totalorder %s79, %s81
      %p85 = scmp.eq.s32.totalorder %s12, 0
      %p86 = por %p84, %p85
      %p87 = scmp.ne.s32.totalorder %s79, %s81
      %p88 = scmp.eq.s32.totalorder %s17, 3
      %p89 = por %p87, %p88
      %p90 = scmp.ne.s32.totalorder %s81, %s82
      %p91 = scmp.eq.s32.totalorder %s17, 0
      %p92 = por %p90, %p91
      %p93 = scmp.ne.s32.totalorder %s81, %s82
      %p94 = scmp.eq.s32.totalorder %s18, 3
      %p95 = por %p93, %p94
      %p97 = scmp.ne.s32.totalorder %s82, %s96
      %p98 = scmp.eq.s32.totalorder %s18, 0
      %p99 = por %p97, %p98
      %s100 = ssub.s32 %s19, %s31
      %s101 = ssub.s32 %s20, %s27
      %s102 = sor.u32 %s100, %s101
      %p103 = scmp.eq.s32.totalorder %s102, 0
      %s105 = sadd.s32 %s104, 1
      %s106 = scalar_select %p103, %s104, %s105
      %p109 = pneg %p103
      %p110 = scmp.eq.s32.totalorder %s12, 3
      %p111 = por %p109, %p110
      %p112 = scmp.ne.s32.totalorder %s104, %s107
      %p113 = scmp.eq.s32.totalorder %s12, 0
      %p114 = por %p112, %p113
      %p115 = scmp.ne.s32.totalorder %s104, %s107
      %p116 = scmp.eq.s32.totalorder %s17, 3
      %p117 = por %p115, %p116
      %p118 = scmp.ne.s32.totalorder %s107, %s108
      %p119 = scmp.eq.s32.totalorder %s17, 0
      %p120 = por %p118, %p119
      %p121 = scmp.ne.s32.totalorder %s107, %s108
      %p122 = scmp.eq.s32.totalorder %s18, 3
      %p123 = por %p121, %p122
      %p125 = scmp.ne.s32.totalorder %s108, %s124
      %p126 = scmp.eq.s32.totalorder %s18, 0
      %p127 = por %p125, %p126
      %p128 = scmp.le.s32.totalorder 1, %s12
      %p129 = scmp.lt.s32.totalorder %s12, 5
      %p130 = pnand %p128, %p129
      %p131 = pneg %p130
      // Predicated region
      $region9: #{tpu_custom_call.1} parent=5 // pred_check
        _
      $region10: #{tpu_custom_call.1} parent=5 // pred_check_branch
        %133 = sbr.rel (%p130) target = $region12
      $region11: #{tpu_custom_call.1} parent=5 // pred_region
        %s134 = ssub.s32 %s12, 1
        // Predicated region
        $region13: #{tpu_custom_call.1} parent=11 // pred_check
          %p135 = pneg %p71
        $region14: #{tpu_custom_call.1} parent=11 // pred_check_branch
          %137 = sbr.rel (%p135) target = $region16
        $region15: #{tpu_custom_call.1} parent=11 // pred_region
          _
        $region16: #{tpu_custom_call.1} parent=11 // pred_fallthru
          _
        // Predicated region
        $region17: #{tpu_custom_call.1} parent=11 // pred_check
          %p138 = pneg %p92
        $region18: #{tpu_custom_call.1} parent=11 // pred_check_branch
          %140 = sbr.rel (%p138) target = $region20
        $region19: #{tpu_custom_call.1} parent=11 // pred_region
          _
        $region20: #{tpu_custom_call.1} parent=11 // pred_fallthru
          _
      $region12: #{tpu_custom_call.1} parent=5 // pred_fallthru
        _
      %p141 = scmp.lt.s32.totalorder %s12, 4
      // Predicated region
      $region21: #{tpu_custom_call.1} parent=5 // pred_check
        %p142 = pneg %p141
      $region22: #{tpu_custom_call.1} parent=5 // pred_check_branch
        %144 = sbr.rel (%p142) target = $region24
      $region23: #{tpu_custom_call.1} parent=5 // pred_region
        // Predicated region
        $region25: #{tpu_custom_call.1} parent=23 // pred_check
          %p145 = pneg %p44
        $region26: #{tpu_custom_call.1} parent=23 // pred_check_branch
          %147 = sbr.rel (%p145) target = $region28
        $region27: #{tpu_custom_call.1} parent=23 // pred_region
          %p148 = scmp.lt.s32.totalorder %s19, 1
          %s149 = scalar_select %p148, %s19, 1
          %s150 = smul.addr %s149, 120
          %s151 = smul.addr %s150, 4
          %s152 = scalar_lea.vmem %s0, %s151
        $region28: #{tpu_custom_call.1} parent=23 // pred_fallthru
          _
      $region24: #{tpu_custom_call.1} parent=5 // pred_fallthru
        _
      %p153 = scmp.le.s32.totalorder 1, %s12
      %p154 = scmp.lt.s32.totalorder %s12, 5
      %p155 = pnand %p153, %p154
      %p156 = pneg %p155
      // Predicated region
      $region29: #{tpu_custom_call.1} parent=5 // pred_check
        _
      $region30: #{tpu_custom_call.1} parent=5 // pred_check_branch
        %158 = sbr.rel (%p155) target = $region32
      $region31: #{tpu_custom_call.1} parent=5 // pred_region
        %s159 = ssub.s32 %s12, 1
        %p160 = scmp.lt.s32.totalorder %s21, 1
        %s161 = scalar_select %p160, %s21, 1
        %s162 = smul.addr %s161, 120
        %s163 = smul.addr %s162, 4
        %s164 = scalar_lea.vmem %s0, %s163
        %p165 = pneg %p50
        %p166 = pneg %p47
        %p167 = pneg %p71
        %p168 = pneg %p68
        %p169 = pneg %p92
        %p170 = pneg %p89
        %p171 = pneg %p120
        %p172 = pneg %p117
        %s173 = sand.u32 %s107, 1
        %s174 = scalar_lea.sflag [#allocation4], %s173
        %s175 = sand.u32 %s107, 1
        %s176 = smul.addr %s175, 64
        %s177 = scalar_lea.vmem [#allocation3], %s176
        %p178 = scmp.lt.s32.totalorder %s21, 1
        %s179 = scalar_select %p178, %s21, 1
        %s180 = smul.addr %s179, 120
        %s181 = smul.addr %s180, 4
        %s182 = scalar_lea.vmem %s0, %s181
        %s183 = smul.u32 16, %s22
        %s185 = smul.u32 %s22, 2
        %s186 = smul.u32 %s185, 20
        %s187 = smul.addr %s186, 4
        %s188 = scalar_lea.vmem %s182, %s187
        %v189 = vld [vmem:[%s188] sm:$0xf]
        %v190 = vld [vmem:[%s188 + $0x4] sm:$0x1]
        %v191 = vld [vmem:[%s188 + $0x8] sm:$0xf]
        %v192 = vld [vmem:[%s188 + $0xc] sm:$0x1]
        %v193 = vld [vmem:[%s188 + $0x10] sm:$0xf]
        %v194 = vld [vmem:[%s188 + $0x14] sm:$0x1]
        %v195 = vld [vmem:[%s188 + $0x18] sm:$0xf]
        %v196 = vld [vmem:[%s188 + $0x1c] sm:$0x1]
        %v197 = vld [vmem:[%s188 + $0x20] sm:$0xf]
        %v198 = vld [vmem:[%s188 + $0x24] sm:$0x1]
        %v199 = vld [vmem:[%s188 + $0x28] sm:$0xf]
        %v200 = vld [vmem:[%s188 + $0x2c] sm:$0x1]
        %v201 = vld [vmem:[%s188 + $0x30] sm:$0xf]
        %v202 = vld [vmem:[%s188 + $0x34] sm:$0x1]
        %v203 = vld [vmem:[%s188 + $0x38] sm:$0xf]
        %v204 = vld [vmem:[%s188 + $0x3c] sm:$0x1]
        %v205 = vld [vmem:[%s188 + $0x40] sm:$0xf]
        %v206 = vld [vmem:[%s188 + $0x44] sm:$0x1]
        %v207 = vld [vmem:[%s188 + $0x48] sm:$0xf]
        %v208 = vld [vmem:[%s188 + $0x4c] sm:$0x1]
        %s209 = sadd.s32 %s185, 1
        %s210 = smul.u32 %s209, 20
        %s211 = smul.addr %s210, 4
        %s212 = scalar_lea.vmem %s182, %s211
        %v213 = vld [vmem:[%s212] sm:$0xf]
        %v214 = vld [vmem:[%s212 + $0x4] sm:$0x1]
        %v215 = vld [vmem:[%s212 + $0x8] sm:$0xf]
        %v216 = vld [vmem:[%s212 + $0xc] sm:$0x1]
        %v217 = vld [vmem:[%s212 + $0x10] sm:$0xf]
        %v218 = vld [vmem:[%s212 + $0x14] sm:$0x1]
        %v219 = vld [vmem:[%s212 + $0x18] sm:$0xf]
        %v220 = vld [vmem:[%s212 + $0x1c] sm:$0x1]
        %v221 = vld [vmem:[%s212 + $0x20] sm:$0xf]
        %v222 = vld [vmem:[%s212 + $0x24] sm:$0x1]
        %v223 = vld [vmem:[%s212 + $0x28] sm:$0xf]
        %v224 = vld [vmem:[%s212 + $0x2c] sm:$0x1]
        %v225 = vld [vmem:[%s212 + $0x30] sm:$0xf]
        %v226 = vld [vmem:[%s212 + $0x34] sm:$0x1]
        %v227 = vld [vmem:[%s212 + $0x38] sm:$0xf]
        %v228 = vld [vmem:[%s212 + $0x3c] sm:$0x1]
        %v229 = vld [vmem:[%s212 + $0x40] sm:$0xf]
        %v230 = vld [vmem:[%s212 + $0x44] sm:$0x1]
        %v231 = vld [vmem:[%s212 + $0x48] sm:$0xf]
        %v232 = vld [vmem:[%s212 + $0x4c] sm:$0x1]
        %s233 = sadd.s32 %s185, 2
        %s234 = smul.u32 %s233, 20
        %s235 = smul.addr %s234, 4
        %s236 = scalar_lea.vmem %s182, %s235
        %v237 = vld [vmem:[%s236] sm:$0xf]
        %v238 = vld [vmem:[%s236 + $0x4] sm:$0x1]
        %v239 = vld [vmem:[%s236 + $0x8] sm:$0xf]
        %v240 = vld [vmem:[%s236 + $0xc] sm:$0x1]
        %v241 = vld [vmem:[%s236 + $0x10] sm:$0xf]
        %v242 = vld [vmem:[%s236 + $0x14] sm:$0x1]
        %v243 = vld [vmem:[%s236 + $0x18] sm:$0xf]
        %v244 = vld [vmem:[%s236 + $0x1c] sm:$0x1]
        %v245 = vld [vmem:[%s236 + $0x20] sm:$0xf]
        %v246 = vld [vmem:[%s236 + $0x24] sm:$0x1]
        %v247 = vld [vmem:[%s236 + $0x28] sm:$0xf]
        %v248 = vld [vmem:[%s236 + $0x2c] sm:$0x1]
        %v249 = vld [vmem:[%s236 + $0x30] sm:$0xf]
        %v250 = vld [vmem:[%s236 + $0x34] sm:$0x1]
        %v251 = vld [vmem:[%s236 + $0x38] sm:$0xf]
        %v252 = vld [vmem:[%s236 + $0x3c] sm:$0x1]
        %v253 = vld [vmem:[%s236 + $0x40] sm:$0xf]
        %v254 = vld [vmem:[%s236 + $0x44] sm:$0x1]
        %v255 = vld [vmem:[%s236 + $0x48] sm:$0xf]
        %v256 = vld [vmem:[%s236 + $0x4c] sm:$0x1]
        %s257 = sadd.s32 %s185, 3
        %s258 = smul.u32 %s257, 20
        %s259 = smul.addr %s258, 4
        %s260 = scalar_lea.vmem %s182, %s259
        %v261 = vld [vmem:[%s260] sm:$0xf]
        %v262 = vld [vmem:[%s260 + $0x4] sm:$0x1]
        %v263 = vld [vmem:[%s260 + $0x8] sm:$0xf]
        %v264 = vld [vmem:[%s260 + $0xc] sm:$0x1]
        %v265 = vld [vmem:[%s260 + $0x10] sm:$0xf]
        %v266 = vld [vmem:[%s260 + $0x14] sm:$0x1]
        %v267 = vld [vmem:[%s260 + $0x18] sm:$0xf]
        %v268 = vld [vmem:[%s260 + $0x1c] sm:$0x1]
        %v269 = vld [vmem:[%s260 + $0x20] sm:$0xf]
        %v270 = vld [vmem:[%s260 + $0x24] sm:$0x1]
        %v271 = vld [vmem:[%s260 + $0x28] sm:$0xf]
        %v272 = vld [vmem:[%s260 + $0x2c] sm:$0x1]
        %v273 = vld [vmem:[%s260 + $0x30] sm:$0xf]
        %v274 = vld [vmem:[%s260 + $0x34] sm:$0x1]
        %v275 = vld [vmem:[%s260 + $0x38] sm:$0xf]
        %v276 = vld [vmem:[%s260 + $0x3c] sm:$0x1]
        %v277 = vld [vmem:[%s260 + $0x40] sm:$0xf]
        %v278 = vld [vmem:[%s260 + $0x44] sm:$0x1]
        %v279 = vld [vmem:[%s260 + $0x48] sm:$0xf]
        %v280 = vld [vmem:[%s260 + $0x4c] sm:$0x1]
        %vm281 = vcmask 60416
        %282 = vst.msk [vmem:[#allocation2] sm:$0xf] %vm281, %v189
        %283 = vst.msk [vmem:[#allocation2 + $0x8] sm:$0xf] %vm281, %v191
        %284 = vst.msk [vmem:[#allocation2 + $0x10] sm:$0xf] %vm281, %v193
        %285 = vst.msk [vmem:[#allocation2 + $0x18] sm:$0xf] %vm281, %v195
        %286 = vst.msk [vmem:[#allocation2 + $0x20] sm:$0xf] %vm281, %v197
        %287 = vst.msk [vmem:[#allocation2 + $0x28] sm:$0xf] %vm281, %v199
        %288 = vst.msk [vmem:[#allocation2 + $0x30] sm:$0xf] %vm281, %v201
        %289 = vst.msk [vmem:[#allocation2 + $0x38] sm:$0xf] %vm281, %v203
        %vm290 = vsmask.f32 3328
        %vm291 = vsmask.f32 7440
        %vm292 = vmor %vm290, %vm291
        %v294 = vshrl.u32 %v189, 16
        %v296 = vrot.slane %v294, 4
        %v297 = vshll.u32 %v189, 16
        %v299 = vrot.slane %v297, 5
        %v300 = vor.u32 %v296, %v299
        %v301 = vrot.slane %v300, 4
        %v303 = vshll.u32 %v190, 16
        %v305 = vrot.slane %v303, 5
        %v306 = vsel %vm292, %v301, %v305
        %v308 = vshrl.u32 %v191, 16
        %v310 = vrot.slane %v308, 4
        %v311 = vshll.u32 %v191, 16
        %v313 = vrot.slane %v311, 5
        %v314 = vor.u32 %v310, %v313
        %v315 = vrot.slane %v314, 4
        %v317 = vshll.u32 %v192, 16
        %v319 = vrot.slane %v317, 5
        %v320 = vsel %vm292, %v315, %v319
        %v322 = vshrl.u32 %v193, 16
        %v324 = vrot.slane %v322, 4
        %v325 = vshll.u32 %v193, 16
        %v327 = vrot.slane %v325, 5
        %v328 = vor.u32 %v324, %v327
        %v329 = vrot.slane %v328, 4
        %v331 = vshll.u32 %v194, 16
        %v333 = vrot.slane %v331, 5
        %v334 = vsel %vm292, %v329, %v333
        %v336 = vshrl.u32 %v195, 16
        %v338 = vrot.slane %v336, 4
        %v339 = vshll.u32 %v195, 16
        %v341 = vrot.slane %v339, 5
        %v342 = vor.u32 %v338, %v341
        %v343 = vrot.slane %v342, 4
        %v345 = vshll.u32 %v196, 16
        %v347 = vrot.slane %v345, 5
        %v348 = vsel %vm292, %v343, %v347
        %v350 = vshrl.u32 %v197, 16
        %v352 = vrot.slane %v350, 4
        %v353 = vshll.u32 %v197, 16
        %v355 = vrot.slane %v353, 5
        %v356 = vor.u32 %v352, %v355
        %v357 = vrot.slane %v356, 4
        %v359 = vshll.u32 %v198, 16
        %v361 = vrot.slane %v359, 5
        %v362 = vsel %vm292, %v357, %v361
        %v364 = vshrl.u32 %v199, 16
        %v366 = vrot.slane %v364, 4
        %v367 = vshll.u32 %v199, 16
        %v369 = vrot.slane %v367, 5
        %v370 = vor.u32 %v366, %v369
        %v371 = vrot.slane %v370, 4
        %v373 = vshll.u32 %v200, 16
        %v375 = vrot.slane %v373, 5
        %v376 = vsel %vm292, %v371, %v375
        %v378 = vshrl.u32 %v201, 16
        %v380 = vrot.slane %v378, 4
        %v381 = vshll.u32 %v201, 16
        %v383 = vrot.slane %v381, 5
        %v384 = vor.u32 %v380, %v383
        %v385 = vrot.slane %v384, 4
        %v387 = vshll.u32 %v202, 16
        %v389 = vrot.slane %v387, 5
        %v390 = vsel %vm292, %v385, %v389
        %v392 = vshrl.u32 %v203, 16
        %v394 = vrot.slane %v392, 4
        %v395 = vshll.u32 %v203, 16
        %v397 = vrot.slane %v395, 5
        %v398 = vor.u32 %v394, %v397
        %v399 = vrot.slane %v398, 4
        %v401 = vshll.u32 %v204, 16
        %v403 = vrot.slane %v401, 5
        %v404 = vsel %vm292, %v399, %v403
        %405 = vrot.lane.b32.xlu0 %v306, 8
        %v406 = vpop.permute.xlu0 %405
        %407 = vrot.lane.b32.xlu0 %v320, 8
        %v408 = vpop.permute.xlu0 %407
        %409 = vrot.lane.b32.xlu0 %v334, 8
        %v410 = vpop.permute.xlu0 %409
        %411 = vrot.lane.b32.xlu0 %v348, 8
        %v412 = vpop.permute.xlu0 %411
        %413 = vrot.lane.b32.xlu0 %v362, 8
        %v414 = vpop.permute.xlu0 %413
        %415 = vrot.lane.b32.xlu0 %v376, 8
        %v416 = vpop.permute.xlu0 %415
        %417 = vrot.lane.b32.xlu0 %v390, 8
        %v418 = vpop.permute.xlu0 %417
        %419 = vrot.lane.b32.xlu0 %v404, 8
        %v420 = vpop.permute.xlu0 %419
        %vm429 = vcmask 126016
        %430 = vst.msk [vmem:[#allocation2] sm:$0xf] %vm429, %v406
        %431 = vst.msk [vmem:[#allocation2 + $0x8] sm:$0xf] %vm429, %v408
        %432 = vst.msk [vmem:[#allocation2 + $0x10] sm:$0xf] %vm429, %v410
        %433 = vst.msk [vmem:[#allocation2 + $0x18] sm:$0xf] %vm429, %v412
        %434 = vst.msk [vmem:[#allocation2 + $0x20] sm:$0xf] %vm429, %v414
        %435 = vst.msk [vmem:[#allocation2 + $0x28] sm:$0xf] %vm429, %v416
        %436 = vst.msk [vmem:[#allocation2 + $0x30] sm:$0xf] %vm429, %v418
        %437 = vst.msk [vmem:[#allocation2 + $0x38] sm:$0xf] %vm429, %v420
        %vm454 = vcmask 1042432
        %vm455 = vcmask 1046532
        %vm456 = vmor %vm454, %vm455
        %v457 = vrot.slane %v189, 5
        %v458 = vrot.slane %v457, 4
        %v459 = vrot.slane %v190, 5
        %v460 = vsel %vm456, %v458, %v459
        %v461 = vrot.slane %v191, 5
        %v462 = vrot.slane %v461, 4
        %v463 = vrot.slane %v192, 5
        %v464 = vsel %vm456, %v462, %v463
        %v465 = vrot.slane %v193, 5
        %v466 = vrot.slane %v465, 4
        %v467 = vrot.slane %v194, 5
        %v468 = vsel %vm456, %v466, %v467
        %v469 = vrot.slane %v195, 5
        %v470 = vrot.slane %v469, 4
        %v471 = vrot.slane %v196, 5
        %v472 = vsel %vm456, %v470, %v471
        %v473 = vrot.slane %v197, 5
        %v474 = vrot.slane %v473, 4
        %v475 = vrot.slane %v198, 5
        %v476 = vsel %vm456, %v474, %v475
        %v477 = vrot.slane %v199, 5
        %v478 = vrot.slane %v477, 4
        %v479 = vrot.slane %v200, 5
        %v480 = vsel %vm456, %v478, %v479
        %v481 = vrot.slane %v201, 5
        %v482 = vrot.slane %v481, 4
        %v483 = vrot.slane %v202, 5
        %v484 = vsel %vm456, %v482, %v483
        %v485 = vrot.slane %v203, 5
        %v486 = vrot.slane %v485, 4
        %v487 = vrot.slane %v204, 5
        %v488 = vsel %vm456, %v486, %v487
        %489 = vrot.lane.b32.xlu0 %v460, 16
        %v490 = vpop.permute.xlu0 %489
        %491 = vrot.lane.b32.xlu0 %v464, 16
        %v492 = vpop.permute.xlu0 %491
        %493 = vrot.lane.b32.xlu0 %v468, 16
        %v494 = vpop.permute.xlu0 %493
        %495 = vrot.lane.b32.xlu0 %v472, 16
        %v496 = vpop.permute.xlu0 %495
        %497 = vrot.lane.b32.xlu0 %v476, 16
        %v498 = vpop.permute.xlu0 %497
        %499 = vrot.lane.b32.xlu0 %v480, 16
        %v500 = vpop.permute.xlu0 %499
        %501 = vrot.lane.b32.xlu0 %v484, 16
        %v502 = vpop.permute.xlu0 %501
        %503 = vrot.lane.b32.xlu0 %v488, 16
        %v504 = vpop.permute.xlu0 %503
        %vm513 = vcmask 191616
        %514 = vst.msk [vmem:[#allocation2] sm:$0xf] %vm513, %v490
        %515 = vst.msk [vmem:[#allocation2 + $0x8] sm:$0xf] %vm513, %v492
        %516 = vst.msk [vmem:[#allocation2 + $0x10] sm:$0xf] %vm513, %v494
        %517 = vst.msk [vmem:[#allocation2 + $0x18] sm:$0xf] %vm513, %v496
        %518 = vst.msk [vmem:[#allocation2 + $0x20] sm:$0xf] %vm513, %v498
        %519 = vst.msk [vmem:[#allocation2 + $0x28] sm:$0xf] %vm513, %v500
        %520 = vst.msk [vmem:[#allocation2 + $0x30] sm:$0xf] %vm513, %v502
        %521 = vst.msk [vmem:[#allocation2 + $0x38] sm:$0xf] %vm513, %v504
        %523 = vrot.lane.b32.xlu0 %v191, 24
        %v524 = vpop.permute.xlu0 %523
        %525 = vrot.lane.b32.xlu0 %v193, 24
        %v526 = vpop.permute.xlu0 %525
        %527 = vrot.lane.b32.xlu0 %v195, 24
        %v528 = vpop.permute.xlu0 %527
        %529 = vrot.lane.b32.xlu0 %v197, 24
        %v530 = vpop.permute.xlu0 %529
        %531 = vrot.lane.b32.xlu0 %v199, 24
        %v532 = vpop.permute.xlu0 %531
        %533 = vrot.lane.b32.xlu0 %v201, 24
        %v534 = vpop.permute.xlu0 %533
        %535 = vrot.lane.b32.xlu0 %v203, 24
        %v536 = vpop.permute.xlu0 %535
        %537 = vrot.lane.b32.xlu0 %v205, 24
        %v538 = vpop.permute.xlu0 %537
        %vm547 = vcmask 257216
        %548 = vst.msk [vmem:[#allocation2] sm:$0xf] %vm547, %v524
        %549 = vst.msk [vmem:[#allocation2 + $0x8] sm:$0xf] %vm547, %v526
        %550 = vst.msk [vmem:[#allocation2 + $0x10] sm:$0xf] %vm547, %v528
        %551 = vst.msk [vmem:[#allocation2 + $0x18] sm:$0xf] %vm547, %v530
        %552 = vst.msk [vmem:[#allocation2 + $0x20] sm:$0xf] %vm547, %v532
        %553 = vst.msk [vmem:[#allocation2 + $0x28] sm:$0xf] %vm547, %v534
        %554 = vst.msk [vmem:[#allocation2 + $0x30] sm:$0xf] %vm547, %v536
        %555 = vst.msk [vmem:[#allocation2 + $0x38] sm:$0xf] %vm547, %v538
        %v557 = vshrl.u32 %v205, 16
        %v559 = vrot.slane %v557, 4
        %v560 = vshll.u32 %v205, 16
        %v562 = vrot.slane %v560, 5
        %v563 = vor.u32 %v559, %v562
        %v564 = vrot.slane %v563, 4
        %v566 = vshll.u32 %v206, 16
        %v568 = vrot.slane %v566, 5
        %v569 = vsel %vm292, %v564, %v568
        %570 = vrot.lane.b32.xlu0 %v320, 32
        %v571 = vpop.permute.xlu0 %570
        %572 = vrot.lane.b32.xlu0 %v334, 32
        %v573 = vpop.permute.xlu0 %572
        %574 = vrot.lane.b32.xlu0 %v348, 32
        %v575 = vpop.permute.xlu0 %574
        %576 = vrot.lane.b32.xlu0 %v362, 32
        %v577 = vpop.permute.xlu0 %576
        %578 = vrot.lane.b32.xlu0 %v376, 32
        %v579 = vpop.permute.xlu0 %578
        %580 = vrot.lane.b32.xlu0 %v390, 32
        %v581 = vpop.permute.xlu0 %580
        %582 = vrot.lane.b32.xlu0 %v404, 32
        %v583 = vpop.permute.xlu0 %582
        %584 = vrot.lane.b32.xlu0 %v569, 32
        %v585 = vpop.permute.xlu0 %584
        %vm594 = vcmask 322816
        %595 = vst.msk [vmem:[#allocation2] sm:$0xf] %vm594, %v571
        %596 = vst.msk [vmem:[#allocation2 + $0x8] sm:$0xf] %vm594, %v573
        %597 = vst.msk [vmem:[#allocation2 + $0x10] sm:$0xf] %vm594, %v575
        %598 = vst.msk [vmem:[#allocation2 + $0x18] sm:$0xf] %vm594, %v577
        %599 = vst.msk [vmem:[#allocation2 + $0x20] sm:$0xf] %vm594, %v579
        %600 = vst.msk [vmem:[#allocation2 + $0x28] sm:$0xf] %vm594, %v581
        %601 = vst.msk [vmem:[#allocation2 + $0x30] sm:$0xf] %vm594, %v583
        %602 = vst.msk [vmem:[#allocation2 + $0x38] sm:$0xf] %vm594, %v585
        %v604 = vrot.slane %v205, 5
        %v605 = vrot.slane %v604, 4
        %v606 = vrot.slane %v206, 5
        %v607 = vsel %vm456, %v605, %v606
        %608 = vrot.lane.b32.xlu0 %v464, 40
        %v609 = vpop.permute.xlu0 %608
        %610 = vrot.lane.b32.xlu0 %v468, 40
        %v611 = vpop.permute.xlu0 %610
        %612 = vrot.lane.b32.xlu0 %v472, 40
        %v613 = vpop.permute.xlu0 %612
        %614 = vrot.lane.b32.xlu0 %v476, 40
        %v615 = vpop.permute.xlu0 %614
        %616 = vrot.lane.b32.xlu0 %v480, 40
        %v617 = vpop.permute.xlu0 %616
        %618 = vrot.lane.b32.xlu0 %v484, 40
        %v619 = vpop.permute.xlu0 %618
        %620 = vrot.lane.b32.xlu0 %v488, 40
        %v621 = vpop.permute.xlu0 %620
        %622 = vrot.lane.b32.xlu0 %v607, 40
        %v623 = vpop.permute.xlu0 %622
        %vm632 = vcmask 388416
        %633 = vst.msk [vmem:[#allocation2] sm:$0xf] %vm632, %v609
        %634 = vst.msk [vmem:[#allocation2 + $0x8] sm:$0xf] %vm632, %v611
        %635 = vst.msk [vmem:[#allocation2 + $0x10] sm:$0xf] %vm632, %v613
        %636 = vst.msk [vmem:[#allocation2 + $0x18] sm:$0xf] %vm632, %v615
        %637 = vst.msk [vmem:[#allocation2 + $0x20] sm:$0xf] %vm632, %v617
        %638 = vst.msk [vmem:[#allocation2 + $0x28] sm:$0xf] %vm632, %v619
        %639 = vst.msk [vmem:[#allocation2 + $0x30] sm:$0xf] %vm632, %v621
        %640 = vst.msk [vmem:[#allocation2 + $0x38] sm:$0xf] %vm632, %v623
        %642 = vrot.lane.b32.xlu0 %v193, 48
        %v643 = vpop.permute.xlu0 %642
        %644 = vrot.lane.b32.xlu0 %v195, 48
        %v645 = vpop.permute.xlu0 %644
        %646 = vrot.lane.b32.xlu0 %v197, 48
        %v647 = vpop.permute.xlu0 %646
        %648 = vrot.lane.b32.xlu0 %v199, 48
        %v649 = vpop.permute.xlu0 %648
        %650 = vrot.lane.b32.xlu0 %v201, 48
        %v651 = vpop.permute.xlu0 %650
        %652 = vrot.lane.b32.xlu0 %v203, 48
        %v653 = vpop.permute.xlu0 %652
        %654 = vrot.lane.b32.xlu0 %v205, 48
        %v655 = vpop.permute.xlu0 %654
        %656 = vrot.lane.b32.xlu0 %v207, 48
        %v657 = vpop.permute.xlu0 %656
        %vm666 = vcmask 454016
        %667 = vst.msk [vmem:[#allocation2] sm:$0xf] %vm666, %v643
        %668 = vst.msk [vmem:[#allocation2 + $0x8] sm:$0xf] %vm666, %v645
        %669 = vst.msk [vmem:[#allocation2 + $0x10] sm:$0xf] %vm666, %v647
        %670 = vst.msk [vmem:[#allocation2 + $0x18] sm:$0xf] %vm666, %v649
        %671 = vst.msk [vmem:[#allocation2 + $0x20] sm:$0xf] %vm666, %v651
        %672 = vst.msk [vmem:[#allocation2 + $0x28] sm:$0xf] %vm666, %v653
        %673 = vst.msk [vmem:[#allocation2 + $0x30] sm:$0xf] %vm666, %v655
        %674 = vst.msk [vmem:[#allocation2 + $0x38] sm:$0xf] %vm666, %v657
        %v676 = vshrl.u32 %v207, 16
        %v678 = vrot.slane %v676, 4
        %v679 = vshll.u32 %v207, 16
        %v681 = vrot.slane %v679, 5
        %v682 = vor.u32 %v678, %v681
        %v683 = vrot.slane %v682, 4
        %v685 = vshll.u32 %v208, 16
        %v687 = vrot.slane %v685, 5
        %v688 = vsel %vm292, %v683, %v687
        %689 = vrot.lane.b32.xlu0 %v334, 56
        %v690 = vpop.permute.xlu0 %689
        %691 = vrot.lane.b32.xlu0 %v348, 56
        %v692 = vpop.permute.xlu0 %691
        %693 = vrot.lane.b32.xlu0 %v362, 56
        %v694 = vpop.permute.xlu0 %693
        %695 = vrot.lane.b32.xlu0 %v376, 56
        %v696 = vpop.permute.xlu0 %695
        %697 = vrot.lane.b32.xlu0 %v390, 56
        %v698 = vpop.permute.xlu0 %697
        %699 = vrot.lane.b32.xlu0 %v404, 56
        %v700 = vpop.permute.xlu0 %699
        %701 = vrot.lane.b32.xlu0 %v569, 56
        %v702 = vpop.permute.xlu0 %701
        %703 = vrot.lane.b32.xlu0 %v688, 56
        %v704 = vpop.permute.xlu0 %703
        %vm713 = vcmask 519616
        %714 = vst.msk [vmem:[#allocation2] sm:$0xf] %vm713, %v690
        %715 = vst.msk [vmem:[#allocation2 + $0x8] sm:$0xf] %vm713, %v692
        %716 = vst.msk [vmem:[#allocation2 + $0x10] sm:$0xf] %vm713, %v694
        %717 = vst.msk [vmem:[#allocation2 + $0x18] sm:$0xf] %vm713, %v696
        %718 = vst.msk [vmem:[#allocation2 + $0x20] sm:$0xf] %vm713, %v698
        %719 = vst.msk [vmem:[#allocation2 + $0x28] sm:$0xf] %vm713, %v700
        %720 = vst.msk [vmem:[#allocation2 + $0x30] sm:$0xf] %vm713, %v702
        %721 = vst.msk [vmem:[#allocation2 + $0x38] sm:$0xf] %vm713, %v704
        %v723 = vrot.slane %v207, 5
        %v724 = vrot.slane %v723, 4
        %v725 = vrot.slane %v208, 5
        %v726 = vsel %vm456, %v724, %v725
        %727 = vrot.lane.b32.xlu0 %v468, 64
        %v728 = vpop.permute.xlu0 %727
        %729 = vrot.lane.b32.xlu0 %v472, 64
        %v730 = vpop.permute.xlu0 %729
        %731 = vrot.lane.b32.xlu0 %v476, 64
        %v732 = vpop.permute.xlu0 %731
        %733 = vrot.lane.b32.xlu0 %v480, 64
        %v734 = vpop.permute.xlu0 %733
        %735 = vrot.lane.b32.xlu0 %v484, 64
        %v736 = vpop.permute.xlu0 %735
        %737 = vrot.lane.b32.xlu0 %v488, 64
        %v738 = vpop.permute.xlu0 %737
        %739 = vrot.lane.b32.xlu0 %v607, 64
        %v740 = vpop.permute.xlu0 %739
        %741 = vrot.lane.b32.xlu0 %v726, 64
        %v742 = vpop.permute.xlu0 %741
        %vm751 = vcmask 585216
        %752 = vst.msk [vmem:[#allocation2] sm:$0xf] %vm751, %v728
        %753 = vst.msk [vmem:[#allocation2 + $0x8] sm:$0xf] %vm751, %v730
        %754 = vst.msk [vmem:[#allocation2 + $0x10] sm:$0xf] %vm751, %v732
        %755 = vst.msk [vmem:[#allocation2 + $0x18] sm:$0xf] %vm751, %v734
        %756 = vst.msk [vmem:[#allocation2 + $0x20] sm:$0xf] %vm751, %v736
        %757 = vst.msk [vmem:[#allocation2 + $0x28] sm:$0xf] %vm751, %v738
        %758 = vst.msk [vmem:[#allocation2 + $0x30] sm:$0xf] %vm751, %v740
        %759 = vst.msk [vmem:[#allocation2 + $0x38] sm:$0xf] %vm751, %v742
        %768 = vrot.lane.b32.xlu0 %v213, 72
        %v769 = vpop.permute.xlu0 %768
        %770 = vrot.lane.b32.xlu0 %v215, 72
        %v771 = vpop.permute.xlu0 %770
        %772 = vrot.lane.b32.xlu0 %v217, 72
        %v773 = vpop.permute.xlu0 %772
        %774 = vrot.lane.b32.xlu0 %v219, 72
        %v775 = vpop.permute.xlu0 %774
        %776 = vrot.lane.b32.xlu0 %v221, 72
        %v777 = vpop.permute.xlu0 %776
        %778 = vrot.lane.b32.xlu0 %v223, 72
        %v779 = vpop.permute.xlu0 %778
        %780 = vrot.lane.b32.xlu0 %v225, 72
        %v781 = vpop.permute.xlu0 %780
        %782 = vrot.lane.b32.xlu0 %v227, 72
        %v783 = vpop.permute.xlu0 %782
        %vm792 = vcmask 650816
        %793 = vst.msk [vmem:[#allocation2] sm:$0xf] %vm792, %v769
        %794 = vst.msk [vmem:[#allocation2 + $0x8] sm:$0xf] %vm792, %v771
        %795 = vst.msk [vmem:[#allocation2 + $0x10] sm:$0xf] %vm792, %v773
        %796 = vst.msk [vmem:[#allocation2 + $0x18] sm:$0xf] %vm792, %v775
        %797 = vst.msk [vmem:[#allocation2 + $0x20] sm:$0xf] %vm792, %v777
        %798 = vst.msk [vmem:[#allocation2 + $0x28] sm:$0xf] %vm792, %v779
        %799 = vst.msk [vmem:[#allocation2 + $0x30] sm:$0xf] %vm792, %v781
        %800 = vst.msk [vmem:[#allocation2 + $0x38] sm:$0xf] %vm792, %v783
        %v802 = vshrl.u32 %v213, 16
        %v804 = vrot.slane %v802, 4
        %v805 = vshll.u32 %v213, 16
        %v807 = vrot.slane %v805, 5
        %v808 = vor.u32 %v804, %v807
        %v809 = vrot.slane %v808, 4
        %v811 = vshll.u32 %v214, 16
        %v813 = vrot.slane %v811, 5
        %v814 = vsel %vm292, %v809, %v813
        %v816 = vshrl.u32 %v215, 16
        %v818 = vrot.slane %v816, 4
        %v819 = vshll.u32 %v215, 16
        %v821 = vrot.slane %v819, 5
        %v822 = vor.u32 %v818, %v821
        %v823 = vrot.slane %v822, 4
        %v825 = vshll.u32 %v216, 16
        %v827 = vrot.slane %v825, 5
        %v828 = vsel %vm292, %v823, %v827
        %v830 = vshrl.u32 %v217, 16
        %v832 = vrot.slane %v830, 4
        %v833 = vshll.u32 %v217, 16
        %v835 = vrot.slane %v833, 5
        %v836 = vor.u32 %v832, %v835
        %v837 = vrot.slane %v836, 4
        %v839 = vshll.u32 %v218, 16
        %v841 = vrot.slane %v839, 5
        %v842 = vsel %vm292, %v837, %v841
        %v844 = vshrl.u32 %v219, 16
        %v846 = vrot.slane %v844, 4
        %v847 = vshll.u32 %v219, 16
        %v849 = vrot.slane %v847, 5
        %v850 = vor.u32 %v846, %v849
        %v851 = vrot.slane %v850, 4
        %v853 = vshll.u32 %v220, 16
        %v855 = vrot.slane %v853, 5
        %v856 = vsel %vm292, %v851, %v855
        %v858 = vshrl.u32 %v221, 16
        %v860 = vrot.slane %v858, 4
        %v861 = vshll.u32 %v221, 16
        %v863 = vrot.slane %v861, 5
        %v864 = vor.u32 %v860, %v863
        %v865 = vrot.slane %v864, 4
        %v867 = vshll.u32 %v222, 16
        %v869 = vrot.slane %v867, 5
        %v870 = vsel %vm292, %v865, %v869
        %v872 = vshrl.u32 %v223, 16
        %v874 = vrot.slane %v872, 4
        %v875 = vshll.u32 %v223, 16
        %v877 = vrot.slane %v875, 5
        %v878 = vor.u32 %v874, %v877
        %v879 = vrot.slane %v878, 4
        %v881 = vshll.u32 %v224, 16
        %v883 = vrot.slane %v881, 5
        %v884 = vsel %vm292, %v879, %v883
        %v886 = vshrl.u32 %v225, 16
        %v888 = vrot.slane %v886, 4
        %v889 = vshll.u32 %v225, 16
        %v891 = vrot.slane %v889, 5
        %v892 = vor.u32 %v888, %v891
        %v893 = vrot.slane %v892, 4
        %v895 = vshll.u32 %v226, 16
        %v897 = vrot.slane %v895, 5
        %v898 = vsel %vm292, %v893, %v897
        %v900 = vshrl.u32 %v227, 16
        %v902 = vrot.slane %v900, 4
        %v903 = vshll.u32 %v227, 16
        %v905 = vrot.slane %v903, 5
        %v906 = vor.u32 %v902, %v905
        %v907 = vrot.slane %v906, 4
        %v909 = vshll.u32 %v228, 16
        %v911 = vrot.slane %v909, 5
        %v912 = vsel %vm292, %v907, %v911
        %913 = vrot.lane.b32.xlu0 %v814, 80
        %v914 = vpop.permute.xlu0 %913
        %915 = vrot.lane.b32.xlu0 %v828, 80
        %v916 = vpop.permute.xlu0 %915
        %917 = vrot.lane.b32.xlu0 %v842, 80
        %v918 = vpop.permute.xlu0 %917
        %919 = vrot.lane.b32.xlu0 %v856, 80
        %v920 = vpop.permute.xlu0 %919
        %921 = vrot.lane.b32.xlu0 %v870, 80
        %v922 = vpop.permute.xlu0 %921
        %923 = vrot.lane.b32.xlu0 %v884, 80
        %v924 = vpop.permute.xlu0 %923
        %925 = vrot.lane.b32.xlu0 %v898, 80
        %v926 = vpop.permute.xlu0 %925
        %927 = vrot.lane.b32.xlu0 %v912, 80
        %v928 = vpop.permute.xlu0 %927
        %vm937 = vcmask 716416
        %938 = vst.msk [vmem:[#allocation2] sm:$0xf] %vm937, %v914
        %939 = vst.msk [vmem:[#allocation2 + $0x8] sm:$0xf] %vm937, %v916
        %940 = vst.msk [vmem:[#allocation2 + $0x10] sm:$0xf] %vm937, %v918
        %941 = vst.msk [vmem:[#allocation2 + $0x18] sm:$0xf] %vm937, %v920
        %942 = vst.msk [vmem:[#allocation2 + $0x20] sm:$0xf] %vm937, %v922
        %943 = vst.msk [vmem:[#allocation2 + $0x28] sm:$0xf] %vm937, %v924
        %944 = vst.msk [vmem:[#allocation2 + $0x30] sm:$0xf] %vm937, %v926
        %945 = vst.msk [vmem:[#allocation2 + $0x38] sm:$0xf] %vm937, %v928
        %v954 = vrot.slane %v213, 5
        %v955 = vrot.slane %v954, 4
        %v956 = vrot.slane %v214, 5
        %v957 = vsel %vm456, %v955, %v956
        %v958 = vrot.slane %v215, 5
        %v959 = vrot.slane %v958, 4
        %v960 = vrot.slane %v216, 5
        %v961 = vsel %vm456, %v959, %v960
        %v962 = vrot.slane %v217, 5
        %v963 = vrot.slane %v962, 4
        %v964 = vrot.slane %v218, 5
        %v965 = vsel %vm456, %v963, %v964
        %v966 = vrot.slane %v219, 5
        %v967 = vrot.slane %v966, 4
        %v968 = vrot.slane %v220, 5
        %v969 = vsel %vm456, %v967, %v968
        %v970 = vrot.slane %v221, 5
        %v971 = vrot.slane %v970, 4
        %v972 = vrot.slane %v222, 5
        %v973 = vsel %vm456, %v971, %v972
        %v974 = vrot.slane %v223, 5
        %v975 = vrot.slane %v974, 4
        %v976 = vrot.slane %v224, 5
        %v977 = vsel %vm456, %v975, %v976
        %v978 = vrot.slane %v225, 5
        %v979 = vrot.slane %v978, 4
        %v980 = vrot.slane %v226, 5
        %v981 = vsel %vm456, %v979, %v980
        %v982 = vrot.slane %v227, 5
        %v983 = vrot.slane %v982, 4
        %v984 = vrot.slane %v228, 5
        %v985 = vsel %vm456, %v983, %v984
        %986 = vrot.lane.b32.xlu0 %v957, 88
        %v987 = vpop.permute.xlu0 %986
        %988 = vrot.lane.b32.xlu0 %v961, 88
        %v989 = vpop.permute.xlu0 %988
        %990 = vrot.lane.b32.xlu0 %v965, 88
        %v991 = vpop.permute.xlu0 %990
        %992 = vrot.lane.b32.xlu0 %v969, 88
        %v993 = vpop.permute.xlu0 %992
        %994 = vrot.lane.b32.xlu0 %v973, 88
        %v995 = vpop.permute.xlu0 %994
        %996 = vrot.lane.b32.xlu0 %v977, 88
        %v997 = vpop.permute.xlu0 %996
        %998 = vrot.lane.b32.xlu0 %v981, 88
        %v999 = vpop.permute.xlu0 %998
        %1000 = vrot.lane.b32.xlu0 %v985, 88
        %v1001 = vpop.permute.xlu0 %1000
        %vm1010 = vcmask 782016
        %1011 = vst.msk [vmem:[#allocation2] sm:$0xf] %vm1010, %v987
        %1012 = vst.msk [vmem:[#allocation2 + $0x8] sm:$0xf] %vm1010, %v989
        %1013 = vst.msk [vmem:[#allocation2 + $0x10] sm:$0xf] %vm1010, %v991
        %1014 = vst.msk [vmem:[#allocation2 + $0x18] sm:$0xf] %vm1010, %v993
        %1015 = vst.msk [vmem:[#allocation2 + $0x20] sm:$0xf] %vm1010, %v995
        %1016 = vst.msk [vmem:[#allocation2 + $0x28] sm:$0xf] %vm1010, %v997
        %1017 = vst.msk [vmem:[#allocation2 + $0x30] sm:$0xf] %vm1010, %v999
        %1018 = vst.msk [vmem:[#allocation2 + $0x38] sm:$0xf] %vm1010, %v1001
        %1020 = vrot.lane.b32.xlu0 %v215, 96
        %v1021 = vpop.permute.xlu0 %1020
        %1022 = vrot.lane.b32.xlu0 %v217, 96
        %v1023 = vpop.permute.xlu0 %1022
        %1024 = vrot.lane.b32.xlu0 %v219, 96
        %v1025 = vpop.permute.xlu0 %1024
        %1026 = vrot.lane.b32.xlu0 %v221, 96
        %v1027 = vpop.permute.xlu0 %1026
        %1028 = vrot.lane.b32.xlu0 %v223, 96
        %v1029 = vpop.permute.xlu0 %1028
        %1030 = vrot.lane.b32.xlu0 %v225, 96
        %v1031 = vpop.permute.xlu0 %1030
        %1032 = vrot.lane.b32.xlu0 %v227, 96
        %v1033 = vpop.permute.xlu0 %1032
        %1034 = vrot.lane.b32.xlu0 %v229, 96
        %v1035 = vpop.permute.xlu0 %1034
        %vm1044 = vcmask 847616
        %1045 = vst.msk [vmem:[#allocation2] sm:$0xf] %vm1044, %v1021
        %1046 = vst.msk [vmem:[#allocation2 + $0x8] sm:$0xf] %vm1044, %v1023
        %1047 = vst.msk [vmem:[#allocation2 + $0x10] sm:$0xf] %vm1044, %v1025
        %1048 = vst.msk [vmem:[#allocation2 + $0x18] sm:$0xf] %vm1044, %v1027
        %1049 = vst.msk [vmem:[#allocation2 + $0x20] sm:$0xf] %vm1044, %v1029
        %1050 = vst.msk [vmem:[#allocation2 + $0x28] sm:$0xf] %vm1044, %v1031
        %1051 = vst.msk [vmem:[#allocation2 + $0x30] sm:$0xf] %vm1044, %v1033
        %1052 = vst.msk [vmem:[#allocation2 + $0x38] sm:$0xf] %vm1044, %v1035
        %v1054 = vshrl.u32 %v229, 16
        %v1056 = vrot.slane %v1054, 4
        %v1057 = vshll.u32 %v229, 16
        %v1059 = vrot.slane %v1057, 5
        %v1060 = vor.u32 %v1056, %v1059
        %v1061 = vrot.slane %v1060, 4
        %v1063 = vshll.u32 %v230, 16
        %v1065 = vrot.slane %v1063, 5
        %v1066 = vsel %vm292, %v1061, %v1065
        %1067 = vrot.lane.b32.xlu0 %v828, 104
        %v1068 = vpop.permute.xlu0 %1067
        %1069 = vrot.lane.b32.xlu0 %v842, 104
        %v1070 = vpop.permute.xlu0 %1069
        %1071 = vrot.lane.b32.xlu0 %v856, 104
        %v1072 = vpop.permute.xlu0 %1071
        %1073 = vrot.lane.b32.xlu0 %v870, 104
        %v1074 = vpop.permute.xlu0 %1073
        %1075 = vrot.lane.b32.xlu0 %v884, 104
        %v1076 = vpop.permute.xlu0 %1075
        %1077 = vrot.lane.b32.xlu0 %v898, 104
        %v1078 = vpop.permute.xlu0 %1077
        %1079 = vrot.lane.b32.xlu0 %v912, 104
        %v1080 = vpop.permute.xlu0 %1079
        %1081 = vrot.lane.b32.xlu0 %v1066, 104
        %v1082 = vpop.permute.xlu0 %1081
        %vm1091 = vcmask 913216
        %1092 = vst.msk [vmem:[#allocation2] sm:$0xf] %vm1091, %v1068
        %1093 = vst.msk [vmem:[#allocation2 + $0x8] sm:$0xf] %vm1091, %v1070
        %1094 = vst.msk [vmem:[#allocation2 + $0x10] sm:$0xf] %vm1091, %v1072
        %1095 = vst.msk [vmem:[#allocation2 + $0x18] sm:$0xf] %vm1091, %v1074
        %1096 = vst.msk [vmem:[#allocation2 + $0x20] sm:$0xf] %vm1091, %v1076
        %1097 = vst.msk [vmem:[#allocation2 + $0x28] sm:$0xf] %vm1091, %v1078
        %1098 = vst.msk [vmem:[#allocation2 + $0x30] sm:$0xf] %vm1091, %v1080
        %1099 = vst.msk [vmem:[#allocation2 + $0x38] sm:$0xf] %vm1091, %v1082
        %v1101 = vrot.slane %v229, 5
        %v1102 = vrot.slane %v1101, 4
        %v1103 = vrot.slane %v230, 5
        %v1104 = vsel %vm456, %v1102, %v1103
        %1105 = vrot.lane.b32.xlu0 %v961, 112
        %v1106 = vpop.permute.xlu0 %1105
        %1107 = vrot.lane.b32.xlu0 %v965, 112
        %v1108 = vpop.permute.xlu0 %1107
        %1109 = vrot.lane.b32.xlu0 %v969, 112
        %v1110 = vpop.permute.xlu0 %1109
        %1111 = vrot.lane.b32.xlu0 %v973, 112
        %v1112 = vpop.permute.xlu0 %1111
        %1113 = vrot.lane.b32.xlu0 %v977, 112
        %v1114 = vpop.permute.xlu0 %1113
        %1115 = vrot.lane.b32.xlu0 %v981, 112
        %v1116 = vpop.permute.xlu0 %1115
        %1117 = vrot.lane.b32.xlu0 %v985, 112
        %v1118 = vpop.permute.xlu0 %1117
        %1119 = vrot.lane.b32.xlu0 %v1104, 112
        %v1120 = vpop.permute.xlu0 %1119
        %vm1129 = vcmask 978816
        %1130 = vst.msk [vmem:[#allocation2] sm:$0xf] %vm1129, %v1106
        %1131 = vst.msk [vmem:[#allocation2 + $0x8] sm:$0xf] %vm1129, %v1108
        %1132 = vst.msk [vmem:[#allocation2 + $0x10] sm:$0xf] %vm1129, %v1110
        %1133 = vst.msk [vmem:[#allocation2 + $0x18] sm:$0xf] %vm1129, %v1112
        %1134 = vst.msk [vmem:[#allocation2 + $0x20] sm:$0xf] %vm1129, %v1114
        %1135 = vst.msk [vmem:[#allocation2 + $0x28] sm:$0xf] %vm1129, %v1116
        %1136 = vst.msk [vmem:[#allocation2 + $0x30] sm:$0xf] %vm1129, %v1118
        %1137 = vst.msk [vmem:[#allocation2 + $0x38] sm:$0xf] %vm1129, %v1120
        %1139 = vrot.lane.b32.xlu0 %v217, 120
        %v1140 = vpop.permute.xlu0 %1139
        %1141 = vrot.lane.b32.xlu0 %v219, 120
        %v1142 = vpop.permute.xlu0 %1141
        %1143 = vrot.lane.b32.xlu0 %v221, 120
        %v1144 = vpop.permute.xlu0 %1143
        %1145 = vrot.lane.b32.xlu0 %v223, 120
        %v1146 = vpop.permute.xlu0 %1145
        %1147 = vrot.lane.b32.xlu0 %v225, 120
        %v1148 = vpop.permute.xlu0 %1147
        %1149 = vrot.lane.b32.xlu0 %v227, 120
        %v1150 = vpop.permute.xlu0 %1149
        %1151 = vrot.lane.b32.xlu0 %v229, 120
        %v1152 = vpop.permute.xlu0 %1151
        %1153 = vrot.lane.b32.xlu0 %v231, 120
        %v1154 = vpop.permute.xlu0 %1153
        %vm1163 = vcmask 1044416
        %1164 = vst.msk [vmem:[#allocation2] sm:$0xf] %vm1163, %v1140
        %1165 = vst.msk [vmem:[#allocation2 + $0x8] sm:$0xf] %vm1163, %v1142
        %1166 = vst.msk [vmem:[#allocation2 + $0x10] sm:$0xf] %vm1163, %v1144
        %1167 = vst.msk [vmem:[#allocation2 + $0x18] sm:$0xf] %vm1163, %v1146
        %1168 = vst.msk [vmem:[#allocation2 + $0x20] sm:$0xf] %vm1163, %v1148
        %1169 = vst.msk [vmem:[#allocation2 + $0x28] sm:$0xf] %vm1163, %v1150
        %1170 = vst.msk [vmem:[#allocation2 + $0x30] sm:$0xf] %vm1163, %v1152
        %1171 = vst.msk [vmem:[#allocation2 + $0x38] sm:$0xf] %vm1163, %v1154
        %v1173 = vshrl.u32 %v231, 16
        %v1175 = vrot.slane %v1173, 4
        %v1176 = vshll.u32 %v231, 16
        %v1178 = vrot.slane %v1176, 5
        %v1179 = vor.u32 %v1175, %v1178
        %v1180 = vrot.slane %v1179, 4
        %v1182 = vshll.u32 %v232, 16
        %v1184 = vrot.slane %v1182, 5
        %v1185 = vsel %vm292, %v1180, %v1184
        %1194 = vst.msk [vmem:[#allocation2 + $0x4] sm:$0xf] %vm281, %v842
        %1195 = vst.msk [vmem:[#allocation2 + $0xc] sm:$0xf] %vm281, %v856
        %1196 = vst.msk [vmem:[#allocation2 + $0x14] sm:$0xf] %vm281, %v870
        %1197 = vst.msk [vmem:[#allocation2 + $0x1c] sm:$0xf] %vm281, %v884
        %1198 = vst.msk [vmem:[#allocation2 + $0x24] sm:$0xf] %vm281, %v898
        %1199 = vst.msk [vmem:[#allocation2 + $0x2c] sm:$0xf] %vm281, %v912
        %1200 = vst.msk [vmem:[#allocation2 + $0x34] sm:$0xf] %vm281, %v1066
        %1201 = vst.msk [vmem:[#allocation2 + $0x3c] sm:$0xf] %vm281, %v1185
        %v1203 = vrot.slane %v231, 5
        %v1204 = vrot.slane %v1203, 4
        %v1205 = vrot.slane %v232, 5
        %v1206 = vsel %vm456, %v1204, %v1205
        %1207 = vrot.lane.b32.xlu0 %v965, 8
        %v1208 = vpop.permute.xlu0 %1207
        %1209 = vrot.lane.b32.xlu0 %v969, 8
        %v1210 = vpop.permute.xlu0 %1209
        %1211 = vrot.lane.b32.xlu0 %v973, 8
        %v1212 = vpop.permute.xlu0 %1211
        %1213 = vrot.lane.b32.xlu0 %v977, 8
        %v1214 = vpop.permute.xlu0 %1213
        %1215 = vrot.lane.b32.xlu0 %v981, 8
        %v1216 = vpop.permute.xlu0 %1215
        %1217 = vrot.lane.b32.xlu0 %v985, 8
        %v1218 = vpop.permute.xlu0 %1217
        %1219 = vrot.lane.b32.xlu0 %v1104, 8
        %v1220 = vpop.permute.xlu0 %1219
        %1221 = vrot.lane.b32.xlu0 %v1206, 8
        %v1222 = vpop.permute.xlu0 %1221
        %1231 = vst.msk [vmem:[#allocation2 + $0x4] sm:$0xf] %vm429, %v1208
        %1232 = vst.msk [vmem:[#allocation2 + $0xc] sm:$0xf] %vm429, %v1210
        %1233 = vst.msk [vmem:[#allocation2 + $0x14] sm:$0xf] %vm429, %v1212
        %1234 = vst.msk [vmem:[#allocation2 + $0x1c] sm:$0xf] %vm429, %v1214
        %1235 = vst.msk [vmem:[#allocation2 + $0x24] sm:$0xf] %vm429, %v1216
        %1236 = vst.msk [vmem:[#allocation2 + $0x2c] sm:$0xf] %vm429, %v1218
        %1237 = vst.msk [vmem:[#allocation2 + $0x34] sm:$0xf] %vm429, %v1220
        %1238 = vst.msk [vmem:[#allocation2 + $0x3c] sm:$0xf] %vm429, %v1222
        %1247 = vrot.lane.b32.xlu0 %v237, 16
        %v1248 = vpop.permute.xlu0 %1247
        %1249 = vrot.lane.b32.xlu0 %v239, 16
        %v1250 = vpop.permute.xlu0 %1249
        %1251 = vrot.lane.b32.xlu0 %v241, 16
        %v1252 = vpop.permute.xlu0 %1251
        %1253 = vrot.lane.b32.xlu0 %v243, 16
        %v1254 = vpop.permute.xlu0 %1253
        %1255 = vrot.lane.b32.xlu0 %v245, 16
        %v1256 = vpop.permute.xlu0 %1255
        %1257 = vrot.lane.b32.xlu0 %v247, 16
        %v1258 = vpop.permute.xlu0 %1257
        %1259 = vrot.lane.b32.xlu0 %v249, 16
        %v1260 = vpop.permute.xlu0 %1259
        %1261 = vrot.lane.b32.xlu0 %v251, 16
        %v1262 = vpop.permute.xlu0 %1261
        %1271 = vst.msk [vmem:[#allocation2 + $0x4] sm:$0xf] %vm513, %v1248
        %1272 = vst.msk [vmem:[#allocation2 + $0xc] sm:$0xf] %vm513, %v1250
        %1273 = vst.msk [vmem:[#allocation2 + $0x14] sm:$0xf] %vm513, %v1252
        %1274 = vst.msk [vmem:[#allocation2 + $0x1c] sm:$0xf] %vm513, %v1254
        %1275 = vst.msk [vmem:[#allocation2 + $0x24] sm:$0xf] %vm513, %v1256
        %1276 = vst.msk [vmem:[#allocation2 + $0x2c] sm:$0xf] %vm513, %v1258
        %1277 = vst.msk [vmem:[#allocation2 + $0x34] sm:$0xf] %vm513, %v1260
        %1278 = vst.msk [vmem:[#allocation2 + $0x3c] sm:$0xf] %vm513, %v1262
        %v1280 = vshrl.u32 %v237, 16
        %v1282 = vrot.slane %v1280, 4
        %v1283 = vshll.u32 %v237, 16
        %v1285 = vrot.slane %v1283, 5
        %v1286 = vor.u32 %v1282, %v1285
        %v1287 = vrot.slane %v1286, 4
        %v1289 = vshll.u32 %v238, 16
        %v1291 = vrot.slane %v1289, 5
        %v1292 = vsel %vm292, %v1287, %v1291
        %v1294 = vshrl.u32 %v239, 16
        %v1296 = vrot.slane %v1294, 4
        %v1297 = vshll.u32 %v239, 16
        %v1299 = vrot.slane %v1297, 5
        %v1300 = vor.u32 %v1296, %v1299
        %v1301 = vrot.slane %v1300, 4
        %v1303 = vshll.u32 %v240, 16
        %v1305 = vrot.slane %v1303, 5
        %v1306 = vsel %vm292, %v1301, %v1305
        %v1308 = vshrl.u32 %v241, 16
        %v1310 = vrot.slane %v1308, 4
        %v1311 = vshll.u32 %v241, 16
        %v1313 = vrot.slane %v1311, 5
        %v1314 = vor.u32 %v1310, %v1313
        %v1315 = vrot.slane %v1314, 4
        %v1317 = vshll.u32 %v242, 16
        %v1319 = vrot.slane %v1317, 5
        %v1320 = vsel %vm292, %v1315, %v1319
        %v1322 = vshrl.u32 %v243, 16
        %v1324 = vrot.slane %v1322, 4
        %v1325 = vshll.u32 %v243, 16
        %v1327 = vrot.slane %v1325, 5
        %v1328 = vor.u32 %v1324, %v1327
        %v1329 = vrot.slane %v1328, 4
        %v1331 = vshll.u32 %v244, 16
        %v1333 = vrot.slane %v1331, 5
        %v1334 = vsel %vm292, %v1329, %v1333
        %v1336 = vshrl.u32 %v245, 16
        %v1338 = vrot.slane %v1336, 4
        %v1339 = vshll.u32 %v245, 16
        %v1341 = vrot.slane %v1339, 5
        %v1342 = vor.u32 %v1338, %v1341
        %v1343 = vrot.slane %v1342, 4
        %v1345 = vshll.u32 %v246, 16
        %v1347 = vrot.slane %v1345, 5
        %v1348 = vsel %vm292, %v1343, %v1347
        %v1350 = vshrl.u32 %v247, 16
        %v1352 = vrot.slane %v1350, 4
        %v1353 = vshll.u32 %v247, 16
        %v1355 = vrot.slane %v1353, 5
        %v1356 = vor.u32 %v1352, %v1355
        %v1357 = vrot.slane %v1356, 4
        %v1359 = vshll.u32 %v248, 16
        %v1361 = vrot.slane %v1359, 5
        %v1362 = vsel %vm292, %v1357, %v1361
        %v1364 = vshrl.u32 %v249, 16
        %v1366 = vrot.slane %v1364, 4
        %v1367 = vshll.u32 %v249, 16
        %v1369 = vrot.slane %v1367, 5
        %v1370 = vor.u32 %v1366, %v1369
        %v1371 = vrot.slane %v1370, 4
        %v1373 = vshll.u32 %v250, 16
        %v1375 = vrot.slane %v1373, 5
        %v1376 = vsel %vm292, %v1371, %v1375
        %v1378 = vshrl.u32 %v251, 16
        %v1380 = vrot.slane %v1378, 4
        %v1381 = vshll.u32 %v251, 16
        %v1383 = vrot.slane %v1381, 5
        %v1384 = vor.u32 %v1380, %v1383
        %v1385 = vrot.slane %v1384, 4
        %v1387 = vshll.u32 %v252, 16
        %v1389 = vrot.slane %v1387, 5
        %v1390 = vsel %vm292, %v1385, %v1389
        %1391 = vrot.lane.b32.xlu0 %v1292, 24
        %v1392 = vpop.permute.xlu0 %1391
        %1393 = vrot.lane.b32.xlu0 %v1306, 24
        %v1394 = vpop.permute.xlu0 %1393
        %1395 = vrot.lane.b32.xlu0 %v1320, 24
        %v1396 = vpop.permute.xlu0 %1395
        %1397 = vrot.lane.b32.xlu0 %v1334, 24
        %v1398 = vpop.permute.xlu0 %1397
        %1399 = vrot.lane.b32.xlu0 %v1348, 24
        %v1400 = vpop.permute.xlu0 %1399
        %1401 = vrot.lane.b32.xlu0 %v1362, 24
        %v1402 = vpop.permute.xlu0 %1401
        %1403 = vrot.lane.b32.xlu0 %v1376, 24
        %v1404 = vpop.permute.xlu0 %1403
        %1405 = vrot.lane.b32.xlu0 %v1390, 24
        %v1406 = vpop.permute.xlu0 %1405
        %1415 = vst.msk [vmem:[#allocation2 + $0x4] sm:$0xf] %vm547, %v1392
        %1416 = vst.msk [vmem:[#allocation2 + $0xc] sm:$0xf] %vm547, %v1394
        %1417 = vst.msk [vmem:[#allocation2 + $0x14] sm:$0xf] %vm547, %v1396
        %1418 = vst.msk [vmem:[#allocation2 + $0x1c] sm:$0xf] %vm547, %v1398
        %1419 = vst.msk [vmem:[#allocation2 + $0x24] sm:$0xf] %vm547, %v1400
        %1420 = vst.msk [vmem:[#allocation2 + $0x2c] sm:$0xf] %vm547, %v1402
        %1421 = vst.msk [vmem:[#allocation2 + $0x34] sm:$0xf] %vm547, %v1404
        %1422 = vst.msk [vmem:[#allocation2 + $0x3c] sm:$0xf] %vm547, %v1406
        %v1431 = vrot.slane %v237, 5
        %v1432 = vrot.slane %v1431, 4
        %v1433 = vrot.slane %v238, 5
        %v1434 = vsel %vm456, %v1432, %v1433
        %v1435 = vrot.slane %v239, 5
        %v1436 = vrot.slane %v1435, 4
        %v1437 = vrot.slane %v240, 5
        %v1438 = vsel %vm456, %v1436, %v1437
        %v1439 = vrot.slane %v241, 5
        %v1440 = vrot.slane %v1439, 4
        %v1441 = vrot.slane %v242, 5
        %v1442 = vsel %vm456, %v1440, %v1441
        %v1443 = vrot.slane %v243, 5
        %v1444 = vrot.slane %v1443, 4
        %v1445 = vrot.slane %v244, 5
        %v1446 = vsel %vm456, %v1444, %v1445
        %v1447 = vrot.slane %v245, 5
        %v1448 = vrot.slane %v1447, 4
        %v1449 = vrot.slane %v246, 5
        %v1450 = vsel %vm456, %v1448, %v1449
        %v1451 = vrot.slane %v247, 5
        %v1452 = vrot.slane %v1451, 4
        %v1453 = vrot.slane %v248, 5
        %v1454 = vsel %vm456, %v1452, %v1453
        %v1455 = vrot.slane %v249, 5
        %v1456 = vrot.slane %v1455, 4
        %v1457 = vrot.slane %v250, 5
        %v1458 = vsel %vm456, %v1456, %v1457
        %v1459 = vrot.slane %v251, 5
        %v1460 = vrot.slane %v1459, 4
        %v1461 = vrot.slane %v252, 5
        %v1462 = vsel %vm456, %v1460, %v1461
        %1463 = vrot.lane.b32.xlu0 %v1434, 32
        %v1464 = vpop.permute.xlu0 %1463
        %1465 = vrot.lane.b32.xlu0 %v1438, 32
        %v1466 = vpop.permute.xlu0 %1465
        %1467 = vrot.lane.b32.xlu0 %v1442, 32
        %v1468 = vpop.permute.xlu0 %1467
        %1469 = vrot.lane.b32.xlu0 %v1446, 32
        %v1470 = vpop.permute.xlu0 %1469
        %1471 = vrot.lane.b32.xlu0 %v1450, 32
        %v1472 = vpop.permute.xlu0 %1471
        %1473 = vrot.lane.b32.xlu0 %v1454, 32
        %v1474 = vpop.permute.xlu0 %1473
        %1475 = vrot.lane.b32.xlu0 %v1458, 32
        %v1476 = vpop.permute.xlu0 %1475
        %1477 = vrot.lane.b32.xlu0 %v1462, 32
        %v1478 = vpop.permute.xlu0 %1477
        %1487 = vst.msk [vmem:[#allocation2 + $0x4] sm:$0xf] %vm594, %v1464
        %1488 = vst.msk [vmem:[#allocation2 + $0xc] sm:$0xf] %vm594, %v1466
        %1489 = vst.msk [vmem:[#allocation2 + $0x14] sm:$0xf] %vm594, %v1468
        %1490 = vst.msk [vmem:[#allocation2 + $0x1c] sm:$0xf] %vm594, %v1470
        %1491 = vst.msk [vmem:[#allocation2 + $0x24] sm:$0xf] %vm594, %v1472
        %1492 = vst.msk [vmem:[#allocation2 + $0x2c] sm:$0xf] %vm594, %v1474
        %1493 = vst.msk [vmem:[#allocation2 + $0x34] sm:$0xf] %vm594, %v1476
        %1494 = vst.msk [vmem:[#allocation2 + $0x3c] sm:$0xf] %vm594, %v1478
        %1496 = vrot.lane.b32.xlu0 %v239, 40
        %v1497 = vpop.permute.xlu0 %1496
        %1498 = vrot.lane.b32.xlu0 %v241, 40
        %v1499 = vpop.permute.xlu0 %1498
        %1500 = vrot.lane.b32.xlu0 %v243, 40
        %v1501 = vpop.permute.xlu0 %1500
        %1502 = vrot.lane.b32.xlu0 %v245, 40
        %v1503 = vpop.permute.xlu0 %1502
        %1504 = vrot.lane.b32.xlu0 %v247, 40
        %v1505 = vpop.permute.xlu0 %1504
        %1506 = vrot.lane.b32.xlu0 %v249, 40
        %v1507 = vpop.permute.xlu0 %1506
        %1508 = vrot.lane.b32.xlu0 %v251, 40
        %v1509 = vpop.permute.xlu0 %1508
        %1510 = vrot.lane.b32.xlu0 %v253, 40
        %v1511 = vpop.permute.xlu0 %1510
        %1520 = vst.msk [vmem:[#allocation2 + $0x4] sm:$0xf] %vm632, %v1497
        %1521 = vst.msk [vmem:[#allocation2 + $0xc] sm:$0xf] %vm632, %v1499
        %1522 = vst.msk [vmem:[#allocation2 + $0x14] sm:$0xf] %vm632, %v1501
        %1523 = vst.msk [vmem:[#allocation2 + $0x1c] sm:$0xf] %vm632, %v1503
        %1524 = vst.msk [vmem:[#allocation2 + $0x24] sm:$0xf] %vm632, %v1505
        %1525 = vst.msk [vmem:[#allocation2 + $0x2c] sm:$0xf] %vm632, %v1507
        %1526 = vst.msk [vmem:[#allocation2 + $0x34] sm:$0xf] %vm632, %v1509
        %1527 = vst.msk [vmem:[#allocation2 + $0x3c] sm:$0xf] %vm632, %v1511
        %v1529 = vshrl.u32 %v253, 16
        %v1531 = vrot.slane %v1529, 4
        %v1532 = vshll.u32 %v253, 16
        %v1534 = vrot.slane %v1532, 5
        %v1535 = vor.u32 %v1531, %v1534
        %v1536 = vrot.slane %v1535, 4
        %v1538 = vshll.u32 %v254, 16
        %v1540 = vrot.slane %v1538, 5
        %v1541 = vsel %vm292, %v1536, %v1540
        %1542 = vrot.lane.b32.xlu0 %v1306, 48
        %v1543 = vpop.permute.xlu0 %1542
        %1544 = vrot.lane.b32.xlu0 %v1320, 48
        %v1545 = vpop.permute.xlu0 %1544
        %1546 = vrot.lane.b32.xlu0 %v1334, 48
        %v1547 = vpop.permute.xlu0 %1546
        %1548 = vrot.lane.b32.xlu0 %v1348, 48
        %v1549 = vpop.permute.xlu0 %1548
        %1550 = vrot.lane.b32.xlu0 %v1362, 48
        %v1551 = vpop.permute.xlu0 %1550
        %1552 = vrot.lane.b32.xlu0 %v1376, 48
        %v1553 = vpop.permute.xlu0 %1552
        %1554 = vrot.lane.b32.xlu0 %v1390, 48
        %v1555 = vpop.permute.xlu0 %1554
        %1556 = vrot.lane.b32.xlu0 %v1541, 48
        %v1557 = vpop.permute.xlu0 %1556
        %1566 = vst.msk [vmem:[#allocation2 + $0x4] sm:$0xf] %vm666, %v1543
        %1567 = vst.msk [vmem:[#allocation2 + $0xc] sm:$0xf] %vm666, %v1545
        %1568 = vst.msk [vmem:[#allocation2 + $0x14] sm:$0xf] %vm666, %v1547
        %1569 = vst.msk [vmem:[#allocation2 + $0x1c] sm:$0xf] %vm666, %v1549
        %1570 = vst.msk [vmem:[#allocation2 + $0x24] sm:$0xf] %vm666, %v1551
        %1571 = vst.msk [vmem:[#allocation2 + $0x2c] sm:$0xf] %vm666, %v1553
        %1572 = vst.msk [vmem:[#allocation2 + $0x34] sm:$0xf] %vm666, %v1555
        %1573 = vst.msk [vmem:[#allocation2 + $0x3c] sm:$0xf] %vm666, %v1557
        %v1575 = vrot.slane %v253, 5
        %v1576 = vrot.slane %v1575, 4
        %v1577 = vrot.slane %v254, 5
        %v1578 = vsel %vm456, %v1576, %v1577
        %1579 = vrot.lane.b32.xlu0 %v1438, 56
        %v1580 = vpop.permute.xlu0 %1579
        %1581 = vrot.lane.b32.xlu0 %v1442, 56
        %v1582 = vpop.permute.xlu0 %1581
        %1583 = vrot.lane.b32.xlu0 %v1446, 56
        %v1584 = vpop.permute.xlu0 %1583
        %1585 = vrot.lane.b32.xlu0 %v1450, 56
        %v1586 = vpop.permute.xlu0 %1585
        %1587 = vrot.lane.b32.xlu0 %v1454, 56
        %v1588 = vpop.permute.xlu0 %1587
        %1589 = vrot.lane.b32.xlu0 %v1458, 56
        %v1590 = vpop.permute.xlu0 %1589
        %1591 = vrot.lane.b32.xlu0 %v1462, 56
        %v1592 = vpop.permute.xlu0 %1591
        %1593 = vrot.lane.b32.xlu0 %v1578, 56
        %v1594 = vpop.permute.xlu0 %1593
        %1603 = vst.msk [vmem:[#allocation2 + $0x4] sm:$0xf] %vm713, %v1580
        %1604 = vst.msk [vmem:[#allocation2 + $0xc] sm:$0xf] %vm713, %v1582
        %1605 = vst.msk [vmem:[#allocation2 + $0x14] sm:$0xf] %vm713, %v1584
        %1606 = vst.msk [vmem:[#allocation2 + $0x1c] sm:$0xf] %vm713, %v1586
        %1607 = vst.msk [vmem:[#allocation2 + $0x24] sm:$0xf] %vm713, %v1588
        %1608 = vst.msk [vmem:[#allocation2 + $0x2c] sm:$0xf] %vm713, %v1590
        %1609 = vst.msk [vmem:[#allocation2 + $0x34] sm:$0xf] %vm713, %v1592
        %1610 = vst.msk [vmem:[#allocation2 + $0x3c] sm:$0xf] %vm713, %v1594
        %1612 = vrot.lane.b32.xlu0 %v241, 64
        %v1613 = vpop.permute.xlu0 %1612
        %1614 = vrot.lane.b32.xlu0 %v243, 64
        %v1615 = vpop.permute.xlu0 %1614
        %1616 = vrot.lane.b32.xlu0 %v245, 64
        %v1617 = vpop.permute.xlu0 %1616
        %1618 = vrot.lane.b32.xlu0 %v247, 64
        %v1619 = vpop.permute.xlu0 %1618
        %1620 = vrot.lane.b32.xlu0 %v249, 64
        %v1621 = vpop.permute.xlu0 %1620
        %1622 = vrot.lane.b32.xlu0 %v251, 64
        %v1623 = vpop.permute.xlu0 %1622
        %1624 = vrot.lane.b32.xlu0 %v253, 64
        %v1625 = vpop.permute.xlu0 %1624
        %1626 = vrot.lane.b32.xlu0 %v255, 64
        %v1627 = vpop.permute.xlu0 %1626
        %1636 = vst.msk [vmem:[#allocation2 + $0x4] sm:$0xf] %vm751, %v1613
        %1637 = vst.msk [vmem:[#allocation2 + $0xc] sm:$0xf] %vm751, %v1615
        %1638 = vst.msk [vmem:[#allocation2 + $0x14] sm:$0xf] %vm751, %v1617
        %1639 = vst.msk [vmem:[#allocation2 + $0x1c] sm:$0xf] %vm751, %v1619
        %1640 = vst.msk [vmem:[#allocation2 + $0x24] sm:$0xf] %vm751, %v1621
        %1641 = vst.msk [vmem:[#allocation2 + $0x2c] sm:$0xf] %vm751, %v1623
        %1642 = vst.msk [vmem:[#allocation2 + $0x34] sm:$0xf] %vm751, %v1625
        %1643 = vst.msk [vmem:[#allocation2 + $0x3c] sm:$0xf] %vm751, %v1627
        %v1645 = vshrl.u32 %v255, 16
        %v1647 = vrot.slane %v1645, 4
        %v1648 = vshll.u32 %v255, 16
        %v1650 = vrot.slane %v1648, 5
        %v1651 = vor.u32 %v1647, %v1650
        %v1652 = vrot.slane %v1651, 4
        %v1654 = vshll.u32 %v256, 16
        %v1656 = vrot.slane %v1654, 5
        %v1657 = vsel %vm292, %v1652, %v1656
        %1666 = vrot.lane.b32.xlu0 %v1320, 72
        %v1667 = vpop.permute.xlu0 %1666
        %1668 = vrot.lane.b32.xlu0 %v1334, 72
        %v1669 = vpop.permute.xlu0 %1668
        %1670 = vrot.lane.b32.xlu0 %v1348, 72
        %v1671 = vpop.permute.xlu0 %1670
        %1672 = vrot.lane.b32.xlu0 %v1362, 72
        %v1673 = vpop.permute.xlu0 %1672
        %1674 = vrot.lane.b32.xlu0 %v1376, 72
        %v1675 = vpop.permute.xlu0 %1674
        %1676 = vrot.lane.b32.xlu0 %v1390, 72
        %v1677 = vpop.permute.xlu0 %1676
        %1678 = vrot.lane.b32.xlu0 %v1541, 72
        %v1679 = vpop.permute.xlu0 %1678
        %1680 = vrot.lane.b32.xlu0 %v1657, 72
        %v1681 = vpop.permute.xlu0 %1680
        %1690 = vst.msk [vmem:[#allocation2 + $0x4] sm:$0xf] %vm792, %v1667
        %1691 = vst.msk [vmem:[#allocation2 + $0xc] sm:$0xf] %vm792, %v1669
        %1692 = vst.msk [vmem:[#allocation2 + $0x14] sm:$0xf] %vm792, %v1671
        %1693 = vst.msk [vmem:[#allocation2 + $0x1c] sm:$0xf] %vm792, %v1673
        %1694 = vst.msk [vmem:[#allocation2 + $0x24] sm:$0xf] %vm792, %v1675
        %1695 = vst.msk [vmem:[#allocation2 + $0x2c] sm:$0xf] %vm792, %v1677
        %1696 = vst.msk [vmem:[#allocation2 + $0x34] sm:$0xf] %vm792, %v1679
        %1697 = vst.msk [vmem:[#allocation2 + $0x3c] sm:$0xf] %vm792, %v1681
        %v1699 = vrot.slane %v255, 5
        %v1700 = vrot.slane %v1699, 4
        %v1701 = vrot.slane %v256, 5
        %v1702 = vsel %vm456, %v1700, %v1701
        %1703 = vrot.lane.b32.xlu0 %v1442, 80
        %v1704 = vpop.permute.xlu0 %1703
        %1705 = vrot.lane.b32.xlu0 %v1446, 80
        %v1706 = vpop.permute.xlu0 %1705
        %1707 = vrot.lane.b32.xlu0 %v1450, 80
        %v1708 = vpop.permute.xlu0 %1707
        %1709 = vrot.lane.b32.xlu0 %v1454, 80
        %v1710 = vpop.permute.xlu0 %1709
        %1711 = vrot.lane.b32.xlu0 %v1458, 80
        %v1712 = vpop.permute.xlu0 %1711
        %1713 = vrot.lane.b32.xlu0 %v1462, 80
        %v1714 = vpop.permute.xlu0 %1713
        %1715 = vrot.lane.b32.xlu0 %v1578, 80
        %v1716 = vpop.permute.xlu0 %1715
        %1717 = vrot.lane.b32.xlu0 %v1702, 80
        %v1718 = vpop.permute.xlu0 %1717
        %1727 = vst.msk [vmem:[#allocation2 + $0x4] sm:$0xf] %vm937, %v1704
        %1728 = vst.msk [vmem:[#allocation2 + $0xc] sm:$0xf] %vm937, %v1706
        %1729 = vst.msk [vmem:[#allocation2 + $0x14] sm:$0xf] %vm937, %v1708
        %1730 = vst.msk [vmem:[#allocation2 + $0x1c] sm:$0xf] %vm937, %v1710
        %1731 = vst.msk [vmem:[#allocation2 + $0x24] sm:$0xf] %vm937, %v1712
        %1732 = vst.msk [vmem:[#allocation2 + $0x2c] sm:$0xf] %vm937, %v1714
        %1733 = vst.msk [vmem:[#allocation2 + $0x34] sm:$0xf] %vm937, %v1716
        %1734 = vst.msk [vmem:[#allocation2 + $0x3c] sm:$0xf] %vm937, %v1718
        %1735 = vst.msk [vmem:[#allocation2 + $0x40] sm:$0xf] %vm281, %v213
        %1736 = vst.msk [vmem:[#allocation2 + $0x48] sm:$0xf] %vm281, %v215
        %1737 = vst.msk [vmem:[#allocation2 + $0x50] sm:$0xf] %vm281, %v217
        %1738 = vst.msk [vmem:[#allocation2 + $0x58] sm:$0xf] %vm281, %v219
        %1739 = vst.msk [vmem:[#allocation2 + $0x60] sm:$0xf] %vm281, %v221
        %1740 = vst.msk [vmem:[#allocation2 + $0x68] sm:$0xf] %vm281, %v223
        %1741 = vst.msk [vmem:[#allocation2 + $0x70] sm:$0xf] %vm281, %v225
        %1742 = vst.msk [vmem:[#allocation2 + $0x78] sm:$0xf] %vm281, %v227
        %1743 = vrot.lane.b32.xlu0 %v814, 8
        %v1744 = vpop.permute.xlu0 %1743
        %1745 = vrot.lane.b32.xlu0 %v828, 8
        %v1746 = vpop.permute.xlu0 %1745
        %1747 = vrot.lane.b32.xlu0 %v842, 8
        %v1748 = vpop.permute.xlu0 %1747
        %1749 = vrot.lane.b32.xlu0 %v856, 8
        %v1750 = vpop.permute.xlu0 %1749
        %1751 = vrot.lane.b32.xlu0 %v870, 8
        %v1752 = vpop.permute.xlu0 %1751
        %1753 = vrot.lane.b32.xlu0 %v884, 8
        %v1754 = vpop.permute.xlu0 %1753
        %1755 = vrot.lane.b32.xlu0 %v898, 8
        %v1756 = vpop.permute.xlu0 %1755
        %1757 = vrot.lane.b32.xlu0 %v912, 8
        %v1758 = vpop.permute.xlu0 %1757
        %1767 = vst.msk [vmem:[#allocation2 + $0x40] sm:$0xf] %vm429, %v1744
        %1768 = vst.msk [vmem:[#allocation2 + $0x48] sm:$0xf] %vm429, %v1746
        %1769 = vst.msk [vmem:[#allocation2 + $0x50] sm:$0xf] %vm429, %v1748
        %1770 = vst.msk [vmem:[#allocation2 + $0x58] sm:$0xf] %vm429, %v1750
        %1771 = vst.msk [vmem:[#allocation2 + $0x60] sm:$0xf] %vm429, %v1752
        %1772 = vst.msk [vmem:[#allocation2 + $0x68] sm:$0xf] %vm429, %v1754
        %1773 = vst.msk [vmem:[#allocation2 + $0x70] sm:$0xf] %vm429, %v1756
        %1774 = vst.msk [vmem:[#allocation2 + $0x78] sm:$0xf] %vm429, %v1758
        %1775 = vrot.lane.b32.xlu0 %v957, 16
        %v1776 = vpop.permute.xlu0 %1775
        %1777 = vrot.lane.b32.xlu0 %v961, 16
        %v1778 = vpop.permute.xlu0 %1777
        %1779 = vrot.lane.b32.xlu0 %v965, 16
        %v1780 = vpop.permute.xlu0 %1779
        %1781 = vrot.lane.b32.xlu0 %v969, 16
        %v1782 = vpop.permute.xlu0 %1781
        %1783 = vrot.lane.b32.xlu0 %v973, 16
        %v1784 = vpop.permute.xlu0 %1783
        %1785 = vrot.lane.b32.xlu0 %v977, 16
        %v1786 = vpop.permute.xlu0 %1785
        %1787 = vrot.lane.b32.xlu0 %v981, 16
        %v1788 = vpop.permute.xlu0 %1787
        %1789 = vrot.lane.b32.xlu0 %v985, 16
        %v1790 = vpop.permute.xlu0 %1789
        %1799 = vst.msk [vmem:[#allocation2 + $0x40] sm:$0xf] %vm513, %v1776
        %1800 = vst.msk [vmem:[#allocation2 + $0x48] sm:$0xf] %vm513, %v1778
        %1801 = vst.msk [vmem:[#allocation2 + $0x50] sm:$0xf] %vm513, %v1780
        %1802 = vst.msk [vmem:[#allocation2 + $0x58] sm:$0xf] %vm513, %v1782
        %1803 = vst.msk [vmem:[#allocation2 + $0x60] sm:$0xf] %vm513, %v1784
        %1804 = vst.msk [vmem:[#allocation2 + $0x68] sm:$0xf] %vm513, %v1786
        %1805 = vst.msk [vmem:[#allocation2 + $0x70] sm:$0xf] %vm513, %v1788
        %1806 = vst.msk [vmem:[#allocation2 + $0x78] sm:$0xf] %vm513, %v1790
        %1807 = vrot.lane.b32.xlu0 %v215, 24
        %v1808 = vpop.permute.xlu0 %1807
        %1809 = vrot.lane.b32.xlu0 %v217, 24
        %v1810 = vpop.permute.xlu0 %1809
        %1811 = vrot.lane.b32.xlu0 %v219, 24
        %v1812 = vpop.permute.xlu0 %1811
        %1813 = vrot.lane.b32.xlu0 %v221, 24
        %v1814 = vpop.permute.xlu0 %1813
        %1815 = vrot.lane.b32.xlu0 %v223, 24
        %v1816 = vpop.permute.xlu0 %1815
        %1817 = vrot.lane.b32.xlu0 %v225, 24
        %v1818 = vpop.permute.xlu0 %1817
        %1819 = vrot.lane.b32.xlu0 %v227, 24
        %v1820 = vpop.permute.xlu0 %1819
        %1821 = vrot.lane.b32.xlu0 %v229, 24
        %v1822 = vpop.permute.xlu0 %1821
        %1831 = vst.msk [vmem:[#allocation2 + $0x40] sm:$0xf] %vm547, %v1808
        %1832 = vst.msk [vmem:[#allocation2 + $0x48] sm:$0xf] %vm547, %v1810
        %1833 = vst.msk [vmem:[#allocation2 + $0x50] sm:$0xf] %vm547, %v1812
        %1834 = vst.msk [vmem:[#allocation2 + $0x58] sm:$0xf] %vm547, %v1814
        %1835 = vst.msk [vmem:[#allocation2 + $0x60] sm:$0xf] %vm547, %v1816
        %1836 = vst.msk [vmem:[#allocation2 + $0x68] sm:$0xf] %vm547, %v1818
        %1837 = vst.msk [vmem:[#allocation2 + $0x70] sm:$0xf] %vm547, %v1820
        %1838 = vst.msk [vmem:[#allocation2 + $0x78] sm:$0xf] %vm547, %v1822
        %1839 = vrot.lane.b32.xlu0 %v828, 32
        %v1840 = vpop.permute.xlu0 %1839
        %1841 = vrot.lane.b32.xlu0 %v842, 32
        %v1842 = vpop.permute.xlu0 %1841
        %1843 = vrot.lane.b32.xlu0 %v856, 32
        %v1844 = vpop.permute.xlu0 %1843
        %1845 = vrot.lane.b32.xlu0 %v870, 32
        %v1846 = vpop.permute.xlu0 %1845
        %1847 = vrot.lane.b32.xlu0 %v884, 32
        %v1848 = vpop.permute.xlu0 %1847
        %1849 = vrot.lane.b32.xlu0 %v898, 32
        %v1850 = vpop.permute.xlu0 %1849
        %1851 = vrot.lane.b32.xlu0 %v912, 32
        %v1852 = vpop.permute.xlu0 %1851
        %1853 = vrot.lane.b32.xlu0 %v1066, 32
        %v1854 = vpop.permute.xlu0 %1853
        %1863 = vst.msk [vmem:[#allocation2 + $0x40] sm:$0xf] %vm594, %v1840
        %1864 = vst.msk [vmem:[#allocation2 + $0x48] sm:$0xf] %vm594, %v1842
        %1865 = vst.msk [vmem:[#allocation2 + $0x50] sm:$0xf] %vm594, %v1844
        %1866 = vst.msk [vmem:[#allocation2 + $0x58] sm:$0xf] %vm594, %v1846
        %1867 = vst.msk [vmem:[#allocation2 + $0x60] sm:$0xf] %vm594, %v1848
        %1868 = vst.msk [vmem:[#allocation2 + $0x68] sm:$0xf] %vm594, %v1850
        %1869 = vst.msk [vmem:[#allocation2 + $0x70] sm:$0xf] %vm594, %v1852
        %1870 = vst.msk [vmem:[#allocation2 + $0x78] sm:$0xf] %vm594, %v1854
        %1871 = vrot.lane.b32.xlu0 %v961, 40
        %v1872 = vpop.permute.xlu0 %1871
        %1873 = vrot.lane.b32.xlu0 %v965, 40
        %v1874 = vpop.permute.xlu0 %1873
        %1875 = vrot.lane.b32.xlu0 %v969, 40
        %v1876 = vpop.permute.xlu0 %1875
        %1877 = vrot.lane.b32.xlu0 %v973, 40
        %v1878 = vpop.permute.xlu0 %1877
        %1879 = vrot.lane.b32.xlu0 %v977, 40
        %v1880 = vpop.permute.xlu0 %1879
        %1881 = vrot.lane.b32.xlu0 %v981, 40
        %v1882 = vpop.permute.xlu0 %1881
        %1883 = vrot.lane.b32.xlu0 %v985, 40
        %v1884 = vpop.permute.xlu0 %1883
        %1885 = vrot.lane.b32.xlu0 %v1104, 40
        %v1886 = vpop.permute.xlu0 %1885
        %1895 = vst.msk [vmem:[#allocation2 + $0x40] sm:$0xf] %vm632, %v1872
        %1896 = vst.msk [vmem:[#allocation2 + $0x48] sm:$0xf] %vm632, %v1874
        %1897 = vst.msk [vmem:[#allocation2 + $0x50] sm:$0xf] %vm632, %v1876
        %1898 = vst.msk [vmem:[#allocation2 + $0x58] sm:$0xf] %vm632, %v1878
        %1899 = vst.msk [vmem:[#allocation2 + $0x60] sm:$0xf] %vm632, %v1880
        %1900 = vst.msk [vmem:[#allocation2 + $0x68] sm:$0xf] %vm632, %v1882
        %1901 = vst.msk [vmem:[#allocation2 + $0x70] sm:$0xf] %vm632, %v1884
        %1902 = vst.msk [vmem:[#allocation2 + $0x78] sm:$0xf] %vm632, %v1886
        %1903 = vrot.lane.b32.xlu0 %v217, 48
        %v1904 = vpop.permute.xlu0 %1903
        %1905 = vrot.lane.b32.xlu0 %v219, 48
        %v1906 = vpop.permute.xlu0 %1905
        %1907 = vrot.lane.b32.xlu0 %v221, 48
        %v1908 = vpop.permute.xlu0 %1907
        %1909 = vrot.lane.b32.xlu0 %v223, 48
        %v1910 = vpop.permute.xlu0 %1909
        %1911 = vrot.lane.b32.xlu0 %v225, 48
        %v1912 = vpop.permute.xlu0 %1911
        %1913 = vrot.lane.b32.xlu0 %v227, 48
        %v1914 = vpop.permute.xlu0 %1913
        %1915 = vrot.lane.b32.xlu0 %v229, 48
        %v1916 = vpop.permute.xlu0 %1915
        %1917 = vrot.lane.b32.xlu0 %v231, 48
        %v1918 = vpop.permute.xlu0 %1917
        %1927 = vst.msk [vmem:[#allocation2 + $0x40] sm:$0xf] %vm666, %v1904
        %1928 = vst.msk [vmem:[#allocation2 + $0x48] sm:$0xf] %vm666, %v1906
        %1929 = vst.msk [vmem:[#allocation2 + $0x50] sm:$0xf] %vm666, %v1908
        %1930 = vst.msk [vmem:[#allocation2 + $0x58] sm:$0xf] %vm666, %v1910
        %1931 = vst.msk [vmem:[#allocation2 + $0x60] sm:$0xf] %vm666, %v1912
        %1932 = vst.msk [vmem:[#allocation2 + $0x68] sm:$0xf] %vm666, %v1914
        %1933 = vst.msk [vmem:[#allocation2 + $0x70] sm:$0xf] %vm666, %v1916
        %1934 = vst.msk [vmem:[#allocation2 + $0x78] sm:$0xf] %vm666, %v1918
        %1935 = vrot.lane.b32.xlu0 %v842, 56
        %v1936 = vpop.permute.xlu0 %1935
        %1937 = vrot.lane.b32.xlu0 %v856, 56
        %v1938 = vpop.permute.xlu0 %1937
        %1939 = vrot.lane.b32.xlu0 %v870, 56
        %v1940 = vpop.permute.xlu0 %1939
        %1941 = vrot.lane.b32.xlu0 %v884, 56
        %v1942 = vpop.permute.xlu0 %1941
        %1943 = vrot.lane.b32.xlu0 %v898, 56
        %v1944 = vpop.permute.xlu0 %1943
        %1945 = vrot.lane.b32.xlu0 %v912, 56
        %v1946 = vpop.permute.xlu0 %1945
        %1947 = vrot.lane.b32.xlu0 %v1066, 56
        %v1948 = vpop.permute.xlu0 %1947
        %1949 = vrot.lane.b32.xlu0 %v1185, 56
        %v1950 = vpop.permute.xlu0 %1949
        %1959 = vst.msk [vmem:[#allocation2 + $0x40] sm:$0xf] %vm713, %v1936
        %1960 = vst.msk [vmem:[#allocation2 + $0x48] sm:$0xf] %vm713, %v1938
        %1961 = vst.msk [vmem:[#allocation2 + $0x50] sm:$0xf] %vm713, %v1940
        %1962 = vst.msk [vmem:[#allocation2 + $0x58] sm:$0xf] %vm713, %v1942
        %1963 = vst.msk [vmem:[#allocation2 + $0x60] sm:$0xf] %vm713, %v1944
        %1964 = vst.msk [vmem:[#allocation2 + $0x68] sm:$0xf] %vm713, %v1946
        %1965 = vst.msk [vmem:[#allocation2 + $0x70] sm:$0xf] %vm713, %v1948
        %1966 = vst.msk [vmem:[#allocation2 + $0x78] sm:$0xf] %vm713, %v1950
        %1967 = vrot.lane.b32.xlu0 %v965, 64
        %v1968 = vpop.permute.xlu0 %1967
        %1969 = vrot.lane.b32.xlu0 %v969, 64
        %v1970 = vpop.permute.xlu0 %1969
        %1971 = vrot.lane.b32.xlu0 %v973, 64
        %v1972 = vpop.permute.xlu0 %1971
        %1973 = vrot.lane.b32.xlu0 %v977, 64
        %v1974 = vpop.permute.xlu0 %1973
        %1975 = vrot.lane.b32.xlu0 %v981, 64
        %v1976 = vpop.permute.xlu0 %1975
        %1977 = vrot.lane.b32.xlu0 %v985, 64
        %v1978 = vpop.permute.xlu0 %1977
        %1979 = vrot.lane.b32.xlu0 %v1104, 64
        %v1980 = vpop.permute.xlu0 %1979
        %1981 = vrot.lane.b32.xlu0 %v1206, 64
        %v1982 = vpop.permute.xlu0 %1981
        %1991 = vst.msk [vmem:[#allocation2 + $0x40] sm:$0xf] %vm751, %v1968
        %1992 = vst.msk [vmem:[#allocation2 + $0x48] sm:$0xf] %vm751, %v1970
        %1993 = vst.msk [vmem:[#allocation2 + $0x50] sm:$0xf] %vm751, %v1972
        %1994 = vst.msk [vmem:[#allocation2 + $0x58] sm:$0xf] %vm751, %v1974
        %1995 = vst.msk [vmem:[#allocation2 + $0x60] sm:$0xf] %vm751, %v1976
        %1996 = vst.msk [vmem:[#allocation2 + $0x68] sm:$0xf] %vm751, %v1978
        %1997 = vst.msk [vmem:[#allocation2 + $0x70] sm:$0xf] %vm751, %v1980
        %1998 = vst.msk [vmem:[#allocation2 + $0x78] sm:$0xf] %vm751, %v1982
        %1999 = vrot.lane.b32.xlu0 %v237, 72
        %v2000 = vpop.permute.xlu0 %1999
        %2001 = vrot.lane.b32.xlu0 %v239, 72
        %v2002 = vpop.permute.xlu0 %2001
        %2003 = vrot.lane.b32.xlu0 %v241, 72
        %v2004 = vpop.permute.xlu0 %2003
        %2005 = vrot.lane.b32.xlu0 %v243, 72
        %v2006 = vpop.permute.xlu0 %2005
        %2007 = vrot.lane.b32.xlu0 %v245, 72
        %v2008 = vpop.permute.xlu0 %2007
        %2009 = vrot.lane.b32.xlu0 %v247, 72
        %v2010 = vpop.permute.xlu0 %2009
        %2011 = vrot.lane.b32.xlu0 %v249, 72
        %v2012 = vpop.permute.xlu0 %2011
        %2013 = vrot.lane.b32.xlu0 %v251, 72
        %v2014 = vpop.permute.xlu0 %2013
        %2023 = vst.msk [vmem:[#allocation2 + $0x40] sm:$0xf] %vm792, %v2000
        %2024 = vst.msk [vmem:[#allocation2 + $0x48] sm:$0xf] %vm792, %v2002
        %2025 = vst.msk [vmem:[#allocation2 + $0x50] sm:$0xf] %vm792, %v2004
        %2026 = vst.msk [vmem:[#allocation2 + $0x58] sm:$0xf] %vm792, %v2006
        %2027 = vst.msk [vmem:[#allocation2 + $0x60] sm:$0xf] %vm792, %v2008
        %2028 = vst.msk [vmem:[#allocation2 + $0x68] sm:$0xf] %vm792, %v2010
        %2029 = vst.msk [vmem:[#allocation2 + $0x70] sm:$0xf] %vm792, %v2012
        %2030 = vst.msk [vmem:[#allocation2 + $0x78] sm:$0xf] %vm792, %v2014
        %2031 = vrot.lane.b32.xlu0 %v1292, 80
        %v2032 = vpop.permute.xlu0 %2031
        %2033 = vrot.lane.b32.xlu0 %v1306, 80
        %v2034 = vpop.permute.xlu0 %2033
        %2035 = vrot.lane.b32.xlu0 %v1320, 80
        %v2036 = vpop.permute.xlu0 %2035
        %2037 = vrot.lane.b32.xlu0 %v1334, 80
        %v2038 = vpop.permute.xlu0 %2037
        %2039 = vrot.lane.b32.xlu0 %v1348, 80
        %v2040 = vpop.permute.xlu0 %2039
        %2041 = vrot.lane.b32.xlu0 %v1362, 80
        %v2042 = vpop.permute.xlu0 %2041
        %2043 = vrot.lane.b32.xlu0 %v1376, 80
        %v2044 = vpop.permute.xlu0 %2043
        %2045 = vrot.lane.b32.xlu0 %v1390, 80
        %v2046 = vpop.permute.xlu0 %2045
        %2055 = vst.msk [vmem:[#allocation2 + $0x40] sm:$0xf] %vm937, %v2032
        %2056 = vst.msk [vmem:[#allocation2 + $0x48] sm:$0xf] %vm937, %v2034
        %2057 = vst.msk [vmem:[#allocation2 + $0x50] sm:$0xf] %vm937, %v2036
        %2058 = vst.msk [vmem:[#allocation2 + $0x58] sm:$0xf] %vm937, %v2038
        %2059 = vst.msk [vmem:[#allocation2 + $0x60] sm:$0xf] %vm937, %v2040
        %2060 = vst.msk [vmem:[#allocation2 + $0x68] sm:$0xf] %vm937, %v2042
        %2061 = vst.msk [vmem:[#allocation2 + $0x70] sm:$0xf] %vm937, %v2044
        %2062 = vst.msk [vmem:[#allocation2 + $0x78] sm:$0xf] %vm937, %v2046
        %2063 = vrot.lane.b32.xlu0 %v1434, 88
        %v2064 = vpop.permute.xlu0 %2063
        %2065 = vrot.lane.b32.xlu0 %v1438, 88
        %v2066 = vpop.permute.xlu0 %2065
        %2067 = vrot.lane.b32.xlu0 %v1442, 88
        %v2068 = vpop.permute.xlu0 %2067
        %2069 = vrot.lane.b32.xlu0 %v1446, 88
        %v2070 = vpop.permute.xlu0 %2069
        %2071 = vrot.lane.b32.xlu0 %v1450, 88
        %v2072 = vpop.permute.xlu0 %2071
        %2073 = vrot.lane.b32.xlu0 %v1454, 88
        %v2074 = vpop.permute.xlu0 %2073
        %2075 = vrot.lane.b32.xlu0 %v1458, 88
        %v2076 = vpop.permute.xlu0 %2075
        %2077 = vrot.lane.b32.xlu0 %v1462, 88
        %v2078 = vpop.permute.xlu0 %2077
        %2087 = vst.msk [vmem:[#allocation2 + $0x40] sm:$0xf] %vm1010, %v2064
        %2088 = vst.msk [vmem:[#allocation2 + $0x48] sm:$0xf] %vm1010, %v2066
        %2089 = vst.msk [vmem:[#allocation2 + $0x50] sm:$0xf] %vm1010, %v2068
        %2090 = vst.msk [vmem:[#allocation2 + $0x58] sm:$0xf] %vm1010, %v2070
        %2091 = vst.msk [vmem:[#allocation2 + $0x60] sm:$0xf] %vm1010, %v2072
        %2092 = vst.msk [vmem:[#allocation2 + $0x68] sm:$0xf] %vm1010, %v2074
        %2093 = vst.msk [vmem:[#allocation2 + $0x70] sm:$0xf] %vm1010, %v2076
        %2094 = vst.msk [vmem:[#allocation2 + $0x78] sm:$0xf] %vm1010, %v2078
        %2095 = vrot.lane.b32.xlu0 %v239, 96
        %v2096 = vpop.permute.xlu0 %2095
        %2097 = vrot.lane.b32.xlu0 %v241, 96
        %v2098 = vpop.permute.xlu0 %2097
        %2099 = vrot.lane.b32.xlu0 %v243, 96
        %v2100 = vpop.permute.xlu0 %2099
        %2101 = vrot.lane.b32.xlu0 %v245, 96
        %v2102 = vpop.permute.xlu0 %2101
        %2103 = vrot.lane.b32.xlu0 %v247, 96
        %v2104 = vpop.permute.xlu0 %2103
        %2105 = vrot.lane.b32.xlu0 %v249, 96
        %v2106 = vpop.permute.xlu0 %2105
        %2107 = vrot.lane.b32.xlu0 %v251, 96
        %v2108 = vpop.permute.xlu0 %2107
        %2109 = vrot.lane.b32.xlu0 %v253, 96
        %v2110 = vpop.permute.xlu0 %2109
        %2119 = vst.msk [vmem:[#allocation2 + $0x40] sm:$0xf] %vm1044, %v2096
        %2120 = vst.msk [vmem:[#allocation2 + $0x48] sm:$0xf] %vm1044, %v2098
        %2121 = vst.msk [vmem:[#allocation2 + $0x50] sm:$0xf] %vm1044, %v2100
        %2122 = vst.msk [vmem:[#allocation2 + $0x58] sm:$0xf] %vm1044, %v2102
        %2123 = vst.msk [vmem:[#allocation2 + $0x60] sm:$0xf] %vm1044, %v2104
        %2124 = vst.msk [vmem:[#allocation2 + $0x68] sm:$0xf] %vm1044, %v2106
        %2125 = vst.msk [vmem:[#allocation2 + $0x70] sm:$0xf] %vm1044, %v2108
        %2126 = vst.msk [vmem:[#allocation2 + $0x78] sm:$0xf] %vm1044, %v2110
        %2127 = vrot.lane.b32.xlu0 %v1306, 104
        %v2128 = vpop.permute.xlu0 %2127
        %2129 = vrot.lane.b32.xlu0 %v1320, 104
        %v2130 = vpop.permute.xlu0 %2129
        %2131 = vrot.lane.b32.xlu0 %v1334, 104
        %v2132 = vpop.permute.xlu0 %2131
        %2133 = vrot.lane.b32.xlu0 %v1348, 104
        %v2134 = vpop.permute.xlu0 %2133
        %2135 = vrot.lane.b32.xlu0 %v1362, 104
        %v2136 = vpop.permute.xlu0 %2135
        %2137 = vrot.lane.b32.xlu0 %v1376, 104
        %v2138 = vpop.permute.xlu0 %2137
        %2139 = vrot.lane.b32.xlu0 %v1390, 104
        %v2140 = vpop.permute.xlu0 %2139
        %2141 = vrot.lane.b32.xlu0 %v1541, 104
        %v2142 = vpop.permute.xlu0 %2141
        %2151 = vst.msk [vmem:[#allocation2 + $0x40] sm:$0xf] %vm1091, %v2128
        %2152 = vst.msk [vmem:[#allocation2 + $0x48] sm:$0xf] %vm1091, %v2130
        %2153 = vst.msk [vmem:[#allocation2 + $0x50] sm:$0xf] %vm1091, %v2132
        %2154 = vst.msk [vmem:[#allocation2 + $0x58] sm:$0xf] %vm1091, %v2134
        %2155 = vst.msk [vmem:[#allocation2 + $0x60] sm:$0xf] %vm1091, %v2136
        %2156 = vst.msk [vmem:[#allocation2 + $0x68] sm:$0xf] %vm1091, %v2138
        %2157 = vst.msk [vmem:[#allocation2 + $0x70] sm:$0xf] %vm1091, %v2140
        %2158 = vst.msk [vmem:[#allocation2 + $0x78] sm:$0xf] %vm1091, %v2142
        %2159 = vrot.lane.b32.xlu0 %v1438, 112
        %v2160 = vpop.permute.xlu0 %2159
        %2161 = vrot.lane.b32.xlu0 %v1442, 112
        %v2162 = vpop.permute.xlu0 %2161
        %2163 = vrot.lane.b32.xlu0 %v1446, 112
        %v2164 = vpop.permute.xlu0 %2163
        %2165 = vrot.lane.b32.xlu0 %v1450, 112
        %v2166 = vpop.permute.xlu0 %2165
        %2167 = vrot.lane.b32.xlu0 %v1454, 112
        %v2168 = vpop.permute.xlu0 %2167
        %2169 = vrot.lane.b32.xlu0 %v1458, 112
        %v2170 = vpop.permute.xlu0 %2169
        %2171 = vrot.lane.b32.xlu0 %v1462, 112
        %v2172 = vpop.permute.xlu0 %2171
        %2173 = vrot.lane.b32.xlu0 %v1578, 112
        %v2174 = vpop.permute.xlu0 %2173
        %2183 = vst.msk [vmem:[#allocation2 + $0x40] sm:$0xf] %vm1129, %v2160
        %2184 = vst.msk [vmem:[#allocation2 + $0x48] sm:$0xf] %vm1129, %v2162
        %2185 = vst.msk [vmem:[#allocation2 + $0x50] sm:$0xf] %vm1129, %v2164
        %2186 = vst.msk [vmem:[#allocation2 + $0x58] sm:$0xf] %vm1129, %v2166
        %2187 = vst.msk [vmem:[#allocation2 + $0x60] sm:$0xf] %vm1129, %v2168
        %2188 = vst.msk [vmem:[#allocation2 + $0x68] sm:$0xf] %vm1129, %v2170
        %2189 = vst.msk [vmem:[#allocation2 + $0x70] sm:$0xf] %vm1129, %v2172
        %2190 = vst.msk [vmem:[#allocation2 + $0x78] sm:$0xf] %vm1129, %v2174
        %2191 = vrot.lane.b32.xlu0 %v241, 120
        %v2192 = vpop.permute.xlu0 %2191
        %2193 = vrot.lane.b32.xlu0 %v243, 120
        %v2194 = vpop.permute.xlu0 %2193
        %2195 = vrot.lane.b32.xlu0 %v245, 120
        %v2196 = vpop.permute.xlu0 %2195
        %2197 = vrot.lane.b32.xlu0 %v247, 120
        %v2198 = vpop.permute.xlu0 %2197
        %2199 = vrot.lane.b32.xlu0 %v249, 120
        %v2200 = vpop.permute.xlu0 %2199
        %2201 = vrot.lane.b32.xlu0 %v251, 120
        %v2202 = vpop.permute.xlu0 %2201
        %2203 = vrot.lane.b32.xlu0 %v253, 120
        %v2204 = vpop.permute.xlu0 %2203
        %2205 = vrot.lane.b32.xlu0 %v255, 120
        %v2206 = vpop.permute.xlu0 %2205
        %2215 = vst.msk [vmem:[#allocation2 + $0x40] sm:$0xf] %vm1163, %v2192
        %2216 = vst.msk [vmem:[#allocation2 + $0x48] sm:$0xf] %vm1163, %v2194
        %2217 = vst.msk [vmem:[#allocation2 + $0x50] sm:$0xf] %vm1163, %v2196
        %2218 = vst.msk [vmem:[#allocation2 + $0x58] sm:$0xf] %vm1163, %v2198
        %2219 = vst.msk [vmem:[#allocation2 + $0x60] sm:$0xf] %vm1163, %v2200
        %2220 = vst.msk [vmem:[#allocation2 + $0x68] sm:$0xf] %vm1163, %v2202
        %2221 = vst.msk [vmem:[#allocation2 + $0x70] sm:$0xf] %vm1163, %v2204
        %2222 = vst.msk [vmem:[#allocation2 + $0x78] sm:$0xf] %vm1163, %v2206
        %2223 = vst.msk [vmem:[#allocation2 + $0x44] sm:$0xf] %vm281, %v1320
        %2224 = vst.msk [vmem:[#allocation2 + $0x4c] sm:$0xf] %vm281, %v1334
        %2225 = vst.msk [vmem:[#allocation2 + $0x54] sm:$0xf] %vm281, %v1348
        %2226 = vst.msk [vmem:[#allocation2 + $0x5c] sm:$0xf] %vm281, %v1362
        %2227 = vst.msk [vmem:[#allocation2 + $0x64] sm:$0xf] %vm281, %v1376
        %2228 = vst.msk [vmem:[#allocation2 + $0x6c] sm:$0xf] %vm281, %v1390
        %2229 = vst.msk [vmem:[#allocation2 + $0x74] sm:$0xf] %vm281, %v1541
        %2230 = vst.msk [vmem:[#allocation2 + $0x7c] sm:$0xf] %vm281, %v1657
        %2231 = vrot.lane.b32.xlu0 %v1442, 8
        %v2232 = vpop.permute.xlu0 %2231
        %2233 = vrot.lane.b32.xlu0 %v1446, 8
        %v2234 = vpop.permute.xlu0 %2233
        %2235 = vrot.lane.b32.xlu0 %v1450, 8
        %v2236 = vpop.permute.xlu0 %2235
        %2237 = vrot.lane.b32.xlu0 %v1454, 8
        %v2238 = vpop.permute.xlu0 %2237
        %2239 = vrot.lane.b32.xlu0 %v1458, 8
        %v2240 = vpop.permute.xlu0 %2239
        %2241 = vrot.lane.b32.xlu0 %v1462, 8
        %v2242 = vpop.permute.xlu0 %2241
        %2243 = vrot.lane.b32.xlu0 %v1578, 8
        %v2244 = vpop.permute.xlu0 %2243
        %2245 = vrot.lane.b32.xlu0 %v1702, 8
        %v2246 = vpop.permute.xlu0 %2245
        %2255 = vst.msk [vmem:[#allocation2 + $0x44] sm:$0xf] %vm429, %v2232
        %2256 = vst.msk [vmem:[#allocation2 + $0x4c] sm:$0xf] %vm429, %v2234
        %2257 = vst.msk [vmem:[#allocation2 + $0x54] sm:$0xf] %vm429, %v2236
        %2258 = vst.msk [vmem:[#allocation2 + $0x5c] sm:$0xf] %vm429, %v2238
        %2259 = vst.msk [vmem:[#allocation2 + $0x64] sm:$0xf] %vm429, %v2240
        %2260 = vst.msk [vmem:[#allocation2 + $0x6c] sm:$0xf] %vm429, %v2242
        %2261 = vst.msk [vmem:[#allocation2 + $0x74] sm:$0xf] %vm429, %v2244
        %2262 = vst.msk [vmem:[#allocation2 + $0x7c] sm:$0xf] %vm429, %v2246
        %2271 = vrot.lane.b32.xlu0 %v261, 16
        %v2272 = vpop.permute.xlu0 %2271
        %2273 = vrot.lane.b32.xlu0 %v263, 16
        %v2274 = vpop.permute.xlu0 %2273
        %2275 = vrot.lane.b32.xlu0 %v265, 16
        %v2276 = vpop.permute.xlu0 %2275
        %2277 = vrot.lane.b32.xlu0 %v267, 16
        %v2278 = vpop.permute.xlu0 %2277
        %2279 = vrot.lane.b32.xlu0 %v269, 16
        %v2280 = vpop.permute.xlu0 %2279
        %2281 = vrot.lane.b32.xlu0 %v271, 16
        %v2282 = vpop.permute.xlu0 %2281
        %2283 = vrot.lane.b32.xlu0 %v273, 16
        %v2284 = vpop.permute.xlu0 %2283
        %2285 = vrot.lane.b32.xlu0 %v275, 16
        %v2286 = vpop.permute.xlu0 %2285
        %2295 = vst.msk [vmem:[#allocation2 + $0x44] sm:$0xf] %vm513, %v2272
        %2296 = vst.msk [vmem:[#allocation2 + $0x4c] sm:$0xf] %vm513, %v2274
        %2297 = vst.msk [vmem:[#allocation2 + $0x54] sm:$0xf] %vm513, %v2276
        %2298 = vst.msk [vmem:[#allocation2 + $0x5c] sm:$0xf] %vm513, %v2278
        %2299 = vst.msk [vmem:[#allocation2 + $0x64] sm:$0xf] %vm513, %v2280
        %2300 = vst.msk [vmem:[#allocation2 + $0x6c] sm:$0xf] %vm513, %v2282
        %2301 = vst.msk [vmem:[#allocation2 + $0x74] sm:$0xf] %vm513, %v2284
        %2302 = vst.msk [vmem:[#allocation2 + $0x7c] sm:$0xf] %vm513, %v2286
        %v2304 = vshrl.u32 %v261, 16
        %v2306 = vrot.slane %v2304, 4
        %v2307 = vshll.u32 %v261, 16
        %v2309 = vrot.slane %v2307, 5
        %v2310 = vor.u32 %v2306, %v2309
        %v2311 = vrot.slane %v2310, 4
        %v2313 = vshll.u32 %v262, 16
        %v2315 = vrot.slane %v2313, 5
        %v2316 = vsel %vm292, %v2311, %v2315
        %v2318 = vshrl.u32 %v263, 16
        %v2320 = vrot.slane %v2318, 4
        %v2321 = vshll.u32 %v263, 16
        %v2323 = vrot.slane %v2321, 5
        %v2324 = vor.u32 %v2320, %v2323
        %v2325 = vrot.slane %v2324, 4
        %v2327 = vshll.u32 %v264, 16
        %v2329 = vrot.slane %v2327, 5
        %v2330 = vsel %vm292, %v2325, %v2329
        %v2332 = vshrl.u32 %v265, 16
        %v2334 = vrot.slane %v2332, 4
        %v2335 = vshll.u32 %v265, 16
        %v2337 = vrot.slane %v2335, 5
        %v2338 = vor.u32 %v2334, %v2337
        %v2339 = vrot.slane %v2338, 4
        %v2341 = vshll.u32 %v266, 16
        %v2343 = vrot.slane %v2341, 5
        %v2344 = vsel %vm292, %v2339, %v2343
        %v2346 = vshrl.u32 %v267, 16
        %v2348 = vrot.slane %v2346, 4
        %v2349 = vshll.u32 %v267, 16
        %v2351 = vrot.slane %v2349, 5
        %v2352 = vor.u32 %v2348, %v2351
        %v2353 = vrot.slane %v2352, 4
        %v2355 = vshll.u32 %v268, 16
        %v2357 = vrot.slane %v2355, 5
        %v2358 = vsel %vm292, %v2353, %v2357
        %v2360 = vshrl.u32 %v269, 16
        %v2362 = vrot.slane %v2360, 4
        %v2363 = vshll.u32 %v269, 16
        %v2365 = vrot.slane %v2363, 5
        %v2366 = vor.u32 %v2362, %v2365
        %v2367 = vrot.slane %v2366, 4
        %v2369 = vshll.u32 %v270, 16
        %v2371 = vrot.slane %v2369, 5
        %v2372 = vsel %vm292, %v2367, %v2371
        %v2374 = vshrl.u32 %v271, 16
        %v2376 = vrot.slane %v2374, 4
        %v2377 = vshll.u32 %v271, 16
        %v2379 = vrot.slane %v2377, 5
        %v2380 = vor.u32 %v2376, %v2379
        %v2381 = vrot.slane %v2380, 4
        %v2383 = vshll.u32 %v272, 16
        %v2385 = vrot.slane %v2383, 5
        %v2386 = vsel %vm292, %v2381, %v2385
        %v2388 = vshrl.u32 %v273, 16
        %v2390 = vrot.slane %v2388, 4
        %v2391 = vshll.u32 %v273, 16
        %v2393 = vrot.slane %v2391, 5
        %v2394 = vor.u32 %v2390, %v2393
        %v2395 = vrot.slane %v2394, 4
        %v2397 = vshll.u32 %v274, 16
        %v2399 = vrot.slane %v2397, 5
        %v2400 = vsel %vm292, %v2395, %v2399
        %v2402 = vshrl.u32 %v275, 16
        %v2404 = vrot.slane %v2402, 4
        %v2405 = vshll.u32 %v275, 16
        %v2407 = vrot.slane %v2405, 5
        %v2408 = vor.u32 %v2404, %v2407
        %v2409 = vrot.slane %v2408, 4
        %v2411 = vshll.u32 %v276, 16
        %v2413 = vrot.slane %v2411, 5
        %v2414 = vsel %vm292, %v2409, %v2413
        %2415 = vrot.lane.b32.xlu0 %v2316, 24
        %v2416 = vpop.permute.xlu0 %2415
        %2417 = vrot.lane.b32.xlu0 %v2330, 24
        %v2418 = vpop.permute.xlu0 %2417
        %2419 = vrot.lane.b32.xlu0 %v2344, 24
        %v2420 = vpop.permute.xlu0 %2419
        %2421 = vrot.lane.b32.xlu0 %v2358, 24
        %v2422 = vpop.permute.xlu0 %2421
        %2423 = vrot.lane.b32.xlu0 %v2372, 24
        %v2424 = vpop.permute.xlu0 %2423
        %2425 = vrot.lane.b32.xlu0 %v2386, 24
        %v2426 = vpop.permute.xlu0 %2425
        %2427 = vrot.lane.b32.xlu0 %v2400, 24
        %v2428 = vpop.permute.xlu0 %2427
        %2429 = vrot.lane.b32.xlu0 %v2414, 24
        %v2430 = vpop.permute.xlu0 %2429
        %2439 = vst.msk [vmem:[#allocation2 + $0x44] sm:$0xf] %vm547, %v2416
        %2440 = vst.msk [vmem:[#allocation2 + $0x4c] sm:$0xf] %vm547, %v2418
        %2441 = vst.msk [vmem:[#allocation2 + $0x54] sm:$0xf] %vm547, %v2420
        %2442 = vst.msk [vmem:[#allocation2 + $0x5c] sm:$0xf] %vm547, %v2422
        %2443 = vst.msk [vmem:[#allocation2 + $0x64] sm:$0xf] %vm547, %v2424
        %2444 = vst.msk [vmem:[#allocation2 + $0x6c] sm:$0xf] %vm547, %v2426
        %2445 = vst.msk [vmem:[#allocation2 + $0x74] sm:$0xf] %vm547, %v2428
        %2446 = vst.msk [vmem:[#allocation2 + $0x7c] sm:$0xf] %vm547, %v2430
        %v2455 = vrot.slane %v261, 5
        %v2456 = vrot.slane %v2455, 4
        %v2457 = vrot.slane %v262, 5
        %v2458 = vsel %vm456, %v2456, %v2457
        %v2459 = vrot.slane %v263, 5
        %v2460 = vrot.slane %v2459, 4
        %v2461 = vrot.slane %v264, 5
        %v2462 = vsel %vm456, %v2460, %v2461
        %v2463 = vrot.slane %v265, 5
        %v2464 = vrot.slane %v2463, 4
        %v2465 = vrot.slane %v266, 5
        %v2466 = vsel %vm456, %v2464, %v2465
        %v2467 = vrot.slane %v267, 5
        %v2468 = vrot.slane %v2467, 4
        %v2469 = vrot.slane %v268, 5
        %v2470 = vsel %vm456, %v2468, %v2469
        %v2471 = vrot.slane %v269, 5
        %v2472 = vrot.slane %v2471, 4
        %v2473 = vrot.slane %v270, 5
        %v2474 = vsel %vm456, %v2472, %v2473
        %v2475 = vrot.slane %v271, 5
        %v2476 = vrot.slane %v2475, 4
        %v2477 = vrot.slane %v272, 5
        %v2478 = vsel %vm456, %v2476, %v2477
        %v2479 = vrot.slane %v273, 5
        %v2480 = vrot.slane %v2479, 4
        %v2481 = vrot.slane %v274, 5
        %v2482 = vsel %vm456, %v2480, %v2481
        %v2483 = vrot.slane %v275, 5
        %v2484 = vrot.slane %v2483, 4
        %v2485 = vrot.slane %v276, 5
        %v2486 = vsel %vm456, %v2484, %v2485
        %2487 = vrot.lane.b32.xlu0 %v2458, 32
        %v2488 = vpop.permute.xlu0 %2487
        %2489 = vrot.lane.b32.xlu0 %v2462, 32
        %v2490 = vpop.permute.xlu0 %2489
        %2491 = vrot.lane.b32.xlu0 %v2466, 32
        %v2492 = vpop.permute.xlu0 %2491
        %2493 = vrot.lane.b32.xlu0 %v2470, 32
        %v2494 = vpop.permute.xlu0 %2493
        %2495 = vrot.lane.b32.xlu0 %v2474, 32
        %v2496 = vpop.permute.xlu0 %2495
        %2497 = vrot.lane.b32.xlu0 %v2478, 32
        %v2498 = vpop.permute.xlu0 %2497
        %2499 = vrot.lane.b32.xlu0 %v2482, 32
        %v2500 = vpop.permute.xlu0 %2499
        %2501 = vrot.lane.b32.xlu0 %v2486, 32
        %v2502 = vpop.permute.xlu0 %2501
        %2511 = vst.msk [vmem:[#allocation2 + $0x44] sm:$0xf] %vm594, %v2488
        %2512 = vst.msk [vmem:[#allocation2 + $0x4c] sm:$0xf] %vm594, %v2490
        %2513 = vst.msk [vmem:[#allocation2 + $0x54] sm:$0xf] %vm594, %v2492
        %2514 = vst.msk [vmem:[#allocation2 + $0x5c] sm:$0xf] %vm594, %v2494
        %2515 = vst.msk [vmem:[#allocation2 + $0x64] sm:$0xf] %vm594, %v2496
        %2516 = vst.msk [vmem:[#allocation2 + $0x6c] sm:$0xf] %vm594, %v2498
        %2517 = vst.msk [vmem:[#allocation2 + $0x74] sm:$0xf] %vm594, %v2500
        %2518 = vst.msk [vmem:[#allocation2 + $0x7c] sm:$0xf] %vm594, %v2502
        %2520 = vrot.lane.b32.xlu0 %v263, 40
        %v2521 = vpop.permute.xlu0 %2520
        %2522 = vrot.lane.b32.xlu0 %v265, 40
        %v2523 = vpop.permute.xlu0 %2522
        %2524 = vrot.lane.b32.xlu0 %v267, 40
        %v2525 = vpop.permute.xlu0 %2524
        %2526 = vrot.lane.b32.xlu0 %v269, 40
        %v2527 = vpop.permute.xlu0 %2526
        %2528 = vrot.lane.b32.xlu0 %v271, 40
        %v2529 = vpop.permute.xlu0 %2528
        %2530 = vrot.lane.b32.xlu0 %v273, 40
        %v2531 = vpop.permute.xlu0 %2530
        %2532 = vrot.lane.b32.xlu0 %v275, 40
        %v2533 = vpop.permute.xlu0 %2532
        %2534 = vrot.lane.b32.xlu0 %v277, 40
        %v2535 = vpop.permute.xlu0 %2534
        %2544 = vst.msk [vmem:[#allocation2 + $0x44] sm:$0xf] %vm632, %v2521
        %2545 = vst.msk [vmem:[#allocation2 + $0x4c] sm:$0xf] %vm632, %v2523
        %2546 = vst.msk [vmem:[#allocation2 + $0x54] sm:$0xf] %vm632, %v2525
        %2547 = vst.msk [vmem:[#allocation2 + $0x5c] sm:$0xf] %vm632, %v2527
        %2548 = vst.msk [vmem:[#allocation2 + $0x64] sm:$0xf] %vm632, %v2529
        %2549 = vst.msk [vmem:[#allocation2 + $0x6c] sm:$0xf] %vm632, %v2531
        %2550 = vst.msk [vmem:[#allocation2 + $0x74] sm:$0xf] %vm632, %v2533
        %2551 = vst.msk [vmem:[#allocation2 + $0x7c] sm:$0xf] %vm632, %v2535
        %v2553 = vshrl.u32 %v277, 16
        %v2555 = vrot.slane %v2553, 4
        %v2556 = vshll.u32 %v277, 16
        %v2558 = vrot.slane %v2556, 5
        %v2559 = vor.u32 %v2555, %v2558
        %v2560 = vrot.slane %v2559, 4
        %v2562 = vshll.u32 %v278, 16
        %v2564 = vrot.slane %v2562, 5
        %v2565 = vsel %vm292, %v2560, %v2564
        %2566 = vrot.lane.b32.xlu0 %v2330, 48
        %v2567 = vpop.permute.xlu0 %2566
        %2568 = vrot.lane.b32.xlu0 %v2344, 48
        %v2569 = vpop.permute.xlu0 %2568
        %2570 = vrot.lane.b32.xlu0 %v2358, 48
        %v2571 = vpop.permute.xlu0 %2570
        %2572 = vrot.lane.b32.xlu0 %v2372, 48
        %v2573 = vpop.permute.xlu0 %2572
        %2574 = vrot.lane.b32.xlu0 %v2386, 48
        %v2575 = vpop.permute.xlu0 %2574
        %2576 = vrot.lane.b32.xlu0 %v2400, 48
        %v2577 = vpop.permute.xlu0 %2576
        %2578 = vrot.lane.b32.xlu0 %v2414, 48
        %v2579 = vpop.permute.xlu0 %2578
        %2580 = vrot.lane.b32.xlu0 %v2565, 48
        %v2581 = vpop.permute.xlu0 %2580
        %2590 = vst.msk [vmem:[#allocation2 + $0x44] sm:$0xf] %vm666, %v2567
        %2591 = vst.msk [vmem:[#allocation2 + $0x4c] sm:$0xf] %vm666, %v2569
        %2592 = vst.msk [vmem:[#allocation2 + $0x54] sm:$0xf] %vm666, %v2571
        %2593 = vst.msk [vmem:[#allocation2 + $0x5c] sm:$0xf] %vm666, %v2573
        %2594 = vst.msk [vmem:[#allocation2 + $0x64] sm:$0xf] %vm666, %v2575
        %2595 = vst.msk [vmem:[#allocation2 + $0x6c] sm:$0xf] %vm666, %v2577
        %2596 = vst.msk [vmem:[#allocation2 + $0x74] sm:$0xf] %vm666, %v2579
        %2597 = vst.msk [vmem:[#allocation2 + $0x7c] sm:$0xf] %vm666, %v2581
        %v2599 = vrot.slane %v277, 5
        %v2600 = vrot.slane %v2599, 4
        %v2601 = vrot.slane %v278, 5
        %v2602 = vsel %vm456, %v2600, %v2601
        %2603 = vrot.lane.b32.xlu0 %v2462, 56
        %v2604 = vpop.permute.xlu0 %2603
        %2605 = vrot.lane.b32.xlu0 %v2466, 56
        %v2606 = vpop.permute.xlu0 %2605
        %2607 = vrot.lane.b32.xlu0 %v2470, 56
        %v2608 = vpop.permute.xlu0 %2607
        %2609 = vrot.lane.b32.xlu0 %v2474, 56
        %v2610 = vpop.permute.xlu0 %2609
        %2611 = vrot.lane.b32.xlu0 %v2478, 56
        %v2612 = vpop.permute.xlu0 %2611
        %2613 = vrot.lane.b32.xlu0 %v2482, 56
        %v2614 = vpop.permute.xlu0 %2613
        %2615 = vrot.lane.b32.xlu0 %v2486, 56
        %v2616 = vpop.permute.xlu0 %2615
        %2617 = vrot.lane.b32.xlu0 %v2602, 56
        %v2618 = vpop.permute.xlu0 %2617
        %2627 = vst.msk [vmem:[#allocation2 + $0x44] sm:$0xf] %vm713, %v2604
        %2628 = vst.msk [vmem:[#allocation2 + $0x4c] sm:$0xf] %vm713, %v2606
        %2629 = vst.msk [vmem:[#allocation2 + $0x54] sm:$0xf] %vm713, %v2608
        %2630 = vst.msk [vmem:[#allocation2 + $0x5c] sm:$0xf] %vm713, %v2610
        %2631 = vst.msk [vmem:[#allocation2 + $0x64] sm:$0xf] %vm713, %v2612
        %2632 = vst.msk [vmem:[#allocation2 + $0x6c] sm:$0xf] %vm713, %v2614
        %2633 = vst.msk [vmem:[#allocation2 + $0x74] sm:$0xf] %vm713, %v2616
        %2634 = vst.msk [vmem:[#allocation2 + $0x7c] sm:$0xf] %vm713, %v2618
        %2636 = vrot.lane.b32.xlu0 %v265, 64
        %v2637 = vpop.permute.xlu0 %2636
        %2638 = vrot.lane.b32.xlu0 %v267, 64
        %v2639 = vpop.permute.xlu0 %2638
        %2640 = vrot.lane.b32.xlu0 %v269, 64
        %v2641 = vpop.permute.xlu0 %2640
        %2642 = vrot.lane.b32.xlu0 %v271, 64
        %v2643 = vpop.permute.xlu0 %2642
        %2644 = vrot.lane.b32.xlu0 %v273, 64
        %v2645 = vpop.permute.xlu0 %2644
        %2646 = vrot.lane.b32.xlu0 %v275, 64
        %v2647 = vpop.permute.xlu0 %2646
        %2648 = vrot.lane.b32.xlu0 %v277, 64
        %v2649 = vpop.permute.xlu0 %2648
        %2650 = vrot.lane.b32.xlu0 %v279, 64
        %v2651 = vpop.permute.xlu0 %2650
        %2660 = vst.msk [vmem:[#allocation2 + $0x44] sm:$0xf] %vm751, %v2637
        %2661 = vst.msk [vmem:[#allocation2 + $0x4c] sm:$0xf] %vm751, %v2639
        %2662 = vst.msk [vmem:[#allocation2 + $0x54] sm:$0xf] %vm751, %v2641
        %2663 = vst.msk [vmem:[#allocation2 + $0x5c] sm:$0xf] %vm751, %v2643
        %2664 = vst.msk [vmem:[#allocation2 + $0x64] sm:$0xf] %vm751, %v2645
        %2665 = vst.msk [vmem:[#allocation2 + $0x6c] sm:$0xf] %vm751, %v2647
        %2666 = vst.msk [vmem:[#allocation2 + $0x74] sm:$0xf] %vm751, %v2649
        %2667 = vst.msk [vmem:[#allocation2 + $0x7c] sm:$0xf] %vm751, %v2651
        %v2669 = vshrl.u32 %v279, 16
        %v2671 = vrot.slane %v2669, 4
        %v2672 = vshll.u32 %v279, 16
        %v2674 = vrot.slane %v2672, 5
        %v2675 = vor.u32 %v2671, %v2674
        %v2676 = vrot.slane %v2675, 4
        %v2678 = vshll.u32 %v280, 16
        %v2680 = vrot.slane %v2678, 5
        %v2681 = vsel %vm292, %v2676, %v2680
        %2682 = vrot.lane.b32.xlu0 %v2344, 72
        %v2683 = vpop.permute.xlu0 %2682
        %2684 = vrot.lane.b32.xlu0 %v2358, 72
        %v2685 = vpop.permute.xlu0 %2684
        %2686 = vrot.lane.b32.xlu0 %v2372, 72
        %v2687 = vpop.permute.xlu0 %2686
        %2688 = vrot.lane.b32.xlu0 %v2386, 72
        %v2689 = vpop.permute.xlu0 %2688
        %2690 = vrot.lane.b32.xlu0 %v2400, 72
        %v2691 = vpop.permute.xlu0 %2690
        %2692 = vrot.lane.b32.xlu0 %v2414, 72
        %v2693 = vpop.permute.xlu0 %2692
        %2694 = vrot.lane.b32.xlu0 %v2565, 72
        %v2695 = vpop.permute.xlu0 %2694
        %2696 = vrot.lane.b32.xlu0 %v2681, 72
        %v2697 = vpop.permute.xlu0 %2696
        %2706 = vst.msk [vmem:[#allocation2 + $0x44] sm:$0xf] %vm792, %v2683
        %2707 = vst.msk [vmem:[#allocation2 + $0x4c] sm:$0xf] %vm792, %v2685
        %2708 = vst.msk [vmem:[#allocation2 + $0x54] sm:$0xf] %vm792, %v2687
        %2709 = vst.msk [vmem:[#allocation2 + $0x5c] sm:$0xf] %vm792, %v2689
        %2710 = vst.msk [vmem:[#allocation2 + $0x64] sm:$0xf] %vm792, %v2691
        %2711 = vst.msk [vmem:[#allocation2 + $0x6c] sm:$0xf] %vm792, %v2693
        %2712 = vst.msk [vmem:[#allocation2 + $0x74] sm:$0xf] %vm792, %v2695
        %2713 = vst.msk [vmem:[#allocation2 + $0x7c] sm:$0xf] %vm792, %v2697
        %v2715 = vrot.slane %v279, 5
        %v2716 = vrot.slane %v2715, 4
        %v2717 = vrot.slane %v280, 5
        %v2718 = vsel %vm456, %v2716, %v2717
        %2719 = vrot.lane.b32.xlu0 %v2466, 80
        %v2720 = vpop.permute.xlu0 %2719
        %2721 = vrot.lane.b32.xlu0 %v2470, 80
        %v2722 = vpop.permute.xlu0 %2721
        %2723 = vrot.lane.b32.xlu0 %v2474, 80
        %v2724 = vpop.permute.xlu0 %2723
        %2725 = vrot.lane.b32.xlu0 %v2478, 80
        %v2726 = vpop.permute.xlu0 %2725
        %2727 = vrot.lane.b32.xlu0 %v2482, 80
        %v2728 = vpop.permute.xlu0 %2727
        %2729 = vrot.lane.b32.xlu0 %v2486, 80
        %v2730 = vpop.permute.xlu0 %2729
        %2731 = vrot.lane.b32.xlu0 %v2602, 80
        %v2732 = vpop.permute.xlu0 %2731
        %2733 = vrot.lane.b32.xlu0 %v2718, 80
        %v2734 = vpop.permute.xlu0 %2733
        %2743 = vst.msk [vmem:[#allocation2 + $0x44] sm:$0xf] %vm937, %v2720
        %2744 = vst.msk [vmem:[#allocation2 + $0x4c] sm:$0xf] %vm937, %v2722
        %2745 = vst.msk [vmem:[#allocation2 + $0x54] sm:$0xf] %vm937, %v2724
        %2746 = vst.msk [vmem:[#allocation2 + $0x5c] sm:$0xf] %vm937, %v2726
        %2747 = vst.msk [vmem:[#allocation2 + $0x64] sm:$0xf] %vm937, %v2728
        %2748 = vst.msk [vmem:[#allocation2 + $0x6c] sm:$0xf] %vm937, %v2730
        %2749 = vst.msk [vmem:[#allocation2 + $0x74] sm:$0xf] %vm937, %v2732
        %2750 = vst.msk [vmem:[#allocation2 + $0x7c] sm:$0xf] %vm937, %v2734
        %v2751 = vld [vmem:[#allocation2] sm:$0xff]
        %v2752 = vld [vmem:[#allocation2 + $0x8] sm:$0xff]
        %v2753 = vld [vmem:[#allocation2 + $0x10] sm:$0xff]
        %v2754 = vld [vmem:[#allocation2 + $0x18] sm:$0xff]
        %v2755 = vld [vmem:[#allocation2 + $0x20] sm:$0xff]
        %v2756 = vld [vmem:[#allocation2 + $0x28] sm:$0xff]
        %v2757 = vld [vmem:[#allocation2 + $0x30] sm:$0xff]
        %v2758 = vld [vmem:[#allocation2 + $0x38] sm:$0xff]
        %v2759 = vld [vmem:[#allocation2 + $0x40] sm:$0xff]
        %v2760 = vld [vmem:[#allocation2 + $0x48] sm:$0xff]
        %v2761 = vld [vmem:[#allocation2 + $0x50] sm:$0xff]
        %v2762 = vld [vmem:[#allocation2 + $0x58] sm:$0xff]
        %v2763 = vld [vmem:[#allocation2 + $0x60] sm:$0xff]
        %v2764 = vld [vmem:[#allocation2 + $0x68] sm:$0xff]
        %v2765 = vld [vmem:[#allocation2 + $0x70] sm:$0xff]
        %v2766 = vld [vmem:[#allocation2 + $0x78] sm:$0xff]
        %v2767 = vld [vmem:[%s1] sm:$0xf]
        %v2768 = vld [vmem:[%s1 + $0x4] sm:$0xf]
        %v2769 = vld [vmem:[%s1 + $0x8] sm:$0xf]
        %v2770 = vld [vmem:[%s1 + $0xc] sm:$0xf]
        %v2771 = vld [vmem:[%s1 + $0x10] sm:$0xf]
        %v2772 = vld [vmem:[%s1 + $0x14] sm:$0xf]
        %v2773 = vld [vmem:[%s1 + $0x18] sm:$0xf]
        %v2774 = vld [vmem:[%s1 + $0x1c] sm:$0xf]
        %v2775 = vld [vmem:[%s1 + $0x20] sm:$0xf]
        %v2776 = vld [vmem:[%s1 + $0x24] sm:$0xf]
        %v2777 = vld [vmem:[%s1 + $0x28] sm:$0xf]
        %v2778 = vld [vmem:[%s1 + $0x2c] sm:$0xf]
        %v2779 = vld [vmem:[%s1 + $0x30] sm:$0xf]
        %v2780 = vld [vmem:[%s1 + $0x34] sm:$0xf]
        %v2781 = vld [vmem:[%s1 + $0x38] sm:$0xf]
        %v2782 = vld [vmem:[%s1 + $0x3c] sm:$0xf]
        %v2783 = vld [vmem:[%s1 + $0x40] sm:$0xf]
        %v2784 = vld [vmem:[%s1 + $0x44] sm:$0xf]
        %v2785 = vld [vmem:[%s1 + $0x48] sm:$0xf]
        %v2786 = vld [vmem:[%s1 + $0x4c] sm:$0xf]
        %v2787 = vld [vmem:[%s1 + $0x50] sm:$0xf]
        %v2788 = vld [vmem:[%s1 + $0x54] sm:$0xf]
        %v2789 = vld [vmem:[%s1 + $0x58] sm:$0xf]
        %v2790 = vld [vmem:[%s1 + $0x5c] sm:$0xf]
        %v2791 = vld [vmem:[%s1 + $0x60] sm:$0xf]
        %v2792 = vld [vmem:[%s1 + $0x64] sm:$0xf]
        %v2793 = vld [vmem:[%s1 + $0x68] sm:$0xf]
        %v2810 = vunpack.c.l.b16 %v2751
        %v2811 = vunpack.c.h.b16 %v2751
        %v2812 = vunpack.c.l.b16 %v2752
        %v2813 = vunpack.c.h.b16 %v2752
        %v2814 = vunpack.c.l.b16 %v2753
        %v2815 = vunpack.c.h.b16 %v2753
        %v2816 = vunpack.c.l.b16 %v2754
        %v2817 = vunpack.c.h.b16 %v2754
        %v2818 = vunpack.c.l.b16 %v2755
        %v2819 = vunpack.c.h.b16 %v2755
        %v2820 = vunpack.c.l.b16 %v2756
        %v2821 = vunpack.c.h.b16 %v2756
        %v2822 = vunpack.c.l.b16 %v2757
        %v2823 = vunpack.c.h.b16 %v2757
        %v2824 = vunpack.c.l.b16 %v2758
        %v2825 = vunpack.c.h.b16 %v2758
        %v2826 = vunpack.c.l.b16 %v2759
        %v2827 = vunpack.c.h.b16 %v2759
        %v2828 = vunpack.c.l.b16 %v2760
        %v2829 = vunpack.c.h.b16 %v2760
        %v2830 = vunpack.c.l.b16 %v2761
        %v2831 = vunpack.c.h.b16 %v2761
        %v2832 = vunpack.c.l.b16 %v2762
        %v2833 = vunpack.c.h.b16 %v2762
        %v2834 = vunpack.c.l.b16 %v2763
        %v2835 = vunpack.c.h.b16 %v2763
        %v2836 = vunpack.c.l.b16 %v2764
        %v2837 = vunpack.c.h.b16 %v2764
        %v2838 = vunpack.c.l.b16 %v2765
        %v2839 = vunpack.c.h.b16 %v2765
        %v2840 = vunpack.c.l.b16 %v2766
        %v2841 = vunpack.c.h.b16 %v2766
        %v2842 = vpack.c.b16 %v2812, %v2810
        %v2843 = vpack.c.b16 %v2813, %v2811
        %v2844 = vpack.c.b16 %v2816, %v2814
        %v2845 = vpack.c.b16 %v2817, %v2815
        %v2846 = vpack.c.b16 %v2820, %v2818
        %v2847 = vpack.c.b16 %v2821, %v2819
        %v2848 = vpack.c.b16 %v2824, %v2822
        %v2849 = vpack.c.b16 %v2825, %v2823
        %v2850 = vpack.c.b16 %v2828, %v2826
        %v2851 = vpack.c.b16 %v2829, %v2827
        %v2852 = vpack.c.b16 %v2832, %v2830
        %v2853 = vpack.c.b16 %v2833, %v2831
        %v2854 = vpack.c.b16 %v2836, %v2834
        %v2855 = vpack.c.b16 %v2837, %v2835
        %v2856 = vpack.c.b16 %v2840, %v2838
        %v2857 = vpack.c.b16 %v2841, %v2839
        %v2893 = vunpack.c.l.b16 %v2767
        %v2894 = vunpack.c.l.b16 %v2768
        %v2895 = vunpack.c.l.b16 %v2769
        %v2896 = vunpack.c.l.b16 %v2770
        %v2897 = vunpack.c.l.b16 %v2771
        %v2898 = vunpack.c.l.b16 %v2772
        %v2899 = vunpack.c.l.b16 %v2773
        %v2900 = vunpack.c.l.b16 %v2774
        %v2901 = vunpack.c.l.b16 %v2775
        %v2902 = vunpack.c.l.b16 %v2776
        %v2903 = vunpack.c.l.b16 %v2777
        %v2904 = vunpack.c.l.b16 %v2778
        %v2905 = vunpack.c.l.b16 %v2779
        %v2906 = vunpack.c.l.b16 %v2780
        %v2907 = vunpack.c.l.b16 %v2781
        %v2908 = vunpack.c.l.b16 %v2782
        %v2909 = vunpack.c.l.b16 %v2783
        %v2910 = vunpack.c.l.b16 %v2784
        %v2911 = vunpack.c.l.b16 %v2785
        %v2912 = vunpack.c.l.b16 %v2786
        %v2913 = vunpack.c.l.b16 %v2787
        %v2914 = vunpack.c.l.b16 %v2788
        %v2915 = vunpack.c.l.b16 %v2789
        %v2916 = vunpack.c.l.b16 %v2790
        %v2917 = vunpack.c.l.b16 %v2791
        %v2918 = vunpack.c.l.b16 %v2792
        %v2919 = vunpack.c.l.b16 %v2793
        %v2920 = vpack.c.b16 %v2894, %v2893
        %v2921 = vpack.c.b16 %v2896, %v2895
        %v2922 = vpack.c.b16 %v2898, %v2897
        %v2923 = vpack.c.b16 %v2900, %v2899
        %v2924 = vpack.c.b16 %v2902, %v2901
        %v2925 = vpack.c.b16 %v2904, %v2903
        %v2926 = vpack.c.b16 %v2906, %v2905
        %v2927 = vpack.c.b16 %v2908, %v2907
        %v2928 = vpack.c.b16 %v2910, %v2909
        %v2929 = vpack.c.b16 %v2912, %v2911
        %v2930 = vpack.c.b16 %v2914, %v2913
        %v2931 = vpack.c.b16 %v2916, %v2915
        %v2932 = vpack.c.b16 %v2918, %v2917
        %v2933 = vpack.c.b16 %v2919, %v2919
        %vm2947 = vcmask 719872
        %v2949 = vsel %vm2947, %v2843, 0
        %v2952 = vsel %vm2947, %v2845, 0
        %v2955 = vsel %vm2947, %v2847, 0
        %v2958 = vsel %vm2947, %v2849, 0
        %v2961 = vsel %vm2947, %v2851, 0
        %v2964 = vsel %vm2947, %v2853, 0
        %v2967 = vsel %vm2947, %v2855, 0
        %v2970 = vsel %vm2947, %v2857, 0
        %vm2972 = vcmask 1043456
        %v2974 = vsel %vm2972, %v2933, 0
        %2976 = vmatpush.bf16.msra.mxu0 %v2927
        %2977 = vmatpush.bf16.msra.mxu0 %v2926
        %2978 = vmatpush.bf16.msra.mxu0 %v2925
        %2979 = vmatpush.bf16.msra.mxu0 %v2924
        %2980 = vmatpush.bf16.msra.mxu0 %v2923
        %2981 = vmatpush.bf16.msra.mxu0 %v2922
        %2982 = vmatpush.bf16.msra.mxu0 %v2921
        %2983 = vmatpush.bf16.msra.mxu0 %v2920
        %2984 = vmatmul.bf16.gmra.mxu0 %v2842
        %v2985 = vpop.f32.mrf.mxu0
        %v2986 = vadd.f32 0.0, %v2985
        %v2987 = vpop.f32.mrf.mxu0
        %v2988 = vadd.f32 0.0, %v2987
        %2989 = vmatmul.bf16.gmra.mxu0 %v2844
        %v2990 = vpop.f32.mrf.mxu0
        %v2991 = vadd.f32 0.0, %v2990
        %v2992 = vpop.f32.mrf.mxu0
        %v2993 = vadd.f32 0.0, %v2992
        %2994 = vmatmul.bf16.gmra.mxu0 %v2846
        %v2995 = vpop.f32.mrf.mxu0
        %v2996 = vadd.f32 0.0, %v2995
        %v2997 = vpop.f32.mrf.mxu0
        %v2998 = vadd.f32 0.0, %v2997
        %2999 = vmatmul.bf16.gmra.mxu0 %v2848
        %v3000 = vpop.f32.mrf.mxu0
        %v3001 = vadd.f32 0.0, %v3000
        %v3002 = vpop.f32.mrf.mxu0
        %v3003 = vadd.f32 0.0, %v3002
        %3004 = vmatmul.bf16.gmra.mxu0 %v2850
        %v3005 = vpop.f32.mrf.mxu0
        %v3006 = vadd.f32 0.0, %v3005
        %v3007 = vpop.f32.mrf.mxu0
        %v3008 = vadd.f32 0.0, %v3007
        %3009 = vmatmul.bf16.gmra.mxu0 %v2852
        %v3010 = vpop.f32.mrf.mxu0
        %v3011 = vadd.f32 0.0, %v3010
        %v3012 = vpop.f32.mrf.mxu0
        %v3013 = vadd.f32 0.0, %v3012
        %3014 = vmatmul.bf16.gmra.mxu0 %v2854
        %v3015 = vpop.f32.mrf.mxu0
        %v3016 = vadd.f32 0.0, %v3015
        %v3017 = vpop.f32.mrf.mxu0
        %v3018 = vadd.f32 0.0, %v3017
        %3019 = vmatmul.bf16.gmra.mxu0 %v2856
        %v3020 = vpop.f32.mrf.mxu0
        %v3021 = vadd.f32 0.0, %v3020
        %v3022 = vpop.f32.mrf.mxu0
        %v3023 = vadd.f32 0.0, %v3022
        %3024 = vdwg.mxu0
        %3025 = vmatpush.bf16.msra.mxu0 0
        %3026 = vmatpush.bf16.msra.mxu0 0
        %3027 = vmatpush.bf16.msra.mxu0 %v2974
        %3028 = vmatpush.bf16.msra.mxu0 %v2932
        %3029 = vmatpush.bf16.msra.mxu0 %v2931
        %3030 = vmatpush.bf16.msra.mxu0 %v2930
        %3031 = vmatpush.bf16.msra.mxu0 %v2929
        %3032 = vmatpush.bf16.msra.mxu0 %v2928
        %3033 = vmatmul.bf16.gmra.mxu0 %v2949
        %v3034 = vpop.f32.mrf.mxu0
        %v3035 = vadd.f32 %v2986, %v3034
        %v3036 = vpop.f32.mrf.mxu0
        %v3037 = vadd.f32 %v2988, %v3036
        %3038 = vmatmul.bf16.gmra.mxu0 %v2952
        %v3039 = vpop.f32.mrf.mxu0
        %v3040 = vadd.f32 %v2991, %v3039
        %v3041 = vpop.f32.mrf.mxu0
        %v3042 = vadd.f32 %v2993, %v3041
        %3043 = vmatmul.bf16.gmra.mxu0 %v2955
        %v3044 = vpop.f32.mrf.mxu0
        %v3045 = vadd.f32 %v2996, %v3044
        %v3046 = vpop.f32.mrf.mxu0
        %v3047 = vadd.f32 %v2998, %v3046
        %3048 = vmatmul.bf16.gmra.mxu0 %v2958
        %v3049 = vpop.f32.mrf.mxu0
        %v3050 = vadd.f32 %v3001, %v3049
        %v3051 = vpop.f32.mrf.mxu0
        %v3052 = vadd.f32 %v3003, %v3051
        %3053 = vmatmul.bf16.gmra.mxu0 %v2961
        %v3054 = vpop.f32.mrf.mxu0
        %v3055 = vadd.f32 %v3006, %v3054
        %v3056 = vpop.f32.mrf.mxu0
        %v3057 = vadd.f32 %v3008, %v3056
        %3058 = vmatmul.bf16.gmra.mxu0 %v2964
        %v3059 = vpop.f32.mrf.mxu0
        %v3060 = vadd.f32 %v3011, %v3059
        %v3061 = vpop.f32.mrf.mxu0
        %v3062 = vadd.f32 %v3013, %v3061
        %3063 = vmatmul.bf16.gmra.mxu0 %v2967
        %v3064 = vpop.f32.mrf.mxu0
        %v3065 = vadd.f32 %v3016, %v3064
        %v3066 = vpop.f32.mrf.mxu0
        %v3067 = vadd.f32 %v3018, %v3066
        %3068 = vmatmul.bf16.gmra.mxu0 %v2970
        %v3069 = vpop.f32.mrf.mxu0
        %v3070 = vadd.f32 %v3021, %v3069
        %v3071 = vpop.f32.mrf.mxu0
        %v3072 = vadd.f32 %v3023, %v3071
        %3073 = vdwg.mxu0
        %v3074 = vmul.f32 %v3035, %v3035
        %v3075 = vmul.f32 %v3037, %v3037
        %v3076 = vmul.f32 %v3040, %v3040
        %v3077 = vmul.f32 %v3042, %v3042
        %v3078 = vmul.f32 %v3045, %v3045
        %v3079 = vmul.f32 %v3047, %v3047
        %v3080 = vmul.f32 %v3050, %v3050
        %v3081 = vmul.f32 %v3052, %v3052
        %v3082 = vmul.f32 %v3055, %v3055
        %v3083 = vmul.f32 %v3057, %v3057
        %v3084 = vmul.f32 %v3060, %v3060
        %v3085 = vmul.f32 %v3062, %v3062
        %v3086 = vmul.f32 %v3065, %v3065
        %v3087 = vmul.f32 %v3067, %v3067
        %v3088 = vmul.f32 %v3070, %v3070
        %v3089 = vmul.f32 %v3072, %v3072
        %3090 = vadd.xlane.f32.xlu0 %v3074
        %v3091 = vpop.xlane.xlu0 %3090
        %3092 = vadd.xlane.f32.xlu0 %v3075
        %v3093 = vpop.xlane.xlu0 %3092
        %3094 = vadd.xlane.f32.xlu0 %v3076
        %v3095 = vpop.xlane.xlu0 %3094
        %3096 = vadd.xlane.f32.xlu0 %v3077
        %v3097 = vpop.xlane.xlu0 %3096
        %3098 = vadd.xlane.f32.xlu0 %v3078
        %v3099 = vpop.xlane.xlu0 %3098
        %3100 = vadd.xlane.f32.xlu0 %v3079
        %v3101 = vpop.xlane.xlu0 %3100
        %3102 = vadd.xlane.f32.xlu0 %v3080
        %v3103 = vpop.xlane.xlu0 %3102
        %3104 = vadd.xlane.f32.xlu0 %v3081
        %v3105 = vpop.xlane.xlu0 %3104
        %3106 = vadd.xlane.f32.xlu0 %v3082
        %v3107 = vpop.xlane.xlu0 %3106
        %3108 = vadd.xlane.f32.xlu0 %v3083
        %v3109 = vpop.xlane.xlu0 %3108
        %3110 = vadd.xlane.f32.xlu0 %v3084
        %v3111 = vpop.xlane.xlu0 %3110
        %3112 = vadd.xlane.f32.xlu0 %v3085
        %v3113 = vpop.xlane.xlu0 %3112
        %3114 = vadd.xlane.f32.xlu0 %v3086
        %v3115 = vpop.xlane.xlu0 %3114
        %3116 = vadd.xlane.f32.xlu0 %v3087
        %v3117 = vpop.xlane.xlu0 %3116
        %3118 = vadd.xlane.f32.xlu0 %v3088
        %v3119 = vpop.xlane.xlu0 %3118
        %3120 = vadd.xlane.f32.xlu0 %v3089
        %v3121 = vpop.xlane.xlu0 %3120
        %v3122 = vmax.f32 %v3091, 1e-24
        %v3123 = vmax.f32 %v3093, 1e-24
        %v3124 = vmax.f32 %v3095, 1e-24
        %v3125 = vmax.f32 %v3097, 1e-24
        %v3126 = vmax.f32 %v3099, 1e-24
        %v3127 = vmax.f32 %v3101, 1e-24
        %v3128 = vmax.f32 %v3103, 1e-24
        %v3129 = vmax.f32 %v3105, 1e-24
        %v3130 = vmax.f32 %v3107, 1e-24
        %v3131 = vmax.f32 %v3109, 1e-24
        %v3132 = vmax.f32 %v3111, 1e-24
        %v3133 = vmax.f32 %v3113, 1e-24
        %v3134 = vmax.f32 %v3115, 1e-24
        %v3135 = vmax.f32 %v3117, 1e-24
        %v3136 = vmax.f32 %v3119, 1e-24
        %v3137 = vmax.f32 %v3121, 1e-24
        %v3138 = vrsqrt.pop %v3122
        %v3139 = vmul.f32 %v3138, %v3122
        %v3140 = vmul.f32 %v3139, %v3138
        %v3141 = vmul.f32 0.5, %v3140
        %v3142 = vsub.f32 1.5, %v3141
        %v3143 = vmul.f32 %v3138, %v3142
        %vm3144 = vweird.f32 %v3122
        %vm3145 = vweird.f32 %v3138
        %vm3146 = vmor %vm3144, %vm3145
        %v3147 = vsel %vm3146, %v3138, %v3143
        %v3148 = vrsqrt.pop %v3123
        %v3149 = vmul.f32 %v3148, %v3123
        %v3150 = vmul.f32 %v3149, %v3148
        %v3151 = vmul.f32 0.5, %v3150
        %v3152 = vsub.f32 1.5, %v3151
        %v3153 = vmul.f32 %v3148, %v3152
        %vm3154 = vweird.f32 %v3123
        %vm3155 = vweird.f32 %v3148
        %vm3156 = vmor %vm3154, %vm3155
        %v3157 = vsel %vm3156, %v3148, %v3153
        %v3158 = vrsqrt.pop %v3124
        %v3159 = vmul.f32 %v3158, %v3124
        %v3160 = vmul.f32 %v3159, %v3158
        %v3161 = vmul.f32 0.5, %v3160
        %v3162 = vsub.f32 1.5, %v3161
        %v3163 = vmul.f32 %v3158, %v3162
        %vm3164 = vweird.f32 %v3124
        %vm3165 = vweird.f32 %v3158
        %vm3166 = vmor %vm3164, %vm3165
        %v3167 = vsel %vm3166, %v3158, %v3163
        %v3168 = vrsqrt.pop %v3125
        %v3169 = vmul.f32 %v3168, %v3125
        %v3170 = vmul.f32 %v3169, %v3168
        %v3171 = vmul.f32 0.5, %v3170
        %v3172 = vsub.f32 1.5, %v3171
        %v3173 = vmul.f32 %v3168, %v3172
        %vm3174 = vweird.f32 %v3125
        %vm3175 = vweird.f32 %v3168
        %vm3176 = vmor %vm3174, %vm3175
        %v3177 = vsel %vm3176, %v3168, %v3173
        %v3178 = vrsqrt.pop %v3126
        %v3179 = vmul.f32 %v3178, %v3126
        %v3180 = vmul.f32 %v3179, %v3178
        %v3181 = vmul.f32 0.5, %v3180
        %v3182 = vsub.f32 1.5, %v3181
        %v3183 = vmul.f32 %v3178, %v3182
        %vm3184 = vweird.f32 %v3126
        %vm3185 = vweird.f32 %v3178
        %vm3186 = vmor %vm3184, %vm3185
        %v3187 = vsel %vm3186, %v3178, %v3183
        %v3188 = vrsqrt.pop %v3127
        %v3189 = vmul.f32 %v3188, %v3127
        %v3190 = vmul.f32 %v3189, %v3188
        %v3191 = vmul.f32 0.5, %v3190
        %v3192 = vsub.f32 1.5, %v3191
        %v3193 = vmul.f32 %v3188, %v3192
        %vm3194 = vweird.f32 %v3127
        %vm3195 = vweird.f32 %v3188
        %vm3196 = vmor %vm3194, %vm3195
        %v3197 = vsel %vm3196, %v3188, %v3193
        %v3198 = vrsqrt.pop %v3128
        %v3199 = vmul.f32 %v3198, %v3128
        %v3200 = vmul.f32 %v3199, %v3198
        %v3201 = vmul.f32 0.5, %v3200
        %v3202 = vsub.f32 1.5, %v3201
        %v3203 = vmul.f32 %v3198, %v3202
        %vm3204 = vweird.f32 %v3128
        %vm3205 = vweird.f32 %v3198
        %vm3206 = vmor %vm3204, %vm3205
        %v3207 = vsel %vm3206, %v3198, %v3203
        %v3208 = vrsqrt.pop %v3129
        %v3209 = vmul.f32 %v3208, %v3129
        %v3210 = vmul.f32 %v3209, %v3208
        %v3211 = vmul.f32 0.5, %v3210
        %v3212 = vsub.f32 1.5, %v3211
        %v3213 = vmul.f32 %v3208, %v3212
        %vm3214 = vweird.f32 %v3129
        %vm3215 = vweird.f32 %v3208
        %vm3216 = vmor %vm3214, %vm3215
        %v3217 = vsel %vm3216, %v3208, %v3213
        %v3218 = vrsqrt.pop %v3130
        %v3219 = vmul.f32 %v3218, %v3130
        %v3220 = vmul.f32 %v3219, %v3218
        %v3221 = vmul.f32 0.5, %v3220
        %v3222 = vsub.f32 1.5, %v3221
        %v3223 = vmul.f32 %v3218, %v3222
        %vm3224 = vweird.f32 %v3130
        %vm3225 = vweird.f32 %v3218
        %vm3226 = vmor %vm3224, %vm3225
        %v3227 = vsel %vm3226, %v3218, %v3223
        %v3228 = vrsqrt.pop %v3131
        %v3229 = vmul.f32 %v3228, %v3131
        %v3230 = vmul.f32 %v3229, %v3228
        %v3231 = vmul.f32 0.5, %v3230
        %v3232 = vsub.f32 1.5, %v3231
        %v3233 = vmul.f32 %v3228, %v3232
        %vm3234 = vweird.f32 %v3131
        %vm3235 = vweird.f32 %v3228
        %vm3236 = vmor %vm3234, %vm3235
        %v3237 = vsel %vm3236, %v3228, %v3233
        %v3238 = vrsqrt.pop %v3132
        %v3239 = vmul.f32 %v3238, %v3132
        %v3240 = vmul.f32 %v3239, %v3238
        %v3241 = vmul.f32 0.5, %v3240
        %v3242 = vsub.f32 1.5, %v3241
        %v3243 = vmul.f32 %v3238, %v3242
        %vm3244 = vweird.f32 %v3132
        %vm3245 = vweird.f32 %v3238
        %vm3246 = vmor %vm3244, %vm3245
        %v3247 = vsel %vm3246, %v3238, %v3243
        %v3248 = vrsqrt.pop %v3133
        %v3249 = vmul.f32 %v3248, %v3133
        %v3250 = vmul.f32 %v3249, %v3248
        %v3251 = vmul.f32 0.5, %v3250
        %v3252 = vsub.f32 1.5, %v3251
        %v3253 = vmul.f32 %v3248, %v3252
        %vm3254 = vweird.f32 %v3133
        %vm3255 = vweird.f32 %v3248
        %vm3256 = vmor %vm3254, %vm3255
        %v3257 = vsel %vm3256, %v3248, %v3253
        %v3258 = vrsqrt.pop %v3134
        %v3259 = vmul.f32 %v3258, %v3134
        %v3260 = vmul.f32 %v3259, %v3258
        %v3261 = vmul.f32 0.5, %v3260
        %v3262 = vsub.f32 1.5, %v3261
        %v3263 = vmul.f32 %v3258, %v3262
        %vm3264 = vweird.f32 %v3134
        %vm3265 = vweird.f32 %v3258
        %vm3266 = vmor %vm3264, %vm3265
        %v3267 = vsel %vm3266, %v3258, %v3263
        %v3268 = vrsqrt.pop %v3135
        %v3269 = vmul.f32 %v3268, %v3135
        %v3270 = vmul.f32 %v3269, %v3268
        %v3271 = vmul.f32 0.5, %v3270
        %v3272 = vsub.f32 1.5, %v3271
        %v3273 = vmul.f32 %v3268, %v3272
        %vm3274 = vweird.f32 %v3135
        %vm3275 = vweird.f32 %v3268
        %vm3276 = vmor %vm3274, %vm3275
        %v3277 = vsel %vm3276, %v3268, %v3273
        %v3278 = vrsqrt.pop %v3136
        %v3279 = vmul.f32 %v3278, %v3136
        %v3280 = vmul.f32 %v3279, %v3278
        %v3281 = vmul.f32 0.5, %v3280
        %v3282 = vsub.f32 1.5, %v3281
        %v3283 = vmul.f32 %v3278, %v3282
        %vm3284 = vweird.f32 %v3136
        %vm3285 = vweird.f32 %v3278
        %vm3286 = vmor %vm3284, %vm3285
        %v3287 = vsel %vm3286, %v3278, %v3283
        %v3288 = vrsqrt.pop %v3137
        %v3289 = vmul.f32 %v3288, %v3137
        %v3290 = vmul.f32 %v3289, %v3288
        %v3291 = vmul.f32 0.5, %v3290
        %v3292 = vsub.f32 1.5, %v3291
        %v3293 = vmul.f32 %v3288, %v3292
        %vm3294 = vweird.f32 %v3137
        %vm3295 = vweird.f32 %v3288
        %vm3296 = vmor %vm3294, %vm3295
        %v3297 = vsel %vm3296, %v3288, %v3293
        %v3298 = vmul.f32 %v3147, 2.828427
        %v3299 = vmul.f32 %v3157, 2.828427
        %v3300 = vmul.f32 %v3167, 2.828427
        %v3301 = vmul.f32 %v3177, 2.828427
        %v3302 = vmul.f32 %v3187, 2.828427
        %v3303 = vmul.f32 %v3197, 2.828427
        %v3304 = vmul.f32 %v3207, 2.828427
        %v3305 = vmul.f32 %v3217, 2.828427
        %v3306 = vmul.f32 %v3227, 2.828427
        %v3307 = vmul.f32 %v3237, 2.828427
        %v3308 = vmul.f32 %v3247, 2.828427
        %v3309 = vmul.f32 %v3257, 2.828427
        %v3310 = vmul.f32 %v3267, 2.828427
        %v3311 = vmul.f32 %v3277, 2.828427
        %v3312 = vmul.f32 %v3287, 2.828427
        %v3313 = vmul.f32 %v3297, 2.828427
        %v3314 = vmul.f32 %v3035, %v3298
        %v3315 = vmul.f32 %v3037, %v3299
        %v3316 = vmul.f32 %v3040, %v3300
        %v3317 = vmul.f32 %v3042, %v3301
        %v3318 = vmul.f32 %v3045, %v3302
        %v3319 = vmul.f32 %v3047, %v3303
        %v3320 = vmul.f32 %v3050, %v3304
        %v3321 = vmul.f32 %v3052, %v3305
        %v3322 = vmul.f32 %v3055, %v3306
        %v3323 = vmul.f32 %v3057, %v3307
        %v3324 = vmul.f32 %v3060, %v3308
        %v3325 = vmul.f32 %v3062, %v3309
        %v3326 = vmul.f32 %v3065, %v3310
        %v3327 = vmul.f32 %v3067, %v3311
        %v3328 = vmul.f32 %v3070, %v3312
        %v3329 = vmul.f32 %v3072, %v3313
        %v3330 = vld [vmem:[%s2] sm:$0x1]
        %v3332 = vperm.slane %v3330, 0
        %v3334 = vmul.f32 %v3314, %v3332
        %v3335 = vmul.f32 %v3315, %v3332
        %v3336 = vmul.f32 %v3316, %v3332
        %v3337 = vmul.f32 %v3317, %v3332
        %v3338 = vmul.f32 %v3318, %v3332
        %v3339 = vmul.f32 %v3319, %v3332
        %v3340 = vmul.f32 %v3320, %v3332
        %v3341 = vmul.f32 %v3321, %v3332
        %v3342 = vmul.f32 %v3322, %v3332
        %v3343 = vmul.f32 %v3323, %v3332
        %v3344 = vmul.f32 %v3324, %v3332
        %v3345 = vmul.f32 %v3325, %v3332
        %v3346 = vmul.f32 %v3326, %v3332
        %v3347 = vmul.f32 %v3327, %v3332
        %v3348 = vmul.f32 %v3328, %v3332
        %v3349 = vmul.f32 %v3329, %v3332
        %vm3350 = vcmp.ge.f32.partialorder %v3334, 0.0
        %vm3351 = vcmp.ge.f32.partialorder %v3335, 0.0
        %vm3352 = vcmp.ge.f32.partialorder %v3336, 0.0
        %vm3353 = vcmp.ge.f32.partialorder %v3337, 0.0
        %vm3354 = vcmp.ge.f32.partialorder %v3338, 0.0
        %vm3355 = vcmp.ge.f32.partialorder %v3339, 0.0
        %vm3356 = vcmp.ge.f32.partialorder %v3340, 0.0
        %vm3357 = vcmp.ge.f32.partialorder %v3341, 0.0
        %vm3358 = vcmp.ge.f32.partialorder %v3342, 0.0
        %vm3359 = vcmp.ge.f32.partialorder %v3343, 0.0
        %vm3360 = vcmp.ge.f32.partialorder %v3344, 0.0
        %vm3361 = vcmp.ge.f32.partialorder %v3345, 0.0
        %vm3362 = vcmp.ge.f32.partialorder %v3346, 0.0
        %vm3363 = vcmp.ge.f32.partialorder %v3347, 0.0
        %vm3364 = vcmp.ge.f32.partialorder %v3348, 0.0
        %vm3365 = vcmp.ge.f32.partialorder %v3349, 0.0
        %v3366 = vmul.f32 %v3334, 0.01
        %v3367 = vmul.f32 %v3335, 0.01
        %v3368 = vmul.f32 %v3336, 0.01
        %v3369 = vmul.f32 %v3337, 0.01
        %v3370 = vmul.f32 %v3338, 0.01
        %v3371 = vmul.f32 %v3339, 0.01
        %v3372 = vmul.f32 %v3340, 0.01
        %v3373 = vmul.f32 %v3341, 0.01
        %v3374 = vmul.f32 %v3342, 0.01
        %v3375 = vmul.f32 %v3343, 0.01
        %v3376 = vmul.f32 %v3344, 0.01
        %v3377 = vmul.f32 %v3345, 0.01
        %v3378 = vmul.f32 %v3346, 0.01
        %v3379 = vmul.f32 %v3347, 0.01
        %v3380 = vmul.f32 %v3348, 0.01
        %v3381 = vmul.f32 %v3349, 0.01
        %v3382 = vsel %vm3350, %v3334, %v3366
        %v3383 = vsel %vm3351, %v3335, %v3367
        %v3384 = vsel %vm3352, %v3336, %v3368
        %v3385 = vsel %vm3353, %v3337, %v3369
        %v3386 = vsel %vm3354, %v3338, %v3370
        %v3387 = vsel %vm3355, %v3339, %v3371
        %v3388 = vsel %vm3356, %v3340, %v3372
        %v3389 = vsel %vm3357, %v3341, %v3373
        %v3390 = vsel %vm3358, %v3342, %v3374
        %v3391 = vsel %vm3359, %v3343, %v3375
        %v3392 = vsel %vm3360, %v3344, %v3376
        %v3393 = vsel %vm3361, %v3345, %v3377
        %v3394 = vsel %vm3362, %v3346, %v3378
        %v3395 = vsel %vm3363, %v3347, %v3379
        %v3396 = vsel %vm3364, %v3348, %v3380
        %v3397 = vsel %vm3365, %v3349, %v3381
        %v3398 = vpack.c.bf16 %v3382, %v3382
        %v3399 = vpack.c.bf16 %v3383, %v3383
        %v3400 = vpack.c.bf16 %v3384, %v3384
        %v3401 = vpack.c.bf16 %v3385, %v3385
        %v3402 = vpack.c.bf16 %v3386, %v3386
        %v3403 = vpack.c.bf16 %v3387, %v3387
        %v3404 = vpack.c.bf16 %v3388, %v3388
        %v3405 = vpack.c.bf16 %v3389, %v3389
        %v3406 = vpack.c.bf16 %v3390, %v3390
        %v3407 = vpack.c.bf16 %v3391, %v3391
        %v3408 = vpack.c.bf16 %v3392, %v3392
        %v3409 = vpack.c.bf16 %v3393, %v3393
        %v3410 = vpack.c.bf16 %v3394, %v3394
        %v3411 = vpack.c.bf16 %v3395, %v3395
        %v3412 = vpack.c.bf16 %v3396, %v3396
        %v3413 = vpack.c.bf16 %v3397, %v3397
        %3414 = vst [vmem:[%s177] sm:$0xf] %v3398
        %3415 = vst [vmem:[%s177 + $0x4] sm:$0xf] %v3399
        %3416 = vst [vmem:[%s177 + $0x8] sm:$0xf] %v3400
        %3417 = vst [vmem:[%s177 + $0xc] sm:$0xf] %v3401
        %3418 = vst [vmem:[%s177 + $0x10] sm:$0xf] %v3402
        %3419 = vst [vmem:[%s177 + $0x14] sm:$0xf] %v3403
        %3420 = vst [vmem:[%s177 + $0x18] sm:$0xf] %v3404
        %3421 = vst [vmem:[%s177 + $0x1c] sm:$0xf] %v3405
        %3422 = vst [vmem:[%s177 + $0x20] sm:$0xf] %v3406
        %3423 = vst [vmem:[%s177 + $0x24] sm:$0xf] %v3407
        %3424 = vst [vmem:[%s177 + $0x28] sm:$0xf] %v3408
        %3425 = vst [vmem:[%s177 + $0x2c] sm:$0xf] %v3409
        %3426 = vst [vmem:[%s177 + $0x30] sm:$0xf] %v3410
        %3427 = vst [vmem:[%s177 + $0x34] sm:$0xf] %v3411
        %3428 = vst [vmem:[%s177 + $0x38] sm:$0xf] %v3412
        %3429 = vst [vmem:[%s177 + $0x3c] sm:$0xf] %v3413
        %s3430 = sand.u32 %s107, 1
        %s3431 = scalar_lea.sflag [#allocation4], %s3430
        %s3432 = sand.u32 %s107, 1
        %s3433 = smul.addr %s3432, 64
        %s3434 = scalar_lea.vmem [#allocation3], %s3433
        // Predicated region
        $region33: #{tpu_custom_call.1} parent=31 // pred_check
          %p3435 = pneg %p117
        $region34: #{tpu_custom_call.1} parent=31 // pred_check_branch
          %3437 = sbr.rel (%p3435) target = $region36
        $region35: #{tpu_custom_call.1} parent=31 // pred_region
          %s3438 = smul.u32 16, %s22
          %3440 = vsyncadd %s3431, 0
          %s3441 = smul.addr %s21, 32
          %s3442 = sadd.s32 %s3438, %s3441
          %s3443 = smul.addr %s3442, 4
          %s3444 = scalar_lea.hbm %s3, %s3443
          %s3445 = sshll.u32 %s3434, 4
          %s3446 = int_to_ptr.vmem [resolvable:$true] %s3445
          %s3447 = sshll.u32 %s3444, 4
          %s3448 = int_to_ptr.hbm [resolvable:$true] %s3447
          %3453 = dma.vmem_to_hbm [thread:$0]  %s3446, 1024, %s3448, %s3431, 64, 64, 4
        $region36: #{tpu_custom_call.1} parent=31 // pred_fallthru
          _
      $region32: #{tpu_custom_call.1} parent=5 // pred_fallthru
        _
      %p3454 = scmp.le.s32.totalorder 2, %s12
      // Predicated region
      $region37: #{tpu_custom_call.1} parent=5 // pred_check
        %p3455 = pneg %p3454
      $region38: #{tpu_custom_call.1} parent=5 // pred_check_branch
        %3457 = sbr.rel (%p3455) target = $region40
      $region39: #{tpu_custom_call.1} parent=5 // pred_region
        %s3458 = ssub.s32 %s12, 2
        // Predicated region
        $region41: #{tpu_custom_call.1} parent=39 // pred_check
          %p3459 = pneg %p123
        $region42: #{tpu_custom_call.1} parent=39 // pred_check_branch
          %3461 = sbr.rel (%p3459) target = $region44
        $region43: #{tpu_custom_call.1} parent=39 // pred_region
          %s3462 = sand.u32 %s108, 1
          %s3463 = scalar_lea.sflag [#allocation4], %s3462
          %s3464 = sand.u32 %s108, 1
          %s3465 = smul.addr %s3464, 64
          %s3466 = scalar_lea.vmem [#allocation3], %s3465
          %3468 = dma.done %s3463, 1024
        $region44: #{tpu_custom_call.1} parent=39 // pred_fallthru
          _
      $region40: #{tpu_custom_call.1} parent=5 // pred_fallthru
        _
    $region6: #{tpu_custom_call.1} parent=1 // loop_footer
      %s16 = sadd.s32 1, %s12
    $region7: #{tpu_custom_call.1} parent=1 // loop_footer_branch
      %11 = sbr.rel target = $region3
    $region8: #{tpu_custom_call.1} parent=1 // loop_exit
      _
    %3469 = vsyncpa [#allocation4], 1
    %s3470 = scalar_lea.sflag [#allocation4], 1
    %3471 = vsyncpa %s3470, 1

</llo_original>
